<compile_context>
chip_gen: v7x
topology: tpu7x:2x2x1
jax: 0.10.0
libtpu: 0.0.40
codegen_flags: <defaults>
</compile_context>

<pallas_src>
import jax
import jax.numpy as jnp
from jax import lax
from jax.experimental import pallas as pl
from jax.experimental.pallas import tpu as pltpu

SUBLANES = 8  # f32 sublane count; batch is padded up to a multiple of this.

_VMEM = pl.BlockSpec(memory_space=pltpu.MemorySpace.VMEM)


def _round_up(a, b):
    return (a + b - 1) // b * b


# ---------------------------------------------------------------------------
# Fused encode kernel: bidirectional multi-layer LSTM -> non_seq_proj ->
# chunk / exp(0.5*logvar) / reparameterized sample, all in one pallas_call.
# ---------------------------------------------------------------------------

def _make_encode_kernel(num_layers, seq, btile, hidden, enc, in_aug):
    L, T, Bt, H, E, I1 = num_layers, seq, btile, hidden, enc, in_aug
    half = E // 2

    def kernel(*refs):
        it = iter(refs)
        x_ref = next(it)                                    # (T, Bt, I1) block
        layer_refs = []
        for l in range(L):
            wf = next(it)                                   # (Kin, 4H) bf16
            wb = next(it)                                   # (Kin, 4H) bf16
            whh = next(it)                                  # (2H, 8H) bf16 block-diag
            bias = next(it) if l > 0 else None              # (1, 8H) f32
            layer_refs.append((wf, wb, whh, bias))
        wp_ref = next(it)                                   # (2LH, E) bf16
        bp_ref = next(it)                                   # (1, E) f32
        noise_ref = next(it)                                # (Bt, half) f32
        sample_ref = next(it)                               # outputs (Bt, half)
        mean_ref = next(it)
        std_ref = next(it)
        gxf_scr = next(it)                                  # (T*Bt, 4H) fwd input gates
        gxb_scr = next(it)                                  # (T*Bt, 4H) bwd input gates
        y_scr = next(it)                                    # (T*Bt, 2H) combined hiddens

        cells = []                                          # 2L final cell states (vregs)
        for l, (wf_ref, wb_ref, whh_ref, bias_ref) in enumerate(layer_refs):
            # Hoisted input projection (one pass over the whole sequence for both
            # directions), bf16 operands with f32 accumulation.  Layer-0 bias is
            # folded into the weights via the ones column appended to x.
            if l == 0:
                xin = x_ref[...].reshape(T * Bt, I1).astype(jnp.bfloat16)
                gxf_scr[...] = jnp.dot(xin, wf_ref[...],
                                       preferred_element_type=jnp.float32)
                gxb_scr[...] = jnp.dot(xin, wb_ref[...],
                                       preferred_element_type=jnp.float32)
            else:
                yin = y_scr[...].astype(jnp.bfloat16)
                gxf_scr[...] = (jnp.dot(yin, wf_ref[...],
                                        preferred_element_type=jnp.float32)
                                + bias_ref[:, 0:4 * H])
                gxb_scr[...] = (jnp.dot(yin, wb_ref[...],
                                        preferred_element_type=jnp.float32)
                                + bias_ref[:, 4 * H:8 * H])

            whh = whh_ref[...]            # loaded once per layer, closed over
            store_y = l < L - 1           # last layer's hidden sequence is never read

            def step(t, carry, whh=whh, store_y=store_y):
                h_f, c_f, h_b, c_b = carry                  # all live in vregs
                rf = pl.multiple_of(t * Bt, Bt)             # fwd row block
                rb = pl.multiple_of((T - 1 - t) * Bt, Bt)   # bwd row block (in-kernel reversal)

                gx_f = gxf_scr[pl.ds(rf, Bt), :]            # (Bt, 4H), lane-aligned
                gx_b = gxb_scr[pl.ds(rb, Bt), :]

                # One fused recurrent matmul for both directions.
                h2 = jnp.concatenate([h_f, h_b], axis=1).astype(jnp.bfloat16)
                g = (jnp.concatenate([gx_f, gx_b], axis=1)
                     + jnp.dot(h2, whh, preferred_element_type=jnp.float32))

                # Two wide EUP passes over the whole gate block, then slice.
                sig = jax.nn.sigmoid(g)                     # i, f, o gates
                tng = jnp.tanh(g)                           # g gate
                # PyTorch gate order per direction: i, f, g, o.
                c_f = sig[:, H:2 * H] * c_f + sig[:, 0:H] * tng[:, 2 * H:3 * H]
                c_b = sig[:, 5 * H:6 * H] * c_b + sig[:, 4 * H:5 * H] * tng[:, 6 * H:7 * H]
                h_f = sig[:, 3 * H:4 * H] * jnp.tanh(c_f)
                h_b = sig[:, 7 * H:8 * H] * jnp.tanh(c_b)

                if store_y:
                    y_scr[pl.ds(rf, Bt), pl.ds(0, H)] = h_f
                    y_scr[pl.ds(rb, Bt), pl.ds(H, H)] = h_b
                return h_f, c_f, h_b, c_b

            zero = jnp.zeros((Bt, H), jnp.float32)
            _, c_f_fin, _, c_b_fin = lax.fori_loop(
                0, T, step, (zero, zero, zero, zero), unroll=min(T, 8))
            cells += [c_f_fin, c_b_fin]                     # PyTorch order: l0f, l0b, l1f, ...

        # Fused epilogue: one matmul of all final cells against non_seq_proj, then
        # bias, chunk, std = exp(0.5*logvar), reparameterize.
        cells_cat = jnp.concatenate(cells, axis=1).astype(jnp.bfloat16)   # (Bt, 2LH)
        z = jnp.dot(cells_cat, wp_ref[...],
                    preferred_element_type=jnp.float32) + bp_ref[...]
        mean = z[:, 0:half]
        std = jnp.exp(0.5 * z[:, half:E])
        mean_ref[...] = mean
        std_ref[...] = std
        sample_ref[...] = noise_ref[...] * std + mean

    return kernel


def encode_time_series(params, x, noise, *, batch_tile=None):
    """x: (B, 12, T) channels-first, like the PyTorch module.  Returns sample, mean, std."""
    B, in0, T = x.shape
    enc = params["encoder"]
    L = len(enc)
    H = enc[0]["w_hh_f"].shape[1]
    wp = params["non_seq_proj"]["w"]                        # (E, 2LH), torch layout
    E = wp.shape[0]
    half = E // 2

    Bp = _round_up(B, SUBLANES)
    Bt = batch_tile if batch_tile is not None else min(Bp, 128)
    Bt = max(SUBLANES, (Bt // SUBLANES) * SUBLANES)
    Bp = _round_up(Bp, Bt)
    n_tiles = Bp // Bt

    # x.permute(2, 0, 1), pad batch to a sublane multiple, append a ones column
    # (folds the layer-0 bias into the hoisted matmul).
    I1 = in0 + 1
    xf = jnp.transpose(x.astype(jnp.float32), (2, 0, 1))    # (T, B, in0)
    xf = jnp.pad(xf, ((0, 0), (0, Bp - B), (0, 0)))
    x3 = jnp.concatenate([xf, jnp.ones((T, Bp, 1), jnp.float32)], axis=-1)
    noise_p = jnp.pad(noise.astype(jnp.float32), ((0, Bp - B), (0, 0)))

    def full_spec(shape):
        nd = len(shape)
        return pl.BlockSpec(shape, lambda i, _nd=nd: (0,) * _nd)

    args = [x3]
    in_specs = [pl.BlockSpec((T, Bt, I1), lambda i: (0, i, 0))]
    for l, p in enumerate(enc):
        bias_f = p["b_ih_f"] + p["b_hh_f"]                  # (4H,)
        bias_b = p["b_ih_b"] + p["b_hh_b"]
        wf = p["w_ih_f"].T                                  # (Kin, 4H)
        wb = p["w_ih_b"].T
        if l == 0:                                          # bias folded via ones column
            wf = jnp.concatenate([wf, bias_f.reshape(1, -1)], axis=0)
            wb = jnp.concatenate([wb, bias_b.reshape(1, -1)], axis=0)
        # Block-diagonal recurrent weight: [h_f | h_b] @ W gives both directions' gates.
        whh_bd = jnp.zeros((2 * H, 8 * H), jnp.float32)
        whh_bd = whh_bd.at[0:H, 0:4 * H].set(p["w_hh_f"].T)
        whh_bd = whh_bd.at[H:2 * H, 4 * H:8 * H].set(p["w_hh_b"].T)
        new_args = [wf.astype(jnp.bfloat16), wb.astype(jnp.bfloat16),
                    whh_bd.astype(jnp.bfloat16)]
        if l > 0:
            new_args.append(jnp.concatenate([bias_f, bias_b]).reshape(1, 8 * H))
        args += new_args
        in_specs += [full_spec(a.shape) for a in new_args]

    wp_t = wp.T.astype(jnp.bfloat16)                        # (2LH, E)
    bp = params["non_seq_proj"]["b"].reshape(1, E).astype(jnp.float32)
    args += [wp_t, bp, noise_p]
    in_specs += [full_spec(wp_t.shape), full_spec(bp.shape),
                 pl.BlockSpec((Bt, half), lambda i: (i, 0))]
    out_spec = pl.BlockSpec((Bt, half), lambda i: (i, 0))

    def nbytes(a):
        return int(a.size) * a.dtype.itemsize

    weight_bytes = sum(nbytes(a) for a in args[1:-1])
    block_bytes = 4 * (T * Bt * I1 + 4 * Bt * half)
    scratch_bytes = 4 * (2 * T * Bt * 4 * H + T * Bt * 2 * H)
    vmem_limit = int(min(max(2 * (weight_bytes + block_bytes) + scratch_bytes + (4 << 20),
                             8 << 20), 96 << 20))

    flops = 0
    for l in range(L):
        kin = I1 if l == 0 else 2 * H
        flops += 2 * T * Bp * kin * 8 * H                   # hoisted input projections
        flops += 2 * T * Bp * 2 * H * 8 * H                 # fused recurrent matmuls
    flops += 2 * Bp * (2 * L * H) * E                       # non_seq_proj
    transcendentals = L * T * Bp * 18 * H + Bp * half
    bytes_accessed = sum(nbytes(a) for a in args) + 3 * Bp * half * 4

    sample, mean, std = pl.pallas_call(
        _make_encode_kernel(L, T, Bt, H, E, I1),
        out_shape=(jax.ShapeDtypeStruct((Bp, half), jnp.float32),) * 3,
        grid=(n_tiles,),
        in_specs=in_specs,
        out_specs=(out_spec, out_spec, out_spec),
        scratch_shapes=[
            pltpu.VMEM((T * Bt, 4 * H), jnp.float32),       # fwd hoisted input gates
            pltpu.VMEM((T * Bt, 4 * H), jnp.float32),       # bwd hoisted input gates
            pltpu.VMEM((T * Bt, 2 * H), jnp.float32),       # combined hidden sequence
        ],
        compiler_params=pltpu.CompilerParams(
            dimension_semantics=("parallel",),
            vmem_limit_bytes=vmem_limit),
        cost_estimate=pl.CostEstimate(flops=int(flops),
                                      transcendentals=int(transcendentals),
                                      bytes_accessed=int(bytes_accessed)),
    )(*args)
    return sample[:B], mean[:B], std[:B]


# ---------------------------------------------------------------------------
# Fused baseline path: proj0 -> GELU(erf) -> proj1 -> reparameterize.
# ---------------------------------------------------------------------------

def _baseline_encode_kernel(x_ref, w0_ref, b0_ref, w1_ref, b1_ref, noise_ref,
                            sample_ref, mean_ref, std_ref):
    h = jnp.dot(x_ref[...].astype(jnp.bfloat16), w0_ref[...],
                preferred_element_type=jnp.float32) + b0_ref[...]
    h = jax.nn.gelu(h, approximate=False)                   # nn.GELU() default = exact erf
    z = jnp.dot(h.astype(jnp.bfloat16), w1_ref[...],
                preferred_element_type=jnp.float32) + b1_ref[...]
    half = z.shape[-1] // 2
    mean = z[:, 0:half]
    std = jnp.exp(0.5 * z[:, half:])
    mean_ref[...] = mean
    std_ref[...] = std
    sample_ref[...] = noise_ref[...] * std + mean


def baseline_encode(baseline_df, p, noise):
    B = baseline_df.shape[0]
    E = p["w0"].shape[0]
    half = E // 2
    Bp = _round_up(B, SUBLANES)
    xb = jnp.pad(baseline_df.astype(jnp.float32), ((0, Bp - B), (0, 0)))
    nz = jnp.pad(noise.astype(jnp.float32), ((0, Bp - B), (0, 0)))
    sample, mean, std = pl.pallas_call(
        _baseline_encode_kernel,
        out_shape=(jax.ShapeDtypeStruct((Bp, half), jnp.float32),) * 3,
        in_specs=[_VMEM] * 6,
        out_specs=(_VMEM,) * 3,
    )(xb, p["w0"].T.astype(jnp.bfloat16), p["b0"].reshape(1, -1),
      p["w1"].T.astype(jnp.bfloat16), p["b1"].reshape(1, -1), nz)
    return sample[:B], mean[:B], std[:B]


# ---------------------------------------------------------------------------
# Forward wrapper mirroring BlackBoxAutoencoder.forward (x is NCL: (B, 12, T)).
# ---------------------------------------------------------------------------

def black_box_autoencoder_forward(params, x, baseline_df, noise, *,
                                  onlyz=False, fromz=False, use_baselines=False,
                                  z_in=None, use_time_series=True, training=True):
    if not fromz:
        eff_noise = noise if training else jnp.zeros_like(noise)   # eval: sample = mean
        if use_baselines:
            sample, mean, std = baseline_encode(baseline_df, params["baseline"], eff_noise)
        elif use_time_series:
            sample, mean, std = encode_time_series(params, x, eff_noise)
        if onlyz:
            return sample, (mean, std)                             # (sample, Normal(mean, std))
        nonseq_encoding_sample = sample
    else:
        nonseq_encoding_sample = z_in
    # TODO(synk): decode() in the source feeds the bidirectional encoder output
    # (feature width 2*hidden) into decoder_model, an LSTM declared with
    # input_size=hidden; that is a shape mismatch that raises in PyTorch, so the
    # decode path (decoder LSTM + ConvLinear) is not reproduced here.
    return nonseq_encoding_sample, None


# ---------------------------------------------------------------------------
# Deterministic parameter construction (PyTorch-default-style uniform init).
# ---------------------------------------------------------------------------

def init_params(key, *, encoding_size, hidden_size, num_layers, num_baseline_features):
    def u(k, shape, fan_in):
        s = 1.0 / jnp.sqrt(jnp.float32(fan_in))
        return jax.random.uniform(k, shape, jnp.float32, -s, s)

    keys = iter(jax.random.split(key, 64))
    enc_layers = []
    for layer_idx in range(num_layers):
        in_sz = 12 if layer_idx == 0 else 2 * hidden_size
        layer = {}
        for d in ("f", "b"):
            layer[f"w_ih_{d}"] = u(next(keys), (4 * hidden_size, in_sz), hidden_size)
            layer[f"w_hh_{d}"] = u(next(keys), (4 * hidden_size, hidden_size), hidden_size)
            layer[f"b_ih_{d}"] = u(next(keys), (4 * hidden_size,), hidden_size)
            layer[f"b_hh_{d}"] = u(next(keys), (4 * hidden_size,), hidden_size)
        enc_layers.append(layer)

    flat_in = hidden_size * num_layers * 2
    return {
        "encoder": enc_layers,
        "non_seq_proj": {
            "w": u(next(keys), (encoding_size, flat_in), flat_in),
            "b": u(next(keys), (encoding_size,), flat_in),
        },
        "baseline": {
            "w0": u(next(keys), (encoding_size, num_baseline_features), num_baseline_features),
            "b0": u(next(keys), (encoding_size,), num_baseline_features),
            "w1": u(next(keys), (encoding_size, encoding_size), encoding_size),
            "b1": u(next(keys), (encoding_size,), encoding_size),
        },
    }


# ---------------------------------------------------------------------------
# Pure-JAX references (host-side, only for correctness checking in __main__).
# ---------------------------------------------------------------------------

def _reference_time_series(params, x, noise):
    H = params["encoder"][0]["w_hh_f"].shape[1]

    def run_dir(seq, w_ih, w_hh, b_ih, b_hh):
        B = seq.shape[1]

        def step(carry, x_t):
            h, c = carry
            g = x_t @ w_ih.T + b_ih + h @ w_hh.T + b_hh
            i = jax.nn.sigmoid(g[:, :H])
            f = jax.nn.sigmoid(g[:, H:2 * H])
            gg = jnp.tanh(g[:, 2 * H:3 * H])
            o = jax.nn.sigmoid(g[:, 3 * H:])
            c = f * c + i * gg
            h = o * jnp.tanh(c)
            return (h, c), h

        init = (jnp.zeros((B, H), jnp.float32), jnp.zeros((B, H), jnp.float32))
        (_, c), ys = lax.scan(step, init, seq)
        return ys, c

    inp = jnp.transpose(x, (2, 0, 1)).astype(jnp.float32)
    cells = []
    for p in params["encoder"]:
        yf, cf = run_dir(inp, p["w_ih_f"], p["w_hh_f"], p["b_ih_f"], p["b_hh_f"])
        yb, cb = run_dir(inp[::-1], p["w_ih_b"], p["w_hh_b"], p["b_ih_b"], p["b_hh_b"])
        inp = jnp.concatenate([yf, yb[::-1]], axis=-1)
        cells += [cf, cb]
    z = (jnp.concatenate(cells, axis=-1) @ params["non_seq_proj"]["w"].T
         + params["non_seq_proj"]["b"])
    half = z.shape[-1] // 2
    mean = z[:, :half]
    std = jnp.exp(0.5 * z[:, half:])
    return noise * std + mean, mean, std


def _reference_baseline(params, baseline_df, noise):
    p = params["baseline"]
    h = jax.nn.gelu(baseline_df @ p["w0"].T + p["b0"], approximate=False)
    z = h @ p["w1"].T + p["b1"]
    half = z.shape[-1] // 2
    mean = z[:, :half]
    std = jnp.exp(0.5 * z[:, half:])
    return noise * std + mean, mean, std


if __name__ == "__main__":
    B, T = 2, 8
    encoding_size = 16          # must be even (chunked into mean / log-var halves)
    hidden_size = 32
    num_layers = 2
    num_baseline_features = 5

    root = jax.random.PRNGKey(0)
    k_param, k_x, k_b, k_noise = jax.random.split(root, 4)

    params = init_params(k_param, encoding_size=encoding_size, hidden_size=hidden_size,
                         num_layers=num_layers, num_baseline_features=num_baseline_features)

    x = jax.random.normal(k_x, (B, 12, T), jnp.float32)                       # NCL, like PyTorch
    baseline_df = jax.random.normal(k_b, (B, num_baseline_features), jnp.float32)
    noise = jax.random.normal(k_noise, (B, encoding_size // 2), jnp.float32)  # torch.randn_like(mean)

    # Time-series path (fused encoder LSTM -> non_seq_proj -> reparameterize), onlyz=True.
    sample, (mean, std) = black_box_autoencoder_forward(
        params, x, baseline_df, noise, onlyz=True, use_time_series=True, training=True)
    jax.block_until_ready((sample, mean, std))
    assert sample.shape == (B, encoding_size // 2)
    assert mean.shape == (B, encoding_size // 2) and std.shape == (B, encoding_size // 2)

    ref_s, ref_m, ref_d = _reference_time_series(params, x, noise)
    assert jnp.allclose(sample, ref_s, atol=5e-2, rtol=5e-2)
    assert jnp.allclose(mean, ref_m, atol=5e-2, rtol=5e-2)
    assert jnp.allclose(std, ref_d, atol=5e-2, rtol=5e-2)

    # Baseline path (baseline_proj0 -> GELU -> baseline_proj1 -> reparameterize).
    bsample, (bmean, bstd) = black_box_autoencoder_forward(
        params, x, baseline_df, noise, onlyz=True, use_baselines=True, training=True)
    jax.block_until_ready((bsample, bmean, bstd))
    assert bsample.shape == (B, encoding_size // 2)

    rbs, rbm, rbd = _reference_baseline(params, baseline_df, noise)
    assert jnp.allclose(bsample, rbs, atol=5e-2, rtol=5e-2)
    assert jnp.allclose(bmean, rbm, atol=5e-2, rtol=5e-2)
    assert jnp.allclose(bstd, rbd, atol=5e-2, rtol=5e-2)

    print("KERNEL_OK")
</pallas_src>

<mosaic_0001>
module attributes {stable_mosaic.version = 11 : i64} {
  func.func @kernel(%arg0: i32, %arg1: memref<8x8x13xf32, #tpu.memory_space<vmem>>, %arg2: memref<13x128xbf16, #tpu.memory_space<vmem>>, %arg3: memref<13x128xbf16, #tpu.memory_space<vmem>>, %arg4: memref<64x256xbf16, #tpu.memory_space<vmem>>, %arg5: memref<64x128xbf16, #tpu.memory_space<vmem>>, %arg6: memref<64x128xbf16, #tpu.memory_space<vmem>>, %arg7: memref<64x256xbf16, #tpu.memory_space<vmem>>, %arg8: memref<1x256xf32, #tpu.memory_space<vmem>>, %arg9: memref<128x16xbf16, #tpu.memory_space<vmem>>, %arg10: memref<1x16xf32, #tpu.memory_space<vmem>>, %arg11: memref<8x8xf32, #tpu.memory_space<vmem>>, %arg12: memref<8x8xf32, #tpu.memory_space<vmem>>, %arg13: memref<8x8xf32, #tpu.memory_space<vmem>>, %arg14: memref<8x8xf32, #tpu.memory_space<vmem>>, %arg15: memref<64x128xf32, #tpu.memory_space<vmem>>, %arg16: memref<64x128xf32, #tpu.memory_space<vmem>>, %arg17: memref<64x64xf32, #tpu.memory_space<vmem>>) attributes {dimension_semantics = [#tpu.dimension_semantics<parallel>], iteration_bounds = array<i64: 1>, scalar_prefetch = 0 : i64, scratch_operands = 3 : i64, tpu.core_type = #tpu.core_type<tc>, window_params = [{transform_indices = @transform_0, window_bounds = array<i64: 8, 8, 13>}, {pipeline_mode = #tpu.pipeline_mode<synchronous>, transform_indices = @transform_1, window_bounds = array<i64: 13, 128>}, {pipeline_mode = #tpu.pipeline_mode<synchronous>, transform_indices = @transform_2, window_bounds = array<i64: 13, 128>}, {pipeline_mode = #tpu.pipeline_mode<synchronous>, transform_indices = @transform_3, window_bounds = array<i64: 64, 256>}, {pipeline_mode = #tpu.pipeline_mode<synchronous>, transform_indices = @transform_4, window_bounds = array<i64: 64, 128>}, {pipeline_mode = #tpu.pipeline_mode<synchronous>, transform_indices = @transform_5, window_bounds = array<i64: 64, 128>}, {pipeline_mode = #tpu.pipeline_mode<synchronous>, transform_indices = @transform_6, window_bounds = array<i64: 64, 256>}, {pipeline_mode = #tpu.pipeline_mode<synchronous>, transform_indices = @transform_7, window_bounds = array<i64: 1, 256>}, {pipeline_mode = #tpu.pipeline_mode<synchronous>, transform_indices = @transform_8, window_bounds = array<i64: 128, 16>}, {pipeline_mode = #tpu.pipeline_mode<synchronous>, transform_indices = @transform_9, window_bounds = array<i64: 1, 16>}, {transform_indices = @transform_10, window_bounds = array<i64: 8, 8>}, {transform_indices = @transform_11, window_bounds = array<i64: 8, 8>}, {transform_indices = @transform_12, window_bounds = array<i64: 8, 8>}, {transform_indices = @transform_13, window_bounds = array<i64: 8, 8>}]} {
    %c0 = arith.constant 0 : index
    %c0_0 = arith.constant 0 : index
    %c0_1 = arith.constant 0 : index
    %0 = vector.load %arg1[%c0, %c0_0, %c0_1] : memref<8x8x13xf32, #tpu.memory_space<vmem>>, vector<8x8x13xf32>
    %1 = vector.shape_cast %0 : vector<8x8x13xf32> to vector<64x13xf32>
    %2 = arith.truncf %1 : vector<64x13xf32> to vector<64x13xbf16>
    %c0_2 = arith.constant 0 : index
    %c0_3 = arith.constant 0 : index
    %3 = vector.load %arg2[%c0_2, %c0_3] : memref<13x128xbf16, #tpu.memory_space<vmem>>, vector<13x128xbf16>
    %cst = arith.constant dense<0.000000e+00> : vector<64x128xf32>
    %4 = tpu.matmul %2, %3, %cst {dimension_numbers = #tpu.dot_dimension_numbers<[1], [0], [0], [1], [0, 0, 1, 1], [], []>} : vector<64x13xbf16>, vector<13x128xbf16>, vector<64x128xf32> -> vector<64x128xf32>
    %c0_4 = arith.constant 0 : index
    %c0_5 = arith.constant 0 : index
    %5 = vector.load %arg15[%c0_4, %c0_5] : memref<64x128xf32, #tpu.memory_space<vmem>>, vector<64x128xf32>
    tpu.vector_store %arg15[%c0_4, %c0_5], %4 {strides = array<i32>} : memref<64x128xf32, #tpu.memory_space<vmem>>, vector<64x128xf32>,
    %c0_6 = arith.constant 0 : index
    %c0_7 = arith.constant 0 : index
    %6 = vector.load %arg3[%c0_6, %c0_7] : memref<13x128xbf16, #tpu.memory_space<vmem>>, vector<13x128xbf16>
    %cst_8 = arith.constant dense<0.000000e+00> : vector<64x128xf32>
    %7 = tpu.matmul %2, %6, %cst_8 {dimension_numbers = #tpu.dot_dimension_numbers<[1], [0], [0], [1], [0, 0, 1, 1], [], []>} : vector<64x13xbf16>, vector<13x128xbf16>, vector<64x128xf32> -> vector<64x128xf32>
    %c0_9 = arith.constant 0 : index
    %c0_10 = arith.constant 0 : index
    %8 = vector.load %arg16[%c0_9, %c0_10] : memref<64x128xf32, #tpu.memory_space<vmem>>, vector<64x128xf32>
    tpu.vector_store %arg16[%c0_9, %c0_10], %7 {strides = array<i32>} : memref<64x128xf32, #tpu.memory_space<vmem>>, vector<64x128xf32>,
    %c0_11 = arith.constant 0 : index
    %c0_12 = arith.constant 0 : index
    %9 = vector.load %arg4[%c0_11, %c0_12] : memref<64x256xbf16, #tpu.memory_space<vmem>>, vector<64x256xbf16>
    %cst_13 = arith.constant 0.000000e+00 : f32
    %10 = vector.broadcast %cst_13 : f32 to vector<8x32xf32>
    %c0_i32 = arith.constant 0 : i32
    %c8_i32 = arith.constant 8 : i32
    %11 = arith.muli %c0_i32, %c8_i32 : i32
    %12 = tpu.assume_multiple %11, 8 : i32
    %c7_i32 = arith.constant 7 : i32
    %13 = arith.subi %c7_i32, %c0_i32 : i32
    %c8_i32_14 = arith.constant 8 : i32
    %14 = arith.muli %13, %c8_i32_14 : i32
    %15 = tpu.assume_multiple %14, 8 : i32
    %16 = arith.index_cast %12 : i32 to index
    %c0_15 = arith.constant 0 : index
    %17 = vector.load %arg15[%16, %c0_15] : memref<64x128xf32, #tpu.memory_space<vmem>>, vector<8x128xf32>
    %18 = arith.index_cast %15 : i32 to index
    %c0_16 = arith.constant 0 : index
    %19 = vector.load %arg16[%18, %c0_16] : memref<64x128xf32, #tpu.memory_space<vmem>>, vector<8x128xf32>
    %20 = tpu.concatenate %10, %10 in 1 : vector<8x32xf32>, vector<8x32xf32> -> vector<8x64xf32>
    %21 = arith.truncf %20 : vector<8x64xf32> to vector<8x64xbf16>
    %22 = tpu.concatenate %17, %19 in 1 : vector<8x128xf32>, vector<8x128xf32> -> vector<8x256xf32>
    %cst_17 = arith.constant dense<0.000000e+00> : vector<8x256xf32>
    %23 = tpu.matmul %21, %9, %cst_17 {dimension_numbers = #tpu.dot_dimension_numbers<[1], [0], [0], [1], [0, 0, 1, 1], [], []>} : vector<8x64xbf16>, vector<64x256xbf16>, vector<8x256xf32> -> vector<8x256xf32>
    %24 = arith.addf %22, %23 : vector<8x256xf32>
    %25 = arith.negf %24 : vector<8x256xf32>
    %26 = math.exp %25 : vector<8x256xf32>
    %cst_18 = arith.constant 1.000000e+00 : f32
    %27 = vector.broadcast %cst_18 : f32 to vector<8x256xf32>
    %28 = arith.addf %27, %26 : vector<8x256xf32>
    %29 = arith.divf %27, %28 : vector<8x256xf32>
    %30 = math.tanh %24 : vector<8x256xf32>
    %31 = vector.extract_strided_slice %29 {offsets = [0, 32], sizes = [8, 32], strides = [1, 1]} : vector<8x256xf32> to vector<8x32xf32>
    %32 = arith.mulf %31, %10 : vector<8x32xf32>
    %33 = vector.extract_strided_slice %29 {offsets = [0, 0], sizes = [8, 32], strides = [1, 1]} : vector<8x256xf32> to vector<8x32xf32>
    %34 = vector.extract_strided_slice %30 {offsets = [0, 64], sizes = [8, 32], strides = [1, 1]} : vector<8x256xf32> to vector<8x32xf32>
    %35 = arith.mulf %33, %34 : vector<8x32xf32>
    %36 = arith.addf %32, %35 : vector<8x32xf32>
    %37 = vector.extract_strided_slice %29 {offsets = [0, 160], sizes = [8, 32], strides = [1, 1]} : vector<8x256xf32> to vector<8x32xf32>
    %38 = arith.mulf %37, %10 : vector<8x32xf32>
    %39 = vector.extract_strided_slice %29 {offsets = [0, 128], sizes = [8, 32], strides = [1, 1]} : vector<8x256xf32> to vector<8x32xf32>
    %40 = vector.extract_strided_slice %30 {offsets = [0, 192], sizes = [8, 32], strides = [1, 1]} : vector<8x256xf32> to vector<8x32xf32>
    %41 = arith.mulf %39, %40 : vector<8x32xf32>
    %42 = arith.addf %38, %41 : vector<8x32xf32>
    %43 = vector.extract_strided_slice %29 {offsets = [0, 96], sizes = [8, 32], strides = [1, 1]} : vector<8x256xf32> to vector<8x32xf32>
    %44 = math.tanh %36 : vector<8x32xf32>
    %45 = arith.mulf %43, %44 : vector<8x32xf32>
    %46 = vector.extract_strided_slice %29 {offsets = [0, 224], sizes = [8, 32], strides = [1, 1]} : vector<8x256xf32> to vector<8x32xf32>
    %47 = math.tanh %42 : vector<8x32xf32>
    %48 = arith.mulf %46, %47 : vector<8x32xf32>
    %49 = arith.index_cast %12 : i32 to index
    %c0_19 = arith.constant 0 : index
    %50 = vector.load %arg17[%49, %c0_19] : memref<64x64xf32, #tpu.memory_space<vmem>>, vector<8x32xf32>
    tpu.vector_store %arg17[%49, %c0_19], %45 {strides = array<i32>} : memref<64x64xf32, #tpu.memory_space<vmem>>, vector<8x32xf32>,
    %51 = arith.index_cast %15 : i32 to index
    %c32 = arith.constant 32 : index
    %52 = vector.load %arg17[%51, %c32] : memref<64x64xf32, #tpu.memory_space<vmem>>, vector<8x32xf32>
    tpu.vector_store %arg17[%51, %c32], %48 {strides = array<i32>} : memref<64x64xf32, #tpu.memory_space<vmem>>, vector<8x32xf32>,
    %c1_i32 = arith.constant 1 : i32
    %c8_i32_20 = arith.constant 8 : i32
    %53 = arith.muli %c1_i32, %c8_i32_20 : i32
    %54 = tpu.assume_multiple %53, 8 : i32
    %c7_i32_21 = arith.constant 7 : i32
    %55 = arith.subi %c7_i32_21, %c1_i32 : i32
    %c8_i32_22 = arith.constant 8 : i32
    %56 = arith.muli %55, %c8_i32_22 : i32
    %57 = tpu.assume_multiple %56, 8 : i32
    %58 = arith.index_cast %54 : i32 to index
    %c0_23 = arith.constant 0 : index
    %59 = vector.load %arg15[%58, %c0_23] : memref<64x128xf32, #tpu.memory_space<vmem>>, vector<8x128xf32>
    %60 = arith.index_cast %57 : i32 to index
    %c0_24 = arith.constant 0 : index
    %61 = vector.load %arg16[%60, %c0_24] : memref<64x128xf32, #tpu.memory_space<vmem>>, vector<8x128xf32>
    %62 = tpu.concatenate %45, %48 in 1 : vector<8x32xf32>, vector<8x32xf32> -> vector<8x64xf32>
    %63 = arith.truncf %62 : vector<8x64xf32> to vector<8x64xbf16>
    %64 = tpu.concatenate %59, %61 in 1 : vector<8x128xf32>, vector<8x128xf32> -> vector<8x256xf32>
    %cst_25 = arith.constant dense<0.000000e+00> : vector<8x256xf32>
    %65 = tpu.matmul %63, %9, %cst_25 {dimension_numbers = #tpu.dot_dimension_numbers<[1], [0], [0], [1], [0, 0, 1, 1], [], []>} : vector<8x64xbf16>, vector<64x256xbf16>, vector<8x256xf32> -> vector<8x256xf32>
    %66 = arith.addf %64, %65 : vector<8x256xf32>
    %67 = arith.negf %66 : vector<8x256xf32>
    %68 = math.exp %67 : vector<8x256xf32>
    %cst_26 = arith.constant 1.000000e+00 : f32
    %69 = vector.broadcast %cst_26 : f32 to vector<8x256xf32>
    %70 = arith.addf %69, %68 : vector<8x256xf32>
    %71 = arith.divf %69, %70 : vector<8x256xf32>
    %72 = math.tanh %66 : vector<8x256xf32>
    %73 = vector.extract_strided_slice %71 {offsets = [0, 32], sizes = [8, 32], strides = [1, 1]} : vector<8x256xf32> to vector<8x32xf32>
    %74 = arith.mulf %73, %36 : vector<8x32xf32>
    %75 = vector.extract_strided_slice %71 {offsets = [0, 0], sizes = [8, 32], strides = [1, 1]} : vector<8x256xf32> to vector<8x32xf32>
    %76 = vector.extract_strided_slice %72 {offsets = [0, 64], sizes = [8, 32], strides = [1, 1]} : vector<8x256xf32> to vector<8x32xf32>
    %77 = arith.mulf %75, %76 : vector<8x32xf32>
    %78 = arith.addf %74, %77 : vector<8x32xf32>
    %79 = vector.extract_strided_slice %71 {offsets = [0, 160], sizes = [8, 32], strides = [1, 1]} : vector<8x256xf32> to vector<8x32xf32>
    %80 = arith.mulf %79, %42 : vector<8x32xf32>
    %81 = vector.extract_strided_slice %71 {offsets = [0, 128], sizes = [8, 32], strides = [1, 1]} : vector<8x256xf32> to vector<8x32xf32>
    %82 = vector.extract_strided_slice %72 {offsets = [0, 192], sizes = [8, 32], strides = [1, 1]} : vector<8x256xf32> to vector<8x32xf32>
    %83 = arith.mulf %81, %82 : vector<8x32xf32>
    %84 = arith.addf %80, %83 : vector<8x32xf32>
    %85 = vector.extract_strided_slice %71 {offsets = [0, 96], sizes = [8, 32], strides = [1, 1]} : vector<8x256xf32> to vector<8x32xf32>
    %86 = math.tanh %78 : vector<8x32xf32>
    %87 = arith.mulf %85, %86 : vector<8x32xf32>
    %88 = vector.extract_strided_slice %71 {offsets = [0, 224], sizes = [8, 32], strides = [1, 1]} : vector<8x256xf32> to vector<8x32xf32>
    %89 = math.tanh %84 : vector<8x32xf32>
    %90 = arith.mulf %88, %89 : vector<8x32xf32>
    %91 = arith.index_cast %54 : i32 to index
    %c0_27 = arith.constant 0 : index
    %92 = vector.load %arg17[%91, %c0_27] : memref<64x64xf32, #tpu.memory_space<vmem>>, vector<8x32xf32>
    tpu.vector_store %arg17[%91, %c0_27], %87 {strides = array<i32>} : memref<64x64xf32, #tpu.memory_space<vmem>>, vector<8x32xf32>,
    %93 = arith.index_cast %57 : i32 to index
    %c32_28 = arith.constant 32 : index
    %94 = vector.load %arg17[%93, %c32_28] : memref<64x64xf32, #tpu.memory_space<vmem>>, vector<8x32xf32>
    tpu.vector_store %arg17[%93, %c32_28], %90 {strides = array<i32>} : memref<64x64xf32, #tpu.memory_space<vmem>>, vector<8x32xf32>,
    %c2_i32 = arith.constant 2 : i32
    %c8_i32_29 = arith.constant 8 : i32
    %95 = arith.muli %c2_i32, %c8_i32_29 : i32
    %96 = tpu.assume_multiple %95, 8 : i32
    %c7_i32_30 = arith.constant 7 : i32
    %97 = arith.subi %c7_i32_30, %c2_i32 : i32
    %c8_i32_31 = arith.constant 8 : i32
    %98 = arith.muli %97, %c8_i32_31 : i32
    %99 = tpu.assume_multiple %98, 8 : i32
    %100 = arith.index_cast %96 : i32 to index
    %c0_32 = arith.constant 0 : index
    %101 = vector.load %arg15[%100, %c0_32] : memref<64x128xf32, #tpu.memory_space<vmem>>, vector<8x128xf32>
    %102 = arith.index_cast %99 : i32 to index
    %c0_33 = arith.constant 0 : index
    %103 = vector.load %arg16[%102, %c0_33] : memref<64x128xf32, #tpu.memory_space<vmem>>, vector<8x128xf32>
    %104 = tpu.concatenate %87, %90 in 1 : vector<8x32xf32>, vector<8x32xf32> -> vector<8x64xf32>
    %105 = arith.truncf %104 : vector<8x64xf32> to vector<8x64xbf16>
    %106 = tpu.concatenate %101, %103 in 1 : vector<8x128xf32>, vector<8x128xf32> -> vector<8x256xf32>
    %cst_34 = arith.constant dense<0.000000e+00> : vector<8x256xf32>
    %107 = tpu.matmul %105, %9, %cst_34 {dimension_numbers = #tpu.dot_dimension_numbers<[1], [0], [0], [1], [0, 0, 1, 1], [], []>} : vector<8x64xbf16>, vector<64x256xbf16>, vector<8x256xf32> -> vector<8x256xf32>
    %108 = arith.addf %106, %107 : vector<8x256xf32>
    %109 = arith.negf %108 : vector<8x256xf32>
    %110 = math.exp %109 : vector<8x256xf32>
    %cst_35 = arith.constant 1.000000e+00 : f32
    %111 = vector.broadcast %cst_35 : f32 to vector<8x256xf32>
    %112 = arith.addf %111, %110 : vector<8x256xf32>
    %113 = arith.divf %111, %112 : vector<8x256xf32>
    %114 = math.tanh %108 : vector<8x256xf32>
    %115 = vector.extract_strided_slice %113 {offsets = [0, 32], sizes = [8, 32], strides = [1, 1]} : vector<8x256xf32> to vector<8x32xf32>
    %116 = arith.mulf %115, %78 : vector<8x32xf32>
    %117 = vector.extract_strided_slice %113 {offsets = [0, 0], sizes = [8, 32], strides = [1, 1]} : vector<8x256xf32> to vector<8x32xf32>
    %118 = vector.extract_strided_slice %114 {offsets = [0, 64], sizes = [8, 32], strides = [1, 1]} : vector<8x256xf32> to vector<8x32xf32>
    %119 = arith.mulf %117, %118 : vector<8x32xf32>
    %120 = arith.addf %116, %119 : vector<8x32xf32>
    %121 = vector.extract_strided_slice %113 {offsets = [0, 160], sizes = [8, 32], strides = [1, 1]} : vector<8x256xf32> to vector<8x32xf32>
    %122 = arith.mulf %121, %84 : vector<8x32xf32>
    %123 = vector.extract_strided_slice %113 {offsets = [0, 128], sizes = [8, 32], strides = [1, 1]} : vector<8x256xf32> to vector<8x32xf32>
    %124 = vector.extract_strided_slice %114 {offsets = [0, 192], sizes = [8, 32], strides = [1, 1]} : vector<8x256xf32> to vector<8x32xf32>
    %125 = arith.mulf %123, %124 : vector<8x32xf32>
    %126 = arith.addf %122, %125 : vector<8x32xf32>
    %127 = vector.extract_strided_slice %113 {offsets = [0, 96], sizes = [8, 32], strides = [1, 1]} : vector<8x256xf32> to vector<8x32xf32>
    %128 = math.tanh %120 : vector<8x32xf32>
    %129 = arith.mulf %127, %128 : vector<8x32xf32>
    %130 = vector.extract_strided_slice %113 {offsets = [0, 224], sizes = [8, 32], strides = [1, 1]} : vector<8x256xf32> to vector<8x32xf32>
    %131 = math.tanh %126 : vector<8x32xf32>
    %132 = arith.mulf %130, %131 : vector<8x32xf32>
    %133 = arith.index_cast %96 : i32 to index
    %c0_36 = arith.constant 0 : index
    %134 = vector.load %arg17[%133, %c0_36] : memref<64x64xf32, #tpu.memory_space<vmem>>, vector<8x32xf32>
    tpu.vector_store %arg17[%133, %c0_36], %129 {strides = array<i32>} : memref<64x64xf32, #tpu.memory_space<vmem>>, vector<8x32xf32>,
    %135 = arith.index_cast %99 : i32 to index
    %c32_37 = arith.constant 32 : index
    %136 = vector.load %arg17[%135, %c32_37] : memref<64x64xf32, #tpu.memory_space<vmem>>, vector<8x32xf32>
    tpu.vector_store %arg17[%135, %c32_37], %132 {strides = array<i32>} : memref<64x64xf32, #tpu.memory_space<vmem>>, vector<8x32xf32>,
    %c3_i32 = arith.constant 3 : i32
    %c8_i32_38 = arith.constant 8 : i32
    %137 = arith.muli %c3_i32, %c8_i32_38 : i32
    %138 = tpu.assume_multiple %137, 8 : i32
    %c7_i32_39 = arith.constant 7 : i32
    %139 = arith.subi %c7_i32_39, %c3_i32 : i32
    %c8_i32_40 = arith.constant 8 : i32
    %140 = arith.muli %139, %c8_i32_40 : i32
    %141 = tpu.assume_multiple %140, 8 : i32
    %142 = arith.index_cast %138 : i32 to index
    %c0_41 = arith.constant 0 : index
    %143 = vector.load %arg15[%142, %c0_41] : memref<64x128xf32, #tpu.memory_space<vmem>>, vector<8x128xf32>
    %144 = arith.index_cast %141 : i32 to index
    %c0_42 = arith.constant 0 : index
    %145 = vector.load %arg16[%144, %c0_42] : memref<64x128xf32, #tpu.memory_space<vmem>>, vector<8x128xf32>
    %146 = tpu.concatenate %129, %132 in 1 : vector<8x32xf32>, vector<8x32xf32> -> vector<8x64xf32>
    %147 = arith.truncf %146 : vector<8x64xf32> to vector<8x64xbf16>
    %148 = tpu.concatenate %143, %145 in 1 : vector<8x128xf32>, vector<8x128xf32> -> vector<8x256xf32>
    %cst_43 = arith.constant dense<0.000000e+00> : vector<8x256xf32>
    %149 = tpu.matmul %147, %9, %cst_43 {dimension_numbers = #tpu.dot_dimension_numbers<[1], [0], [0], [1], [0, 0, 1, 1], [], []>} : vector<8x64xbf16>, vector<64x256xbf16>, vector<8x256xf32> -> vector<8x256xf32>
    %150 = arith.addf %148, %149 : vector<8x256xf32>
    %151 = arith.negf %150 : vector<8x256xf32>
    %152 = math.exp %151 : vector<8x256xf32>
    %cst_44 = arith.constant 1.000000e+00 : f32
    %153 = vector.broadcast %cst_44 : f32 to vector<8x256xf32>
    %154 = arith.addf %153, %152 : vector<8x256xf32>
    %155 = arith.divf %153, %154 : vector<8x256xf32>
    %156 = math.tanh %150 : vector<8x256xf32>
    %157 = vector.extract_strided_slice %155 {offsets = [0, 32], sizes = [8, 32], strides = [1, 1]} : vector<8x256xf32> to vector<8x32xf32>
    %158 = arith.mulf %157, %120 : vector<8x32xf32>
    %159 = vector.extract_strided_slice %155 {offsets = [0, 0], sizes = [8, 32], strides = [1, 1]} : vector<8x256xf32> to vector<8x32xf32>
    %160 = vector.extract_strided_slice %156 {offsets = [0, 64], sizes = [8, 32], strides = [1, 1]} : vector<8x256xf32> to vector<8x32xf32>
    %161 = arith.mulf %159, %160 : vector<8x32xf32>
    %162 = arith.addf %158, %161 : vector<8x32xf32>
    %163 = vector.extract_strided_slice %155 {offsets = [0, 160], sizes = [8, 32], strides = [1, 1]} : vector<8x256xf32> to vector<8x32xf32>
    %164 = arith.mulf %163, %126 : vector<8x32xf32>
    %165 = vector.extract_strided_slice %155 {offsets = [0, 128], sizes = [8, 32], strides = [1, 1]} : vector<8x256xf32> to vector<8x32xf32>
    %166 = vector.extract_strided_slice %156 {offsets = [0, 192], sizes = [8, 32], strides = [1, 1]} : vector<8x256xf32> to vector<8x32xf32>
    %167 = arith.mulf %165, %166 : vector<8x32xf32>
    %168 = arith.addf %164, %167 : vector<8x32xf32>
    %169 = vector.extract_strided_slice %155 {offsets = [0, 96], sizes = [8, 32], strides = [1, 1]} : vector<8x256xf32> to vector<8x32xf32>
    %170 = math.tanh %162 : vector<8x32xf32>
    %171 = arith.mulf %169, %170 : vector<8x32xf32>
    %172 = vector.extract_strided_slice %155 {offsets = [0, 224], sizes = [8, 32], strides = [1, 1]} : vector<8x256xf32> to vector<8x32xf32>
    %173 = math.tanh %168 : vector<8x32xf32>
    %174 = arith.mulf %172, %173 : vector<8x32xf32>
    %175 = arith.index_cast %138 : i32 to index
    %c0_45 = arith.constant 0 : index
    %176 = vector.load %arg17[%175, %c0_45] : memref<64x64xf32, #tpu.memory_space<vmem>>, vector<8x32xf32>
    tpu.vector_store %arg17[%175, %c0_45], %171 {strides = array<i32>} : memref<64x64xf32, #tpu.memory_space<vmem>>, vector<8x32xf32>,
    %177 = arith.index_cast %141 : i32 to index
    %c32_46 = arith.constant 32 : index
    %178 = vector.load %arg17[%177, %c32_46] : memref<64x64xf32, #tpu.memory_space<vmem>>, vector<8x32xf32>
    tpu.vector_store %arg17[%177, %c32_46], %174 {strides = array<i32>} : memref<64x64xf32, #tpu.memory_space<vmem>>, vector<8x32xf32>,
    %c4_i32 = arith.constant 4 : i32
    %c8_i32_47 = arith.constant 8 : i32
    %179 = arith.muli %c4_i32, %c8_i32_47 : i32
    %180 = tpu.assume_multiple %179, 8 : i32
    %c7_i32_48 = arith.constant 7 : i32
    %181 = arith.subi %c7_i32_48, %c4_i32 : i32
    %c8_i32_49 = arith.constant 8 : i32
    %182 = arith.muli %181, %c8_i32_49 : i32
    %183 = tpu.assume_multiple %182, 8 : i32
    %184 = arith.index_cast %180 : i32 to index
    %c0_50 = arith.constant 0 : index
    %185 = vector.load %arg15[%184, %c0_50] : memref<64x128xf32, #tpu.memory_space<vmem>>, vector<8x128xf32>
    %186 = arith.index_cast %183 : i32 to index
    %c0_51 = arith.constant 0 : index
    %187 = vector.load %arg16[%186, %c0_51] : memref<64x128xf32, #tpu.memory_space<vmem>>, vector<8x128xf32>
    %188 = tpu.concatenate %171, %174 in 1 : vector<8x32xf32>, vector<8x32xf32> -> vector<8x64xf32>
    %189 = arith.truncf %188 : vector<8x64xf32> to vector<8x64xbf16>
    %190 = tpu.concatenate %185, %187 in 1 : vector<8x128xf32>, vector<8x128xf32> -> vector<8x256xf32>
    %cst_52 = arith.constant dense<0.000000e+00> : vector<8x256xf32>
    %191 = tpu.matmul %189, %9, %cst_52 {dimension_numbers = #tpu.dot_dimension_numbers<[1], [0], [0], [1], [0, 0, 1, 1], [], []>} : vector<8x64xbf16>, vector<64x256xbf16>, vector<8x256xf32> -> vector<8x256xf32>
    %192 = arith.addf %190, %191 : vector<8x256xf32>
    %193 = arith.negf %192 : vector<8x256xf32>
    %194 = math.exp %193 : vector<8x256xf32>
    %cst_53 = arith.constant 1.000000e+00 : f32
    %195 = vector.broadcast %cst_53 : f32 to vector<8x256xf32>
    %196 = arith.addf %195, %194 : vector<8x256xf32>
    %197 = arith.divf %195, %196 : vector<8x256xf32>
    %198 = math.tanh %192 : vector<8x256xf32>
    %199 = vector.extract_strided_slice %197 {offsets = [0, 32], sizes = [8, 32], strides = [1, 1]} : vector<8x256xf32> to vector<8x32xf32>
    %200 = arith.mulf %199, %162 : vector<8x32xf32>
    %201 = vector.extract_strided_slice %197 {offsets = [0, 0], sizes = [8, 32], strides = [1, 1]} : vector<8x256xf32> to vector<8x32xf32>
    %202 = vector.extract_strided_slice %198 {offsets = [0, 64], sizes = [8, 32], strides = [1, 1]} : vector<8x256xf32> to vector<8x32xf32>
    %203 = arith.mulf %201, %202 : vector<8x32xf32>
    %204 = arith.addf %200, %203 : vector<8x32xf32>
    %205 = vector.extract_strided_slice %197 {offsets = [0, 160], sizes = [8, 32], strides = [1, 1]} : vector<8x256xf32> to vector<8x32xf32>
    %206 = arith.mulf %205, %168 : vector<8x32xf32>
    %207 = vector.extract_strided_slice %197 {offsets = [0, 128], sizes = [8, 32], strides = [1, 1]} : vector<8x256xf32> to vector<8x32xf32>
    %208 = vector.extract_strided_slice %198 {offsets = [0, 192], sizes = [8, 32], strides = [1, 1]} : vector<8x256xf32> to vector<8x32xf32>
    %209 = arith.mulf %207, %208 : vector<8x32xf32>
    %210 = arith.addf %206, %209 : vector<8x32xf32>
    %211 = vector.extract_strided_slice %197 {offsets = [0, 96], sizes = [8, 32], strides = [1, 1]} : vector<8x256xf32> to vector<8x32xf32>
    %212 = math.tanh %204 : vector<8x32xf32>
    %213 = arith.mulf %211, %212 : vector<8x32xf32>
    %214 = vector.extract_strided_slice %197 {offsets = [0, 224], sizes = [8, 32], strides = [1, 1]} : vector<8x256xf32> to vector<8x32xf32>
    %215 = math.tanh %210 : vector<8x32xf32>
    %216 = arith.mulf %214, %215 : vector<8x32xf32>
    %217 = arith.index_cast %180 : i32 to index
    %c0_54 = arith.constant 0 : index
    %218 = vector.load %arg17[%217, %c0_54] : memref<64x64xf32, #tpu.memory_space<vmem>>, vector<8x32xf32>
    tpu.vector_store %arg17[%217, %c0_54], %213 {strides = array<i32>} : memref<64x64xf32, #tpu.memory_space<vmem>>, vector<8x32xf32>,
    %219 = arith.index_cast %183 : i32 to index
    %c32_55 = arith.constant 32 : index
    %220 = vector.load %arg17[%219, %c32_55] : memref<64x64xf32, #tpu.memory_space<vmem>>, vector<8x32xf32>
    tpu.vector_store %arg17[%219, %c32_55], %216 {strides = array<i32>} : memref<64x64xf32, #tpu.memory_space<vmem>>, vector<8x32xf32>,
    %c5_i32 = arith.constant 5 : i32
    %c8_i32_56 = arith.constant 8 : i32
    %221 = arith.muli %c5_i32, %c8_i32_56 : i32
    %222 = tpu.assume_multiple %221, 8 : i32
    %c7_i32_57 = arith.constant 7 : i32
    %223 = arith.subi %c7_i32_57, %c5_i32 : i32
    %c8_i32_58 = arith.constant 8 : i32
    %224 = arith.muli %223, %c8_i32_58 : i32
    %225 = tpu.assume_multiple %224, 8 : i32
    %226 = arith.index_cast %222 : i32 to index
    %c0_59 = arith.constant 0 : index
    %227 = vector.load %arg15[%226, %c0_59] : memref<64x128xf32, #tpu.memory_space<vmem>>, vector<8x128xf32>
    %228 = arith.index_cast %225 : i32 to index
    %c0_60 = arith.constant 0 : index
    %229 = vector.load %arg16[%228, %c0_60] : memref<64x128xf32, #tpu.memory_space<vmem>>, vector<8x128xf32>
    %230 = tpu.concatenate %213, %216 in 1 : vector<8x32xf32>, vector<8x32xf32> -> vector<8x64xf32>
    %231 = arith.truncf %230 : vector<8x64xf32> to vector<8x64xbf16>
    %232 = tpu.concatenate %227, %229 in 1 : vector<8x128xf32>, vector<8x128xf32> -> vector<8x256xf32>
    %cst_61 = arith.constant dense<0.000000e+00> : vector<8x256xf32>
    %233 = tpu.matmul %231, %9, %cst_61 {dimension_numbers = #tpu.dot_dimension_numbers<[1], [0], [0], [1], [0, 0, 1, 1], [], []>} : vector<8x64xbf16>, vector<64x256xbf16>, vector<8x256xf32> -> vector<8x256xf32>
    %234 = arith.addf %232, %233 : vector<8x256xf32>
    %235 = arith.negf %234 : vector<8x256xf32>
    %236 = math.exp %235 : vector<8x256xf32>
    %cst_62 = arith.constant 1.000000e+00 : f32
    %237 = vector.broadcast %cst_62 : f32 to vector<8x256xf32>
    %238 = arith.addf %237, %236 : vector<8x256xf32>
    %239 = arith.divf %237, %238 : vector<8x256xf32>
    %240 = math.tanh %234 : vector<8x256xf32>
    %241 = vector.extract_strided_slice %239 {offsets = [0, 32], sizes = [8, 32], strides = [1, 1]} : vector<8x256xf32> to vector<8x32xf32>
    %242 = arith.mulf %241, %204 : vector<8x32xf32>
    %243 = vector.extract_strided_slice %239 {offsets = [0, 0], sizes = [8, 32], strides = [1, 1]} : vector<8x256xf32> to vector<8x32xf32>
    %244 = vector.extract_strided_slice %240 {offsets = [0, 64], sizes = [8, 32], strides = [1, 1]} : vector<8x256xf32> to vector<8x32xf32>
    %245 = arith.mulf %243, %244 : vector<8x32xf32>
    %246 = arith.addf %242, %245 : vector<8x32xf32>
    %247 = vector.extract_strided_slice %239 {offsets = [0, 160], sizes = [8, 32], strides = [1, 1]} : vector<8x256xf32> to vector<8x32xf32>
    %248 = arith.mulf %247, %210 : vector<8x32xf32>
    %249 = vector.extract_strided_slice %239 {offsets = [0, 128], sizes = [8, 32], strides = [1, 1]} : vector<8x256xf32> to vector<8x32xf32>
    %250 = vector.extract_strided_slice %240 {offsets = [0, 192], sizes = [8, 32], strides = [1, 1]} : vector<8x256xf32> to vector<8x32xf32>
    %251 = arith.mulf %249, %250 : vector<8x32xf32>
    %252 = arith.addf %248, %251 : vector<8x32xf32>
    %253 = vector.extract_strided_slice %239 {offsets = [0, 96], sizes = [8, 32], strides = [1, 1]} : vector<8x256xf32> to vector<8x32xf32>
    %254 = math.tanh %246 : vector<8x32xf32>
    %255 = arith.mulf %253, %254 : vector<8x32xf32>
    %256 = vector.extract_strided_slice %239 {offsets = [0, 224], sizes = [8, 32], strides = [1, 1]} : vector<8x256xf32> to vector<8x32xf32>
    %257 = math.tanh %252 : vector<8x32xf32>
    %258 = arith.mulf %256, %257 : vector<8x32xf32>
    %259 = arith.index_cast %222 : i32 to index
    %c0_63 = arith.constant 0 : index
    %260 = vector.load %arg17[%259, %c0_63] : memref<64x64xf32, #tpu.memory_space<vmem>>, vector<8x32xf32>
    tpu.vector_store %arg17[%259, %c0_63], %255 {strides = array<i32>} : memref<64x64xf32, #tpu.memory_space<vmem>>, vector<8x32xf32>,
    %261 = arith.index_cast %225 : i32 to index
    %c32_64 = arith.constant 32 : index
    %262 = vector.load %arg17[%261, %c32_64] : memref<64x64xf32, #tpu.memory_space<vmem>>, vector<8x32xf32>
    tpu.vector_store %arg17[%261, %c32_64], %258 {strides = array<i32>} : memref<64x64xf32, #tpu.memory_space<vmem>>, vector<8x32xf32>,
    %c6_i32 = arith.constant 6 : i32
    %c8_i32_65 = arith.constant 8 : i32
    %263 = arith.muli %c6_i32, %c8_i32_65 : i32
    %264 = tpu.assume_multiple %263, 8 : i32
    %c7_i32_66 = arith.constant 7 : i32
    %265 = arith.subi %c7_i32_66, %c6_i32 : i32
    %c8_i32_67 = arith.constant 8 : i32
    %266 = arith.muli %265, %c8_i32_67 : i32
    %267 = tpu.assume_multiple %266, 8 : i32
    %268 = arith.index_cast %264 : i32 to index
    %c0_68 = arith.constant 0 : index
    %269 = vector.load %arg15[%268, %c0_68] : memref<64x128xf32, #tpu.memory_space<vmem>>, vector<8x128xf32>
    %270 = arith.index_cast %267 : i32 to index
    %c0_69 = arith.constant 0 : index
    %271 = vector.load %arg16[%270, %c0_69] : memref<64x128xf32, #tpu.memory_space<vmem>>, vector<8x128xf32>
    %272 = tpu.concatenate %255, %258 in 1 : vector<8x32xf32>, vector<8x32xf32> -> vector<8x64xf32>
    %273 = arith.truncf %272 : vector<8x64xf32> to vector<8x64xbf16>
    %274 = tpu.concatenate %269, %271 in 1 : vector<8x128xf32>, vector<8x128xf32> -> vector<8x256xf32>
    %cst_70 = arith.constant dense<0.000000e+00> : vector<8x256xf32>
    %275 = tpu.matmul %273, %9, %cst_70 {dimension_numbers = #tpu.dot_dimension_numbers<[1], [0], [0], [1], [0, 0, 1, 1], [], []>} : vector<8x64xbf16>, vector<64x256xbf16>, vector<8x256xf32> -> vector<8x256xf32>
    %276 = arith.addf %274, %275 : vector<8x256xf32>
    %277 = arith.negf %276 : vector<8x256xf32>
    %278 = math.exp %277 : vector<8x256xf32>
    %cst_71 = arith.constant 1.000000e+00 : f32
    %279 = vector.broadcast %cst_71 : f32 to vector<8x256xf32>
    %280 = arith.addf %279, %278 : vector<8x256xf32>
    %281 = arith.divf %279, %280 : vector<8x256xf32>
    %282 = math.tanh %276 : vector<8x256xf32>
    %283 = vector.extract_strided_slice %281 {offsets = [0, 32], sizes = [8, 32], strides = [1, 1]} : vector<8x256xf32> to vector<8x32xf32>
    %284 = arith.mulf %283, %246 : vector<8x32xf32>
    %285 = vector.extract_strided_slice %281 {offsets = [0, 0], sizes = [8, 32], strides = [1, 1]} : vector<8x256xf32> to vector<8x32xf32>
    %286 = vector.extract_strided_slice %282 {offsets = [0, 64], sizes = [8, 32], strides = [1, 1]} : vector<8x256xf32> to vector<8x32xf32>
    %287 = arith.mulf %285, %286 : vector<8x32xf32>
    %288 = arith.addf %284, %287 : vector<8x32xf32>
    %289 = vector.extract_strided_slice %281 {offsets = [0, 160], sizes = [8, 32], strides = [1, 1]} : vector<8x256xf32> to vector<8x32xf32>
    %290 = arith.mulf %289, %252 : vector<8x32xf32>
    %291 = vector.extract_strided_slice %281 {offsets = [0, 128], sizes = [8, 32], strides = [1, 1]} : vector<8x256xf32> to vector<8x32xf32>
    %292 = vector.extract_strided_slice %282 {offsets = [0, 192], sizes = [8, 32], strides = [1, 1]} : vector<8x256xf32> to vector<8x32xf32>
    %293 = arith.mulf %291, %292 : vector<8x32xf32>
    %294 = arith.addf %290, %293 : vector<8x32xf32>
    %295 = vector.extract_strided_slice %281 {offsets = [0, 96], sizes = [8, 32], strides = [1, 1]} : vector<8x256xf32> to vector<8x32xf32>
    %296 = math.tanh %288 : vector<8x32xf32>
    %297 = arith.mulf %295, %296 : vector<8x32xf32>
    %298 = vector.extract_strided_slice %281 {offsets = [0, 224], sizes = [8, 32], strides = [1, 1]} : vector<8x256xf32> to vector<8x32xf32>
    %299 = math.tanh %294 : vector<8x32xf32>
    %300 = arith.mulf %298, %299 : vector<8x32xf32>
    %301 = arith.index_cast %264 : i32 to index
    %c0_72 = arith.constant 0 : index
    %302 = vector.load %arg17[%301, %c0_72] : memref<64x64xf32, #tpu.memory_space<vmem>>, vector<8x32xf32>
    tpu.vector_store %arg17[%301, %c0_72], %297 {strides = array<i32>} : memref<64x64xf32, #tpu.memory_space<vmem>>, vector<8x32xf32>,
    %303 = arith.index_cast %267 : i32 to index
    %c32_73 = arith.constant 32 : index
    %304 = vector.load %arg17[%303, %c32_73] : memref<64x64xf32, #tpu.memory_space<vmem>>, vector<8x32xf32>
    tpu.vector_store %arg17[%303, %c32_73], %300 {strides = array<i32>} : memref<64x64xf32, #tpu.memory_space<vmem>>, vector<8x32xf32>,
    %c7_i32_74 = arith.constant 7 : i32
    %c8_i32_75 = arith.constant 8 : i32
    %305 = arith.muli %c7_i32_74, %c8_i32_75 : i32
    %306 = tpu.assume_multiple %305, 8 : i32
    %c7_i32_76 = arith.constant 7 : i32
    %307 = arith.subi %c7_i32_76, %c7_i32_74 : i32
    %c8_i32_77 = arith.constant 8 : i32
    %308 = arith.muli %307, %c8_i32_77 : i32
    %309 = tpu.assume_multiple %308, 8 : i32
    %310 = arith.index_cast %306 : i32 to index
    %c0_78 = arith.constant 0 : index
    %311 = vector.load %arg15[%310, %c0_78] : memref<64x128xf32, #tpu.memory_space<vmem>>, vector<8x128xf32>
    %312 = arith.index_cast %309 : i32 to index
    %c0_79 = arith.constant 0 : index
    %313 = vector.load %arg16[%312, %c0_79] : memref<64x128xf32, #tpu.memory_space<vmem>>, vector<8x128xf32>
    %314 = tpu.concatenate %297, %300 in 1 : vector<8x32xf32>, vector<8x32xf32> -> vector<8x64xf32>
    %315 = arith.truncf %314 : vector<8x64xf32> to vector<8x64xbf16>
    %316 = tpu.concatenate %311, %313 in 1 : vector<8x128xf32>, vector<8x128xf32> -> vector<8x256xf32>
    %cst_80 = arith.constant dense<0.000000e+00> : vector<8x256xf32>
    %317 = tpu.matmul %315, %9, %cst_80 {dimension_numbers = #tpu.dot_dimension_numbers<[1], [0], [0], [1], [0, 0, 1, 1], [], []>} : vector<8x64xbf16>, vector<64x256xbf16>, vector<8x256xf32> -> vector<8x256xf32>
    %318 = arith.addf %316, %317 : vector<8x256xf32>
    %319 = arith.negf %318 : vector<8x256xf32>
    %320 = math.exp %319 : vector<8x256xf32>
    %cst_81 = arith.constant 1.000000e+00 : f32
    %321 = vector.broadcast %cst_81 : f32 to vector<8x256xf32>
    %322 = arith.addf %321, %320 : vector<8x256xf32>
    %323 = arith.divf %321, %322 : vector<8x256xf32>
    %324 = math.tanh %318 : vector<8x256xf32>
    %325 = vector.extract_strided_slice %323 {offsets = [0, 32], sizes = [8, 32], strides = [1, 1]} : vector<8x256xf32> to vector<8x32xf32>
    %326 = arith.mulf %325, %288 : vector<8x32xf32>
    %327 = vector.extract_strided_slice %323 {offsets = [0, 0], sizes = [8, 32], strides = [1, 1]} : vector<8x256xf32> to vector<8x32xf32>
    %328 = vector.extract_strided_slice %324 {offsets = [0, 64], sizes = [8, 32], strides = [1, 1]} : vector<8x256xf32> to vector<8x32xf32>
    %329 = arith.mulf %327, %328 : vector<8x32xf32>
    %330 = arith.addf %326, %329 : vector<8x32xf32>
    %331 = vector.extract_strided_slice %323 {offsets = [0, 160], sizes = [8, 32], strides = [1, 1]} : vector<8x256xf32> to vector<8x32xf32>
    %332 = arith.mulf %331, %294 : vector<8x32xf32>
    %333 = vector.extract_strided_slice %323 {offsets = [0, 128], sizes = [8, 32], strides = [1, 1]} : vector<8x256xf32> to vector<8x32xf32>
    %334 = vector.extract_strided_slice %324 {offsets = [0, 192], sizes = [8, 32], strides = [1, 1]} : vector<8x256xf32> to vector<8x32xf32>
    %335 = arith.mulf %333, %334 : vector<8x32xf32>
    %336 = arith.addf %332, %335 : vector<8x32xf32>
    %337 = vector.extract_strided_slice %323 {offsets = [0, 96], sizes = [8, 32], strides = [1, 1]} : vector<8x256xf32> to vector<8x32xf32>
    %338 = math.tanh %330 : vector<8x32xf32>
    %339 = arith.mulf %337, %338 : vector<8x32xf32>
    %340 = vector.extract_strided_slice %323 {offsets = [0, 224], sizes = [8, 32], strides = [1, 1]} : vector<8x256xf32> to vector<8x32xf32>
    %341 = math.tanh %336 : vector<8x32xf32>
    %342 = arith.mulf %340, %341 : vector<8x32xf32>
    %343 = arith.index_cast %306 : i32 to index
    %c0_82 = arith.constant 0 : index
    %344 = vector.load %arg17[%343, %c0_82] : memref<64x64xf32, #tpu.memory_space<vmem>>, vector<8x32xf32>
    tpu.vector_store %arg17[%343, %c0_82], %339 {strides = array<i32>} : memref<64x64xf32, #tpu.memory_space<vmem>>, vector<8x32xf32>,
    %345 = arith.index_cast %309 : i32 to index
    %c32_83 = arith.constant 32 : index
    %346 = vector.load %arg17[%345, %c32_83] : memref<64x64xf32, #tpu.memory_space<vmem>>, vector<8x32xf32>
    tpu.vector_store %arg17[%345, %c32_83], %342 {strides = array<i32>} : memref<64x64xf32, #tpu.memory_space<vmem>>, vector<8x32xf32>,
    %c8_i32_84 = arith.constant 8 : i32
    %c0_85 = arith.constant 0 : index
    %c0_86 = arith.constant 0 : index
    %347 = vector.load %arg17[%c0_85, %c0_86] : memref<64x64xf32, #tpu.memory_space<vmem>>, vector<64x64xf32>
    %348 = arith.truncf %347 : vector<64x64xf32> to vector<64x64xbf16>
    %c0_87 = arith.constant 0 : index
    %c0_88 = arith.constant 0 : index
    %349 = vector.load %arg5[%c0_87, %c0_88] : memref<64x128xbf16, #tpu.memory_space<vmem>>, vector<64x128xbf16>
    %cst_89 = arith.constant dense<0.000000e+00> : vector<64x128xf32>
    %350 = tpu.matmul %348, %349, %cst_89 {dimension_numbers = #tpu.dot_dimension_numbers<[1], [0], [0], [1], [0, 0, 1, 1], [], []>} : vector<64x64xbf16>, vector<64x128xbf16>, vector<64x128xf32> -> vector<64x128xf32>
    %c0_90 = arith.constant 0 : index
    %c0_91 = arith.constant 0 : index
    %351 = vector.load %arg8[%c0_90, %c0_91] : memref<1x256xf32, #tpu.memory_space<vmem>>, vector<1x128xf32>
    %352 = vector.broadcast %351 : vector<1x128xf32> to vector<64x128xf32>
    %353 = arith.addf %350, %352 : vector<64x128xf32>
    %c0_92 = arith.constant 0 : index
    %c0_93 = arith.constant 0 : index
    %354 = vector.load %arg15[%c0_92, %c0_93] : memref<64x128xf32, #tpu.memory_space<vmem>>, vector<64x128xf32>
    tpu.vector_store %arg15[%c0_92, %c0_93], %353 {strides = array<i32>} : memref<64x128xf32, #tpu.memory_space<vmem>>, vector<64x128xf32>,
    %c0_94 = arith.constant 0 : index
    %c0_95 = arith.constant 0 : index
    %355 = vector.load %arg6[%c0_94, %c0_95] : memref<64x128xbf16, #tpu.memory_space<vmem>>, vector<64x128xbf16>
    %cst_96 = arith.constant dense<0.000000e+00> : vector<64x128xf32>
    %356 = tpu.matmul %348, %355, %cst_96 {dimension_numbers = #tpu.dot_dimension_numbers<[1], [0], [0], [1], [0, 0, 1, 1], [], []>} : vector<64x64xbf16>, vector<64x128xbf16>, vector<64x128xf32> -> vector<64x128xf32>
    %c0_97 = arith.constant 0 : index
    %c128 = arith.constant 128 : index
    %357 = vector.load %arg8[%c0_97, %c128] : memref<1x256xf32, #tpu.memory_space<vmem>>, vector<1x128xf32>
    %358 = vector.broadcast %357 : vector<1x128xf32> to vector<64x128xf32>
    %359 = arith.addf %356, %358 : vector<64x128xf32>
    %c0_98 = arith.constant 0 : index
    %c0_99 = arith.constant 0 : index
    %360 = vector.load %arg16[%c0_98, %c0_99] : memref<64x128xf32, #tpu.memory_space<vmem>>, vector<64x128xf32>
    tpu.vector_store %arg16[%c0_98, %c0_99], %359 {strides = array<i32>} : memref<64x128xf32, #tpu.memory_space<vmem>>, vector<64x128xf32>,
    %c0_100 = arith.constant 0 : index
    %c0_101 = arith.constant 0 : index
    %361 = vector.load %arg7[%c0_100, %c0_101] : memref<64x256xbf16, #tpu.memory_space<vmem>>, vector<64x256xbf16>
    %cst_102 = arith.constant 0.000000e+00 : f32
    %362 = vector.broadcast %cst_102 : f32 to vector<8x32xf32>
    %c0_i32_103 = arith.constant 0 : i32
    %c8_i32_104 = arith.constant 8 : i32
    %363 = arith.muli %c0_i32_103, %c8_i32_104 : i32
    %364 = tpu.assume_multiple %363, 8 : i32
    %c7_i32_105 = arith.constant 7 : i32
    %365 = arith.subi %c7_i32_105, %c0_i32_103 : i32
    %c8_i32_106 = arith.constant 8 : i32
    %366 = arith.muli %365, %c8_i32_106 : i32
    %367 = tpu.assume_multiple %366, 8 : i32
    %368 = arith.index_cast %364 : i32 to index
    %c0_107 = arith.constant 0 : index
    %369 = vector.load %arg15[%368, %c0_107] : memref<64x128xf32, #tpu.memory_space<vmem>>, vector<8x128xf32>
    %370 = arith.index_cast %367 : i32 to index
    %c0_108 = arith.constant 0 : index
    %371 = vector.load %arg16[%370, %c0_108] : memref<64x128xf32, #tpu.memory_space<vmem>>, vector<8x128xf32>
    %372 = tpu.concatenate %362, %362 in 1 : vector<8x32xf32>, vector<8x32xf32> -> vector<8x64xf32>
    %373 = arith.truncf %372 : vector<8x64xf32> to vector<8x64xbf16>
    %374 = tpu.concatenate %369, %371 in 1 : vector<8x128xf32>, vector<8x128xf32> -> vector<8x256xf32>
    %cst_109 = arith.constant dense<0.000000e+00> : vector<8x256xf32>
    %375 = tpu.matmul %373, %361, %cst_109 {dimension_numbers = #tpu.dot_dimension_numbers<[1], [0], [0], [1], [0, 0, 1, 1], [], []>} : vector<8x64xbf16>, vector<64x256xbf16>, vector<8x256xf32> -> vector<8x256xf32>
    %376 = arith.addf %374, %375 : vector<8x256xf32>
    %377 = arith.negf %376 : vector<8x256xf32>
    %378 = math.exp %377 : vector<8x256xf32>
    %cst_110 = arith.constant 1.000000e+00 : f32
    %379 = vector.broadcast %cst_110 : f32 to vector<8x256xf32>
    %380 = arith.addf %379, %378 : vector<8x256xf32>
    %381 = arith.divf %379, %380 : vector<8x256xf32>
    %382 = math.tanh %376 : vector<8x256xf32>
    %383 = vector.extract_strided_slice %381 {offsets = [0, 32], sizes = [8, 32], strides = [1, 1]} : vector<8x256xf32> to vector<8x32xf32>
    %384 = arith.mulf %383, %362 : vector<8x32xf32>
    %385 = vector.extract_strided_slice %381 {offsets = [0, 0], sizes = [8, 32], strides = [1, 1]} : vector<8x256xf32> to vector<8x32xf32>
    %386 = vector.extract_strided_slice %382 {offsets = [0, 64], sizes = [8, 32], strides = [1, 1]} : vector<8x256xf32> to vector<8x32xf32>
    %387 = arith.mulf %385, %386 : vector<8x32xf32>
    %388 = arith.addf %384, %387 : vector<8x32xf32>
    %389 = vector.extract_strided_slice %381 {offsets = [0, 160], sizes = [8, 32], strides = [1, 1]} : vector<8x256xf32> to vector<8x32xf32>
    %390 = arith.mulf %389, %362 : vector<8x32xf32>
    %391 = vector.extract_strided_slice %381 {offsets = [0, 128], sizes = [8, 32], strides = [1, 1]} : vector<8x256xf32> to vector<8x32xf32>
    %392 = vector.extract_strided_slice %382 {offsets = [0, 192], sizes = [8, 32], strides = [1, 1]} : vector<8x256xf32> to vector<8x32xf32>
    %393 = arith.mulf %391, %392 : vector<8x32xf32>
    %394 = arith.addf %390, %393 : vector<8x32xf32>
    %395 = vector.extract_strided_slice %381 {offsets = [0, 96], sizes = [8, 32], strides = [1, 1]} : vector<8x256xf32> to vector<8x32xf32>
    %396 = math.tanh %388 : vector<8x32xf32>
    %397 = arith.mulf %395, %396 : vector<8x32xf32>
    %398 = vector.extract_strided_slice %381 {offsets = [0, 224], sizes = [8, 32], strides = [1, 1]} : vector<8x256xf32> to vector<8x32xf32>
    %399 = math.tanh %394 : vector<8x32xf32>
    %400 = arith.mulf %398, %399 : vector<8x32xf32>
    %c1_i32_111 = arith.constant 1 : i32
    %c8_i32_112 = arith.constant 8 : i32
    %401 = arith.muli %c1_i32_111, %c8_i32_112 : i32
    %402 = tpu.assume_multiple %401, 8 : i32
    %c7_i32_113 = arith.constant 7 : i32
    %403 = arith.subi %c7_i32_113, %c1_i32_111 : i32
    %c8_i32_114 = arith.constant 8 : i32
    %404 = arith.muli %403, %c8_i32_114 : i32
    %405 = tpu.assume_multiple %404, 8 : i32
    %406 = arith.index_cast %402 : i32 to index
    %c0_115 = arith.constant 0 : index
    %407 = vector.load %arg15[%406, %c0_115] : memref<64x128xf32, #tpu.memory_space<vmem>>, vector<8x128xf32>
    %408 = arith.index_cast %405 : i32 to index
    %c0_116 = arith.constant 0 : index
    %409 = vector.load %arg16[%408, %c0_116] : memref<64x128xf32, #tpu.memory_space<vmem>>, vector<8x128xf32>
    %410 = tpu.concatenate %397, %400 in 1 : vector<8x32xf32>, vector<8x32xf32> -> vector<8x64xf32>
    %411 = arith.truncf %410 : vector<8x64xf32> to vector<8x64xbf16>
    %412 = tpu.concatenate %407, %409 in 1 : vector<8x128xf32>, vector<8x128xf32> -> vector<8x256xf32>
    %cst_117 = arith.constant dense<0.000000e+00> : vector<8x256xf32>
    %413 = tpu.matmul %411, %361, %cst_117 {dimension_numbers = #tpu.dot_dimension_numbers<[1], [0], [0], [1], [0, 0, 1, 1], [], []>} : vector<8x64xbf16>, vector<64x256xbf16>, vector<8x256xf32> -> vector<8x256xf32>
    %414 = arith.addf %412, %413 : vector<8x256xf32>
    %415 = arith.negf %414 : vector<8x256xf32>
    %416 = math.exp %415 : vector<8x256xf32>
    %cst_118 = arith.constant 1.000000e+00 : f32
    %417 = vector.broadcast %cst_118 : f32 to vector<8x256xf32>
    %418 = arith.addf %417, %416 : vector<8x256xf32>
    %419 = arith.divf %417, %418 : vector<8x256xf32>
    %420 = math.tanh %414 : vector<8x256xf32>
    %421 = vector.extract_strided_slice %419 {offsets = [0, 32], sizes = [8, 32], strides = [1, 1]} : vector<8x256xf32> to vector<8x32xf32>
    %422 = arith.mulf %421, %388 : vector<8x32xf32>
    %423 = vector.extract_strided_slice %419 {offsets = [0, 0], sizes = [8, 32], strides = [1, 1]} : vector<8x256xf32> to vector<8x32xf32>
    %424 = vector.extract_strided_slice %420 {offsets = [0, 64], sizes = [8, 32], strides = [1, 1]} : vector<8x256xf32> to vector<8x32xf32>
    %425 = arith.mulf %423, %424 : vector<8x32xf32>
    %426 = arith.addf %422, %425 : vector<8x32xf32>
    %427 = vector.extract_strided_slice %419 {offsets = [0, 160], sizes = [8, 32], strides = [1, 1]} : vector<8x256xf32> to vector<8x32xf32>
    %428 = arith.mulf %427, %394 : vector<8x32xf32>
    %429 = vector.extract_strided_slice %419 {offsets = [0, 128], sizes = [8, 32], strides = [1, 1]} : vector<8x256xf32> to vector<8x32xf32>
    %430 = vector.extract_strided_slice %420 {offsets = [0, 192], sizes = [8, 32], strides = [1, 1]} : vector<8x256xf32> to vector<8x32xf32>
    %431 = arith.mulf %429, %430 : vector<8x32xf32>
    %432 = arith.addf %428, %431 : vector<8x32xf32>
    %433 = vector.extract_strided_slice %419 {offsets = [0, 96], sizes = [8, 32], strides = [1, 1]} : vector<8x256xf32> to vector<8x32xf32>
    %434 = math.tanh %426 : vector<8x32xf32>
    %435 = arith.mulf %433, %434 : vector<8x32xf32>
    %436 = vector.extract_strided_slice %419 {offsets = [0, 224], sizes = [8, 32], strides = [1, 1]} : vector<8x256xf32> to vector<8x32xf32>
    %437 = math.tanh %432 : vector<8x32xf32>
    %438 = arith.mulf %436, %437 : vector<8x32xf32>
    %c2_i32_119 = arith.constant 2 : i32
    %c8_i32_120 = arith.constant 8 : i32
    %439 = arith.muli %c2_i32_119, %c8_i32_120 : i32
    %440 = tpu.assume_multiple %439, 8 : i32
    %c7_i32_121 = arith.constant 7 : i32
    %441 = arith.subi %c7_i32_121, %c2_i32_119 : i32
    %c8_i32_122 = arith.constant 8 : i32
    %442 = arith.muli %441, %c8_i32_122 : i32
    %443 = tpu.assume_multiple %442, 8 : i32
    %444 = arith.index_cast %440 : i32 to index
    %c0_123 = arith.constant 0 : index
    %445 = vector.load %arg15[%444, %c0_123] : memref<64x128xf32, #tpu.memory_space<vmem>>, vector<8x128xf32>
    %446 = arith.index_cast %443 : i32 to index
    %c0_124 = arith.constant 0 : index
    %447 = vector.load %arg16[%446, %c0_124] : memref<64x128xf32, #tpu.memory_space<vmem>>, vector<8x128xf32>
    %448 = tpu.concatenate %435, %438 in 1 : vector<8x32xf32>, vector<8x32xf32> -> vector<8x64xf32>
    %449 = arith.truncf %448 : vector<8x64xf32> to vector<8x64xbf16>
    %450 = tpu.concatenate %445, %447 in 1 : vector<8x128xf32>, vector<8x128xf32> -> vector<8x256xf32>
    %cst_125 = arith.constant dense<0.000000e+00> : vector<8x256xf32>
    %451 = tpu.matmul %449, %361, %cst_125 {dimension_numbers = #tpu.dot_dimension_numbers<[1], [0], [0], [1], [0, 0, 1, 1], [], []>} : vector<8x64xbf16>, vector<64x256xbf16>, vector<8x256xf32> -> vector<8x256xf32>
    %452 = arith.addf %450, %451 : vector<8x256xf32>
    %453 = arith.negf %452 : vector<8x256xf32>
    %454 = math.exp %453 : vector<8x256xf32>
    %cst_126 = arith.constant 1.000000e+00 : f32
    %455 = vector.broadcast %cst_126 : f32 to vector<8x256xf32>
    %456 = arith.addf %455, %454 : vector<8x256xf32>
    %457 = arith.divf %455, %456 : vector<8x256xf32>
    %458 = math.tanh %452 : vector<8x256xf32>
    %459 = vector.extract_strided_slice %457 {offsets = [0, 32], sizes = [8, 32], strides = [1, 1]} : vector<8x256xf32> to vector<8x32xf32>
    %460 = arith.mulf %459, %426 : vector<8x32xf32>
    %461 = vector.extract_strided_slice %457 {offsets = [0, 0], sizes = [8, 32], strides = [1, 1]} : vector<8x256xf32> to vector<8x32xf32>
    %462 = vector.extract_strided_slice %458 {offsets = [0, 64], sizes = [8, 32], strides = [1, 1]} : vector<8x256xf32> to vector<8x32xf32>
    %463 = arith.mulf %461, %462 : vector<8x32xf32>
    %464 = arith.addf %460, %463 : vector<8x32xf32>
    %465 = vector.extract_strided_slice %457 {offsets = [0, 160], sizes = [8, 32], strides = [1, 1]} : vector<8x256xf32> to vector<8x32xf32>
    %466 = arith.mulf %465, %432 : vector<8x32xf32>
    %467 = vector.extract_strided_slice %457 {offsets = [0, 128], sizes = [8, 32], strides = [1, 1]} : vector<8x256xf32> to vector<8x32xf32>
    %468 = vector.extract_strided_slice %458 {offsets = [0, 192], sizes = [8, 32], strides = [1, 1]} : vector<8x256xf32> to vector<8x32xf32>
    %469 = arith.mulf %467, %468 : vector<8x32xf32>
    %470 = arith.addf %466, %469 : vector<8x32xf32>
    %471 = vector.extract_strided_slice %457 {offsets = [0, 96], sizes = [8, 32], strides = [1, 1]} : vector<8x256xf32> to vector<8x32xf32>
    %472 = math.tanh %464 : vector<8x32xf32>
    %473 = arith.mulf %471, %472 : vector<8x32xf32>
    %474 = vector.extract_strided_slice %457 {offsets = [0, 224], sizes = [8, 32], strides = [1, 1]} : vector<8x256xf32> to vector<8x32xf32>
    %475 = math.tanh %470 : vector<8x32xf32>
    %476 = arith.mulf %474, %475 : vector<8x32xf32>
    %c3_i32_127 = arith.constant 3 : i32
    %c8_i32_128 = arith.constant 8 : i32
    %477 = arith.muli %c3_i32_127, %c8_i32_128 : i32
    %478 = tpu.assume_multiple %477, 8 : i32
    %c7_i32_129 = arith.constant 7 : i32
    %479 = arith.subi %c7_i32_129, %c3_i32_127 : i32
    %c8_i32_130 = arith.constant 8 : i32
    %480 = arith.muli %479, %c8_i32_130 : i32
    %481 = tpu.assume_multiple %480, 8 : i32
    %482 = arith.index_cast %478 : i32 to index
    %c0_131 = arith.constant 0 : index
    %483 = vector.load %arg15[%482, %c0_131] : memref<64x128xf32, #tpu.memory_space<vmem>>, vector<8x128xf32>
    %484 = arith.index_cast %481 : i32 to index
    %c0_132 = arith.constant 0 : index
    %485 = vector.load %arg16[%484, %c0_132] : memref<64x128xf32, #tpu.memory_space<vmem>>, vector<8x128xf32>
    %486 = tpu.concatenate %473, %476 in 1 : vector<8x32xf32>, vector<8x32xf32> -> vector<8x64xf32>
    %487 = arith.truncf %486 : vector<8x64xf32> to vector<8x64xbf16>
    %488 = tpu.concatenate %483, %485 in 1 : vector<8x128xf32>, vector<8x128xf32> -> vector<8x256xf32>
    %cst_133 = arith.constant dense<0.000000e+00> : vector<8x256xf32>
    %489 = tpu.matmul %487, %361, %cst_133 {dimension_numbers = #tpu.dot_dimension_numbers<[1], [0], [0], [1], [0, 0, 1, 1], [], []>} : vector<8x64xbf16>, vector<64x256xbf16>, vector<8x256xf32> -> vector<8x256xf32>
    %490 = arith.addf %488, %489 : vector<8x256xf32>
    %491 = arith.negf %490 : vector<8x256xf32>
    %492 = math.exp %491 : vector<8x256xf32>
    %cst_134 = arith.constant 1.000000e+00 : f32
    %493 = vector.broadcast %cst_134 : f32 to vector<8x256xf32>
    %494 = arith.addf %493, %492 : vector<8x256xf32>
    %495 = arith.divf %493, %494 : vector<8x256xf32>
    %496 = math.tanh %490 : vector<8x256xf32>
    %497 = vector.extract_strided_slice %495 {offsets = [0, 32], sizes = [8, 32], strides = [1, 1]} : vector<8x256xf32> to vector<8x32xf32>
    %498 = arith.mulf %497, %464 : vector<8x32xf32>
    %499 = vector.extract_strided_slice %495 {offsets = [0, 0], sizes = [8, 32], strides = [1, 1]} : vector<8x256xf32> to vector<8x32xf32>
    %500 = vector.extract_strided_slice %496 {offsets = [0, 64], sizes = [8, 32], strides = [1, 1]} : vector<8x256xf32> to vector<8x32xf32>
    %501 = arith.mulf %499, %500 : vector<8x32xf32>
    %502 = arith.addf %498, %501 : vector<8x32xf32>
    %503 = vector.extract_strided_slice %495 {offsets = [0, 160], sizes = [8, 32], strides = [1, 1]} : vector<8x256xf32> to vector<8x32xf32>
    %504 = arith.mulf %503, %470 : vector<8x32xf32>
    %505 = vector.extract_strided_slice %495 {offsets = [0, 128], sizes = [8, 32], strides = [1, 1]} : vector<8x256xf32> to vector<8x32xf32>
    %506 = vector.extract_strided_slice %496 {offsets = [0, 192], sizes = [8, 32], strides = [1, 1]} : vector<8x256xf32> to vector<8x32xf32>
    %507 = arith.mulf %505, %506 : vector<8x32xf32>
    %508 = arith.addf %504, %507 : vector<8x32xf32>
    %509 = vector.extract_strided_slice %495 {offsets = [0, 96], sizes = [8, 32], strides = [1, 1]} : vector<8x256xf32> to vector<8x32xf32>
    %510 = math.tanh %502 : vector<8x32xf32>
    %511 = arith.mulf %509, %510 : vector<8x32xf32>
    %512 = vector.extract_strided_slice %495 {offsets = [0, 224], sizes = [8, 32], strides = [1, 1]} : vector<8x256xf32> to vector<8x32xf32>
    %513 = math.tanh %508 : vector<8x32xf32>
    %514 = arith.mulf %512, %513 : vector<8x32xf32>
    %c4_i32_135 = arith.constant 4 : i32
    %c8_i32_136 = arith.constant 8 : i32
    %515 = arith.muli %c4_i32_135, %c8_i32_136 : i32
    %516 = tpu.assume_multiple %515, 8 : i32
    %c7_i32_137 = arith.constant 7 : i32
    %517 = arith.subi %c7_i32_137, %c4_i32_135 : i32
    %c8_i32_138 = arith.constant 8 : i32
    %518 = arith.muli %517, %c8_i32_138 : i32
    %519 = tpu.assume_multiple %518, 8 : i32
    %520 = arith.index_cast %516 : i32 to index
    %c0_139 = arith.constant 0 : index
    %521 = vector.load %arg15[%520, %c0_139] : memref<64x128xf32, #tpu.memory_space<vmem>>, vector<8x128xf32>
    %522 = arith.index_cast %519 : i32 to index
    %c0_140 = arith.constant 0 : index
    %523 = vector.load %arg16[%522, %c0_140] : memref<64x128xf32, #tpu.memory_space<vmem>>, vector<8x128xf32>
    %524 = tpu.concatenate %511, %514 in 1 : vector<8x32xf32>, vector<8x32xf32> -> vector<8x64xf32>
    %525 = arith.truncf %524 : vector<8x64xf32> to vector<8x64xbf16>
    %526 = tpu.concatenate %521, %523 in 1 : vector<8x128xf32>, vector<8x128xf32> -> vector<8x256xf32>
    %cst_141 = arith.constant dense<0.000000e+00> : vector<8x256xf32>
    %527 = tpu.matmul %525, %361, %cst_141 {dimension_numbers = #tpu.dot_dimension_numbers<[1], [0], [0], [1], [0, 0, 1, 1], [], []>} : vector<8x64xbf16>, vector<64x256xbf16>, vector<8x256xf32> -> vector<8x256xf32>
    %528 = arith.addf %526, %527 : vector<8x256xf32>
    %529 = arith.negf %528 : vector<8x256xf32>
    %530 = math.exp %529 : vector<8x256xf32>
    %cst_142 = arith.constant 1.000000e+00 : f32
    %531 = vector.broadcast %cst_142 : f32 to vector<8x256xf32>
    %532 = arith.addf %531, %530 : vector<8x256xf32>
    %533 = arith.divf %531, %532 : vector<8x256xf32>
    %534 = math.tanh %528 : vector<8x256xf32>
    %535 = vector.extract_strided_slice %533 {offsets = [0, 32], sizes = [8, 32], strides = [1, 1]} : vector<8x256xf32> to vector<8x32xf32>
    %536 = arith.mulf %535, %502 : vector<8x32xf32>
    %537 = vector.extract_strided_slice %533 {offsets = [0, 0], sizes = [8, 32], strides = [1, 1]} : vector<8x256xf32> to vector<8x32xf32>
    %538 = vector.extract_strided_slice %534 {offsets = [0, 64], sizes = [8, 32], strides = [1, 1]} : vector<8x256xf32> to vector<8x32xf32>
    %539 = arith.mulf %537, %538 : vector<8x32xf32>
    %540 = arith.addf %536, %539 : vector<8x32xf32>
    %541 = vector.extract_strided_slice %533 {offsets = [0, 160], sizes = [8, 32], strides = [1, 1]} : vector<8x256xf32> to vector<8x32xf32>
    %542 = arith.mulf %541, %508 : vector<8x32xf32>
    %543 = vector.extract_strided_slice %533 {offsets = [0, 128], sizes = [8, 32], strides = [1, 1]} : vector<8x256xf32> to vector<8x32xf32>
    %544 = vector.extract_strided_slice %534 {offsets = [0, 192], sizes = [8, 32], strides = [1, 1]} : vector<8x256xf32> to vector<8x32xf32>
    %545 = arith.mulf %543, %544 : vector<8x32xf32>
    %546 = arith.addf %542, %545 : vector<8x32xf32>
    %547 = vector.extract_strided_slice %533 {offsets = [0, 96], sizes = [8, 32], strides = [1, 1]} : vector<8x256xf32> to vector<8x32xf32>
    %548 = math.tanh %540 : vector<8x32xf32>
    %549 = arith.mulf %547, %548 : vector<8x32xf32>
    %550 = vector.extract_strided_slice %533 {offsets = [0, 224], sizes = [8, 32], strides = [1, 1]} : vector<8x256xf32> to vector<8x32xf32>
    %551 = math.tanh %546 : vector<8x32xf32>
    %552 = arith.mulf %550, %551 : vector<8x32xf32>
    %c5_i32_143 = arith.constant 5 : i32
    %c8_i32_144 = arith.constant 8 : i32
    %553 = arith.muli %c5_i32_143, %c8_i32_144 : i32
    %554 = tpu.assume_multiple %553, 8 : i32
    %c7_i32_145 = arith.constant 7 : i32
    %555 = arith.subi %c7_i32_145, %c5_i32_143 : i32
    %c8_i32_146 = arith.constant 8 : i32
    %556 = arith.muli %555, %c8_i32_146 : i32
    %557 = tpu.assume_multiple %556, 8 : i32
    %558 = arith.index_cast %554 : i32 to index
    %c0_147 = arith.constant 0 : index
    %559 = vector.load %arg15[%558, %c0_147] : memref<64x128xf32, #tpu.memory_space<vmem>>, vector<8x128xf32>
    %560 = arith.index_cast %557 : i32 to index
    %c0_148 = arith.constant 0 : index
    %561 = vector.load %arg16[%560, %c0_148] : memref<64x128xf32, #tpu.memory_space<vmem>>, vector<8x128xf32>
    %562 = tpu.concatenate %549, %552 in 1 : vector<8x32xf32>, vector<8x32xf32> -> vector<8x64xf32>
    %563 = arith.truncf %562 : vector<8x64xf32> to vector<8x64xbf16>
    %564 = tpu.concatenate %559, %561 in 1 : vector<8x128xf32>, vector<8x128xf32> -> vector<8x256xf32>
    %cst_149 = arith.constant dense<0.000000e+00> : vector<8x256xf32>
    %565 = tpu.matmul %563, %361, %cst_149 {dimension_numbers = #tpu.dot_dimension_numbers<[1], [0], [0], [1], [0, 0, 1, 1], [], []>} : vector<8x64xbf16>, vector<64x256xbf16>, vector<8x256xf32> -> vector<8x256xf32>
    %566 = arith.addf %564, %565 : vector<8x256xf32>
    %567 = arith.negf %566 : vector<8x256xf32>
    %568 = math.exp %567 : vector<8x256xf32>
    %cst_150 = arith.constant 1.000000e+00 : f32
    %569 = vector.broadcast %cst_150 : f32 to vector<8x256xf32>
    %570 = arith.addf %569, %568 : vector<8x256xf32>
    %571 = arith.divf %569, %570 : vector<8x256xf32>
    %572 = math.tanh %566 : vector<8x256xf32>
    %573 = vector.extract_strided_slice %571 {offsets = [0, 32], sizes = [8, 32], strides = [1, 1]} : vector<8x256xf32> to vector<8x32xf32>
    %574 = arith.mulf %573, %540 : vector<8x32xf32>
    %575 = vector.extract_strided_slice %571 {offsets = [0, 0], sizes = [8, 32], strides = [1, 1]} : vector<8x256xf32> to vector<8x32xf32>
    %576 = vector.extract_strided_slice %572 {offsets = [0, 64], sizes = [8, 32], strides = [1, 1]} : vector<8x256xf32> to vector<8x32xf32>
    %577 = arith.mulf %575, %576 : vector<8x32xf32>
    %578 = arith.addf %574, %577 : vector<8x32xf32>
    %579 = vector.extract_strided_slice %571 {offsets = [0, 160], sizes = [8, 32], strides = [1, 1]} : vector<8x256xf32> to vector<8x32xf32>
    %580 = arith.mulf %579, %546 : vector<8x32xf32>
    %581 = vector.extract_strided_slice %571 {offsets = [0, 128], sizes = [8, 32], strides = [1, 1]} : vector<8x256xf32> to vector<8x32xf32>
    %582 = vector.extract_strided_slice %572 {offsets = [0, 192], sizes = [8, 32], strides = [1, 1]} : vector<8x256xf32> to vector<8x32xf32>
    %583 = arith.mulf %581, %582 : vector<8x32xf32>
    %584 = arith.addf %580, %583 : vector<8x32xf32>
    %585 = vector.extract_strided_slice %571 {offsets = [0, 96], sizes = [8, 32], strides = [1, 1]} : vector<8x256xf32> to vector<8x32xf32>
    %586 = math.tanh %578 : vector<8x32xf32>
    %587 = arith.mulf %585, %586 : vector<8x32xf32>
    %588 = vector.extract_strided_slice %571 {offsets = [0, 224], sizes = [8, 32], strides = [1, 1]} : vector<8x256xf32> to vector<8x32xf32>
    %589 = math.tanh %584 : vector<8x32xf32>
    %590 = arith.mulf %588, %589 : vector<8x32xf32>
    %c6_i32_151 = arith.constant 6 : i32
    %c8_i32_152 = arith.constant 8 : i32
    %591 = arith.muli %c6_i32_151, %c8_i32_152 : i32
    %592 = tpu.assume_multiple %591, 8 : i32
    %c7_i32_153 = arith.constant 7 : i32
    %593 = arith.subi %c7_i32_153, %c6_i32_151 : i32
    %c8_i32_154 = arith.constant 8 : i32
    %594 = arith.muli %593, %c8_i32_154 : i32
    %595 = tpu.assume_multiple %594, 8 : i32
    %596 = arith.index_cast %592 : i32 to index
    %c0_155 = arith.constant 0 : index
    %597 = vector.load %arg15[%596, %c0_155] : memref<64x128xf32, #tpu.memory_space<vmem>>, vector<8x128xf32>
    %598 = arith.index_cast %595 : i32 to index
    %c0_156 = arith.constant 0 : index
    %599 = vector.load %arg16[%598, %c0_156] : memref<64x128xf32, #tpu.memory_space<vmem>>, vector<8x128xf32>
    %600 = tpu.concatenate %587, %590 in 1 : vector<8x32xf32>, vector<8x32xf32> -> vector<8x64xf32>
    %601 = arith.truncf %600 : vector<8x64xf32> to vector<8x64xbf16>
    %602 = tpu.concatenate %597, %599 in 1 : vector<8x128xf32>, vector<8x128xf32> -> vector<8x256xf32>
    %cst_157 = arith.constant dense<0.000000e+00> : vector<8x256xf32>
    %603 = tpu.matmul %601, %361, %cst_157 {dimension_numbers = #tpu.dot_dimension_numbers<[1], [0], [0], [1], [0, 0, 1, 1], [], []>} : vector<8x64xbf16>, vector<64x256xbf16>, vector<8x256xf32> -> vector<8x256xf32>
    %604 = arith.addf %602, %603 : vector<8x256xf32>
    %605 = arith.negf %604 : vector<8x256xf32>
    %606 = math.exp %605 : vector<8x256xf32>
    %cst_158 = arith.constant 1.000000e+00 : f32
    %607 = vector.broadcast %cst_158 : f32 to vector<8x256xf32>
    %608 = arith.addf %607, %606 : vector<8x256xf32>
    %609 = arith.divf %607, %608 : vector<8x256xf32>
    %610 = math.tanh %604 : vector<8x256xf32>
    %611 = vector.extract_strided_slice %609 {offsets = [0, 32], sizes = [8, 32], strides = [1, 1]} : vector<8x256xf32> to vector<8x32xf32>
    %612 = arith.mulf %611, %578 : vector<8x32xf32>
    %613 = vector.extract_strided_slice %609 {offsets = [0, 0], sizes = [8, 32], strides = [1, 1]} : vector<8x256xf32> to vector<8x32xf32>
    %614 = vector.extract_strided_slice %610 {offsets = [0, 64], sizes = [8, 32], strides = [1, 1]} : vector<8x256xf32> to vector<8x32xf32>
    %615 = arith.mulf %613, %614 : vector<8x32xf32>
    %616 = arith.addf %612, %615 : vector<8x32xf32>
    %617 = vector.extract_strided_slice %609 {offsets = [0, 160], sizes = [8, 32], strides = [1, 1]} : vector<8x256xf32> to vector<8x32xf32>
    %618 = arith.mulf %617, %584 : vector<8x32xf32>
    %619 = vector.extract_strided_slice %609 {offsets = [0, 128], sizes = [8, 32], strides = [1, 1]} : vector<8x256xf32> to vector<8x32xf32>
    %620 = vector.extract_strided_slice %610 {offsets = [0, 192], sizes = [8, 32], strides = [1, 1]} : vector<8x256xf32> to vector<8x32xf32>
    %621 = arith.mulf %619, %620 : vector<8x32xf32>
    %622 = arith.addf %618, %621 : vector<8x32xf32>
    %623 = vector.extract_strided_slice %609 {offsets = [0, 96], sizes = [8, 32], strides = [1, 1]} : vector<8x256xf32> to vector<8x32xf32>
    %624 = math.tanh %616 : vector<8x32xf32>
    %625 = arith.mulf %623, %624 : vector<8x32xf32>
    %626 = vector.extract_strided_slice %609 {offsets = [0, 224], sizes = [8, 32], strides = [1, 1]} : vector<8x256xf32> to vector<8x32xf32>
    %627 = math.tanh %622 : vector<8x32xf32>
    %628 = arith.mulf %626, %627 : vector<8x32xf32>
    %c7_i32_159 = arith.constant 7 : i32
    %c8_i32_160 = arith.constant 8 : i32
    %629 = arith.muli %c7_i32_159, %c8_i32_160 : i32
    %630 = tpu.assume_multiple %629, 8 : i32
    %c7_i32_161 = arith.constant 7 : i32
    %631 = arith.subi %c7_i32_161, %c7_i32_159 : i32
    %c8_i32_162 = arith.constant 8 : i32
    %632 = arith.muli %631, %c8_i32_162 : i32
    %633 = tpu.assume_multiple %632, 8 : i32
    %634 = arith.index_cast %630 : i32 to index
    %c0_163 = arith.constant 0 : index
    %635 = vector.load %arg15[%634, %c0_163] : memref<64x128xf32, #tpu.memory_space<vmem>>, vector<8x128xf32>
    %636 = arith.index_cast %633 : i32 to index
    %c0_164 = arith.constant 0 : index
    %637 = vector.load %arg16[%636, %c0_164] : memref<64x128xf32, #tpu.memory_space<vmem>>, vector<8x128xf32>
    %638 = tpu.concatenate %625, %628 in 1 : vector<8x32xf32>, vector<8x32xf32> -> vector<8x64xf32>
    %639 = arith.truncf %638 : vector<8x64xf32> to vector<8x64xbf16>
    %640 = tpu.concatenate %635, %637 in 1 : vector<8x128xf32>, vector<8x128xf32> -> vector<8x256xf32>
    %cst_165 = arith.constant dense<0.000000e+00> : vector<8x256xf32>
    %641 = tpu.matmul %639, %361, %cst_165 {dimension_numbers = #tpu.dot_dimension_numbers<[1], [0], [0], [1], [0, 0, 1, 1], [], []>} : vector<8x64xbf16>, vector<64x256xbf16>, vector<8x256xf32> -> vector<8x256xf32>
    %642 = arith.addf %640, %641 : vector<8x256xf32>
    %643 = arith.negf %642 : vector<8x256xf32>
    %644 = math.exp %643 : vector<8x256xf32>
    %cst_166 = arith.constant 1.000000e+00 : f32
    %645 = vector.broadcast %cst_166 : f32 to vector<8x256xf32>
    %646 = arith.addf %645, %644 : vector<8x256xf32>
    %647 = arith.divf %645, %646 : vector<8x256xf32>
    %648 = math.tanh %642 : vector<8x256xf32>
    %649 = vector.extract_strided_slice %647 {offsets = [0, 32], sizes = [8, 32], strides = [1, 1]} : vector<8x256xf32> to vector<8x32xf32>
    %650 = arith.mulf %649, %616 : vector<8x32xf32>
    %651 = vector.extract_strided_slice %647 {offsets = [0, 0], sizes = [8, 32], strides = [1, 1]} : vector<8x256xf32> to vector<8x32xf32>
    %652 = vector.extract_strided_slice %648 {offsets = [0, 64], sizes = [8, 32], strides = [1, 1]} : vector<8x256xf32> to vector<8x32xf32>
    %653 = arith.mulf %651, %652 : vector<8x32xf32>
    %654 = arith.addf %650, %653 : vector<8x32xf32>
    %655 = vector.extract_strided_slice %647 {offsets = [0, 160], sizes = [8, 32], strides = [1, 1]} : vector<8x256xf32> to vector<8x32xf32>
    %656 = arith.mulf %655, %622 : vector<8x32xf32>
    %657 = vector.extract_strided_slice %647 {offsets = [0, 128], sizes = [8, 32], strides = [1, 1]} : vector<8x256xf32> to vector<8x32xf32>
    %658 = vector.extract_strided_slice %648 {offsets = [0, 192], sizes = [8, 32], strides = [1, 1]} : vector<8x256xf32> to vector<8x32xf32>
    %659 = arith.mulf %657, %658 : vector<8x32xf32>
    %660 = arith.addf %656, %659 : vector<8x32xf32>
    %661 = vector.extract_strided_slice %647 {offsets = [0, 96], sizes = [8, 32], strides = [1, 1]} : vector<8x256xf32> to vector<8x32xf32>
    %662 = math.tanh %654 : vector<8x32xf32>
    %663 = arith.mulf %661, %662 : vector<8x32xf32>
    %664 = vector.extract_strided_slice %647 {offsets = [0, 224], sizes = [8, 32], strides = [1, 1]} : vector<8x256xf32> to vector<8x32xf32>
    %665 = math.tanh %660 : vector<8x32xf32>
    %666 = arith.mulf %664, %665 : vector<8x32xf32>
    %c8_i32_167 = arith.constant 8 : i32
    %667 = tpu.concatenate %330, %336, %654, %660 in 1 : vector<8x32xf32>, vector<8x32xf32>, vector<8x32xf32>, vector<8x32xf32> -> vector<8x128xf32>
    %668 = arith.truncf %667 : vector<8x128xf32> to vector<8x128xbf16>
    %c0_168 = arith.constant 0 : index
    %c0_169 = arith.constant 0 : index
    %669 = vector.load %arg9[%c0_168, %c0_169] : memref<128x16xbf16, #tpu.memory_space<vmem>>, vector<128x16xbf16>
    %cst_170 = arith.constant dense<0.000000e+00> : vector<8x16xf32>
    %670 = tpu.matmul %668, %669, %cst_170 {dimension_numbers = #tpu.dot_dimension_numbers<[1], [0], [0], [1], [0, 0, 1, 1], [], []>} : vector<8x128xbf16>, vector<128x16xbf16>, vector<8x16xf32> -> vector<8x16xf32>
    %c0_171 = arith.constant 0 : index
    %c0_172 = arith.constant 0 : index
    %671 = vector.load %arg10[%c0_171, %c0_172] : memref<1x16xf32, #tpu.memory_space<vmem>>, vector<1x16xf32>
    %672 = vector.broadcast %671 : vector<1x16xf32> to vector<8x16xf32>
    %673 = arith.addf %670, %672 : vector<8x16xf32>
    %674 = vector.extract_strided_slice %673 {offsets = [0, 0], sizes = [8, 8], strides = [1, 1]} : vector<8x16xf32> to vector<8x8xf32>
    %675 = vector.extract_strided_slice %673 {offsets = [0, 8], sizes = [8, 8], strides = [1, 1]} : vector<8x16xf32> to vector<8x8xf32>
    %cst_173 = arith.constant 5.000000e-01 : f32
    %676 = vector.broadcast %cst_173 : f32 to vector<8x8xf32>
    %677 = arith.mulf %676, %675 : vector<8x8xf32>
    %678 = math.exp %677 : vector<8x8xf32>
    %c0_174 = arith.constant 0 : index
    %c0_175 = arith.constant 0 : index
    %679 = vector.load %arg13[%c0_174, %c0_175] : memref<8x8xf32, #tpu.memory_space<vmem>>, vector<8x8xf32>
    tpu.vector_store %arg13[%c0_174, %c0_175], %674 {strides = array<i32>} : memref<8x8xf32, #tpu.memory_space<vmem>>, vector<8x8xf32>,
    %c0_176 = arith.constant 0 : index
    %c0_177 = arith.constant 0 : index
    %680 = vector.load %arg14[%c0_176, %c0_177] : memref<8x8xf32, #tpu.memory_space<vmem>>, vector<8x8xf32>
    tpu.vector_store %arg14[%c0_176, %c0_177], %678 {strides = array<i32>} : memref<8x8xf32, #tpu.memory_space<vmem>>, vector<8x8xf32>,
    %c0_178 = arith.constant 0 : index
    %c0_179 = arith.constant 0 : index
    %681 = vector.load %arg11[%c0_178, %c0_179] : memref<8x8xf32, #tpu.memory_space<vmem>>, vector<8x8xf32>
    %682 = arith.mulf %681, %678 : vector<8x8xf32>
    %683 = arith.addf %682, %674 : vector<8x8xf32>
    %c0_180 = arith.constant 0 : index
    %c0_181 = arith.constant 0 : index
    %684 = vector.load %arg12[%c0_180, %c0_181] : memref<8x8xf32, #tpu.memory_space<vmem>>, vector<8x8xf32>
    tpu.vector_store %arg12[%c0_180, %c0_181], %683 {strides = array<i32>} : memref<8x8xf32, #tpu.memory_space<vmem>>, vector<8x8xf32>,
    return
  }
  func.func @transform_0(%arg0: i32) -> (i32, i32, i32) {
    %c0_i32 = arith.constant 0 : i32
    %c0_i32_0 = arith.constant 0 : i32
    %c0_i32_1 = arith.constant 0 : i32
    return %c0_i32, %arg0, %c0_i32_0 : i32, i32, i32
  }
  func.func @transform_1(%arg0: i32) -> (i32, i32) {
    %c0_i32 = arith.constant 0 : i32
    %c0_i32_0 = arith.constant 0 : i32
    %c0_i32_1 = arith.constant 0 : i32
    return %c0_i32, %c0_i32_0 : i32, i32
  }
  func.func @transform_2(%arg0: i32) -> (i32, i32) {
    %c0_i32 = arith.constant 0 : i32
    %c0_i32_0 = arith.constant 0 : i32
    %c0_i32_1 = arith.constant 0 : i32
    return %c0_i32, %c0_i32_0 : i32, i32
  }
  func.func @transform_3(%arg0: i32) -> (i32, i32) {
    %c0_i32 = arith.constant 0 : i32
    %c0_i32_0 = arith.constant 0 : i32
    %c0_i32_1 = arith.constant 0 : i32
    return %c0_i32, %c0_i32_0 : i32, i32
  }
  func.func @transform_4(%arg0: i32) -> (i32, i32) {
    %c0_i32 = arith.constant 0 : i32
    %c0_i32_0 = arith.constant 0 : i32
    %c0_i32_1 = arith.constant 0 : i32
    return %c0_i32, %c0_i32_0 : i32, i32
  }
  func.func @transform_5(%arg0: i32) -> (i32, i32) {
    %c0_i32 = arith.constant 0 : i32
    %c0_i32_0 = arith.constant 0 : i32
    %c0_i32_1 = arith.constant 0 : i32
    return %c0_i32, %c0_i32_0 : i32, i32
  }
  func.func @transform_6(%arg0: i32) -> (i32, i32) {
    %c0_i32 = arith.constant 0 : i32
    %c0_i32_0 = arith.constant 0 : i32
    %c0_i32_1 = arith.constant 0 : i32
    return %c0_i32, %c0_i32_0 : i32, i32
  }
  func.func @transform_7(%arg0: i32) -> (i32, i32) {
    %c0_i32 = arith.constant 0 : i32
    %c0_i32_0 = arith.constant 0 : i32
    %c0_i32_1 = arith.constant 0 : i32
    return %c0_i32, %c0_i32_0 : i32, i32
  }
  func.func @transform_8(%arg0: i32) -> (i32, i32) {
    %c0_i32 = arith.constant 0 : i32
    %c0_i32_0 = arith.constant 0 : i32
    %c0_i32_1 = arith.constant 0 : i32
    return %c0_i32, %c0_i32_0 : i32, i32
  }
  func.func @transform_9(%arg0: i32) -> (i32, i32) {
    %c0_i32 = arith.constant 0 : i32
    %c0_i32_0 = arith.constant 0 : i32
    %c0_i32_1 = arith.constant 0 : i32
    return %c0_i32, %c0_i32_0 : i32, i32
  }
  func.func @transform_10(%arg0: i32) -> (i32, i32) {
    %c0_i32 = arith.constant 0 : i32
    %c0_i32_0 = arith.constant 0 : i32
    return %arg0, %c0_i32 : i32, i32
  }
  func.func @transform_11(%arg0: i32) -> (i32, i32) {
    %c0_i32 = arith.constant 0 : i32
    %c0_i32_0 = arith.constant 0 : i32
    return %arg0, %c0_i32 : i32, i32
  }
  func.func @transform_12(%arg0: i32) -> (i32, i32) {
    %c0_i32 = arith.constant 0 : i32
    %c0_i32_0 = arith.constant 0 : i32
    return %arg0, %c0_i32 : i32, i32
  }
  func.func @transform_13(%arg0: i32) -> (i32, i32) {
    %c0_i32 = arith.constant 0 : i32
    %c0_i32_0 = arith.constant 0 : i32
    return %arg0, %c0_i32 : i32, i32
  }
}

</mosaic_0001>

<llo_original>
// kernel: tpu_custom_call.1
$region0: #{tpu_custom_call.1}
  #allocation0 [shape = 'u32[]', space=smem, size = 0x4, offset = 0x4, fixed_abs, tag = 'smem constant byte address 0x4 - core index']
  #allocation1 [shape = 'u32[144,128]{1,0:T(1,128)}', space=vmem, size = 0x12000, scoped, tag = 'internal scratch']
  #allocation2 [shape = 'f32[64,128]{1,0:T(8,128)}', space=vmem, size = 0x8000, scoped, tag = 'scratch operand']
  #allocation3 [shape = 'f32[64,128]{1,0:T(8,128)}', space=vmem, size = 0x8000, scoped, tag = 'scratch operand']
  #allocation4 [shape = 'f32[64,64]{1,0:T(8,128)}', space=vmem, size = 0x8000, scoped, tag = 'scratch operand']
  %s0 = inlined_call_operand.vmem [shape: f32[8,8,13], index: 0, kind: input, shape index: {}]
  %s1 = inlined_call_operand.vmem [shape: bf16[13,128], index: 1, kind: input, shape index: {}]
  %s2 = inlined_call_operand.hbm [shape: bf16[13,128], index: 2, kind: input, shape index: {}]
  %s3 = inlined_call_operand.hbm [shape: bf16[64,256], index: 3, kind: input, shape index: {}]
  %s4 = inlined_call_operand.hbm [shape: bf16[64,128], index: 4, kind: input, shape index: {}]
  %s5 = inlined_call_operand.hbm [shape: bf16[64,128], index: 5, kind: input, shape index: {}]
  %s6 = inlined_call_operand.hbm [shape: bf16[64,256], index: 6, kind: input, shape index: {}]
  %s7 = inlined_call_operand.vmem [shape: f32[1,256], index: 7, kind: input, shape index: {}]
  %s8 = inlined_call_operand.vmem [shape: bf16[128,16], index: 8, kind: input, shape index: {}]
  %s9 = inlined_call_operand.vmem [shape: f32[1,16], index: 9, kind: input, shape index: {}]
  %s10 = inlined_call_operand.vmem [shape: f32[8,8], index: 10, kind: input, shape index: {}]
  %s11 = inlined_call_operand.hbm [shape: f32[8,8], index: 11, kind: output, shape index: {0}]
  %s12 = inlined_call_operand.hbm [shape: f32[8,8], index: 12, kind: output, shape index: {1}]
  %s13 = inlined_call_operand.hbm [shape: f32[8,8], index: 13, kind: output, shape index: {2}]
  %14 = xla_tuple %s11, %s12, %s13
  %s15 = sld [smem:[#allocation0]]
  $region90: #{tpu_custom_call.1} parent=0
    _
  %s17 = ssub.s32 1, %s15
  %s18 = scalar_select 0, %s17, %s15
  $region1: #{tpu_custom_call.1} parent=0
    #allocation5 [shape = 'u8[4096]{0}', space=vmem, size = 0x1000, scoped, tag = 'input window, operand 2, single buffered']
    #allocation6 [shape = 's32[1]{0}', space=sflag, size = 0x4, scoped, tag = 'scoped memory for tpu_custom_call.1']
    #allocation7 [shape = 's32[1]{0}', space=sflag, size = 0x4, scoped, tag = 'scoped memory for tpu_custom_call.1']
    #allocation8 [shape = 'u8[32768]{0}', space=vmem, size = 0x8000, scoped, tag = 'input window, operand 3, single buffered']
    #allocation9 [shape = 's32[1]{0}', space=sflag, size = 0x4, scoped, tag = 'scoped memory for tpu_custom_call.1']
    #allocation10 [shape = 'u8[16384]{0}', space=vmem, size = 0x4000, scoped, tag = 'input window, operand 4, single buffered']
    #allocation11 [shape = 'u8[16384]{0}', space=vmem, size = 0x4000, scoped, tag = 'input window, operand 5, single buffered']
    #allocation12 [shape = 's32[1]{0}', space=sflag, size = 0x4, scoped, tag = 'scoped memory for tpu_custom_call.1']
    #allocation13 [shape = 'u8[32768]{0}', space=vmem, size = 0x8000, scoped, tag = 'input window, operand 6, single buffered']
    #allocation14 [shape = 'u8[4096]{0}', space=vmem, size = 0x1000, scoped, tag = 'output window, operand 0, single buffered']
    #allocation15 [shape = 'u8[4096]{0}', space=vmem, size = 0x1000, scoped, tag = 'output window, operand 1, single buffered']
    #allocation16 [shape = 's32[1]{0}', space=sflag, size = 0x4, scoped, tag = 'scoped memory for tpu_custom_call.1']
    #allocation17 [shape = 'u8[4096]{0}', space=vmem, size = 0x1000, scoped, tag = 'output window, operand 2, single buffered']
    %19 = vsyncpa [#allocation6], 0
    %20 = vsyncpa [#allocation9], 0
    %21 = vsyncpa [#allocation12], 0
    %22 = vsyncpa [#allocation7], 0
    %23 = vsyncpa [#allocation16], 0
    // Predicated region
    $region2: #{tpu_custom_call.1} parent=1 // pred_check
      _
    $region3: #{tpu_custom_call.1} parent=1 // pred_check_branch
      %25 = sbr.rel (0) target = $region5
    $region4: #{tpu_custom_call.1} parent=1 // pred_region
      _
    $region5: #{tpu_custom_call.1} parent=1 // pred_fallthru
      _
    // Predicated region
    $region6: #{tpu_custom_call.1} parent=1 // pred_check
      _
    $region7: #{tpu_custom_call.1} parent=1 // pred_check_branch
      %27 = sbr.rel (0) target = $region9
    $region8: #{tpu_custom_call.1} parent=1 // pred_region
      _
    $region9: #{tpu_custom_call.1} parent=1 // pred_fallthru
      _
    // Predicated region
    $region10: #{tpu_custom_call.1} parent=1 // pred_check
      _
    $region11: #{tpu_custom_call.1} parent=1 // pred_check_branch
      %29 = sbr.rel (0) target = $region13
    $region12: #{tpu_custom_call.1} parent=1 // pred_region
      %s31 = ssub.s32 128, 128
      %32 = vsyncadd [#allocation6], %s31
      %s33 = sshll.u32 [#allocation5], 4
      %s34 = int_to_ptr.vmem [resolvable:$true] %s33
      %39 = dma.hbm_to_vmem [thread:$0]  %s2, 128, %s34, [#allocation6], 64, 64, 4
    $region13: #{tpu_custom_call.1} parent=1 // pred_fallthru
      _
    // Predicated region
    $region14: #{tpu_custom_call.1} parent=1 // pred_check
      _
    $region15: #{tpu_custom_call.1} parent=1 // pred_check_branch
      %41 = sbr.rel (0) target = $region17
    $region16: #{tpu_custom_call.1} parent=1 // pred_region
      %s43 = ssub.s32 1024, 1024
      %44 = vsyncadd [#allocation9], %s43
      %s45 = sshll.u32 [#allocation8], 4
      %s46 = int_to_ptr.vmem [resolvable:$true] %s45
      %51 = dma.hbm_to_vmem [thread:$0]  %s3, 1024, %s46, [#allocation9], 128, 128, 8
    $region17: #{tpu_custom_call.1} parent=1 // pred_fallthru
      _
    // Predicated region
    $region18: #{tpu_custom_call.1} parent=1 // pred_check
      _
    $region19: #{tpu_custom_call.1} parent=1 // pred_check_branch
      %53 = sbr.rel (0) target = $region21
    $region20: #{tpu_custom_call.1} parent=1 // pred_region
      %s55 = ssub.s32 512, 512
      %56 = vsyncadd [#allocation9], %s55
      %s57 = sshll.u32 [#allocation10], 4
      %s58 = int_to_ptr.vmem [resolvable:$true] %s57
      %63 = dma.hbm_to_vmem [thread:$0]  %s4, 512, %s58, [#allocation9], 64, 64, 4
    $region21: #{tpu_custom_call.1} parent=1 // pred_fallthru
      _
    // Predicated region
    $region22: #{tpu_custom_call.1} parent=1 // pred_check
      _
    $region23: #{tpu_custom_call.1} parent=1 // pred_check_branch
      %65 = sbr.rel (0) target = $region25
    $region24: #{tpu_custom_call.1} parent=1 // pred_region
      %s67 = ssub.s32 512, 512
      %68 = vsyncadd [#allocation12], %s67
      %s69 = sshll.u32 [#allocation11], 4
      %s70 = int_to_ptr.vmem [resolvable:$true] %s69
      %75 = dma.hbm_to_vmem [thread:$0]  %s5, 512, %s70, [#allocation12], 64, 64, 4
    $region25: #{tpu_custom_call.1} parent=1 // pred_fallthru
      _
    // Predicated region
    $region26: #{tpu_custom_call.1} parent=1 // pred_check
      _
    $region27: #{tpu_custom_call.1} parent=1 // pred_check_branch
      %77 = sbr.rel (0) target = $region29
    $region28: #{tpu_custom_call.1} parent=1 // pred_region
      %s79 = ssub.s32 1024, 1024
      %80 = vsyncadd [#allocation12], %s79
      %s81 = sshll.u32 [#allocation13], 4
      %s82 = int_to_ptr.vmem [resolvable:$true] %s81
      %87 = dma.hbm_to_vmem [thread:$0]  %s6, 1024, %s82, [#allocation12], 128, 128, 8
    $region29: #{tpu_custom_call.1} parent=1 // pred_fallthru
      _
    // Predicated region
    $region30: #{tpu_custom_call.1} parent=1 // pred_check
      _
    $region31: #{tpu_custom_call.1} parent=1 // pred_check_branch
      %89 = sbr.rel (0) target = $region33
    $region32: #{tpu_custom_call.1} parent=1 // pred_region
      _
    $region33: #{tpu_custom_call.1} parent=1 // pred_fallthru
      _
    // Predicated region
    $region34: #{tpu_custom_call.1} parent=1 // pred_check
      _
    $region35: #{tpu_custom_call.1} parent=1 // pred_check_branch
      %91 = sbr.rel (0) target = $region37
    $region36: #{tpu_custom_call.1} parent=1 // pred_region
      _
    $region37: #{tpu_custom_call.1} parent=1 // pred_fallthru
      _
    // Predicated region
    $region38: #{tpu_custom_call.1} parent=1 // pred_check
      _
    $region39: #{tpu_custom_call.1} parent=1 // pred_check_branch
      %93 = sbr.rel (0) target = $region41
    $region40: #{tpu_custom_call.1} parent=1 // pred_region
      _
    $region41: #{tpu_custom_call.1} parent=1 // pred_fallthru
      _
    // Predicated region
    $region42: #{tpu_custom_call.1} parent=1 // pred_check
      _
    $region43: #{tpu_custom_call.1} parent=1 // pred_check_branch
      %95 = sbr.rel (0) target = $region45
    $region44: #{tpu_custom_call.1} parent=1 // pred_region
      _
    $region45: #{tpu_custom_call.1} parent=1 // pred_fallthru
      _
    // Predicated region
    $region46: #{tpu_custom_call.1} parent=1 // pred_check
      _
    $region47: #{tpu_custom_call.1} parent=1 // pred_check_branch
      %97 = sbr.rel (0) target = $region49
    $region48: #{tpu_custom_call.1} parent=1 // pred_region
      %98 = dma.done [#allocation6], 128
    $region49: #{tpu_custom_call.1} parent=1 // pred_fallthru
      _
    // Predicated region
    $region50: #{tpu_custom_call.1} parent=1 // pred_check
      _
    $region51: #{tpu_custom_call.1} parent=1 // pred_check_branch
      %100 = sbr.rel (0) target = $region53
    $region52: #{tpu_custom_call.1} parent=1 // pred_region
      %101 = dma.done [#allocation9], 1024
    $region53: #{tpu_custom_call.1} parent=1 // pred_fallthru
      _
    // Predicated region
    $region54: #{tpu_custom_call.1} parent=1 // pred_check
      _
    $region55: #{tpu_custom_call.1} parent=1 // pred_check_branch
      %103 = sbr.rel (0) target = $region57
    $region56: #{tpu_custom_call.1} parent=1 // pred_region
      %104 = dma.done [#allocation9], 512
    $region57: #{tpu_custom_call.1} parent=1 // pred_fallthru
      _
    // Predicated region
    $region58: #{tpu_custom_call.1} parent=1 // pred_check
      _
    $region59: #{tpu_custom_call.1} parent=1 // pred_check_branch
      %106 = sbr.rel (0) target = $region61
    $region60: #{tpu_custom_call.1} parent=1 // pred_region
      %107 = dma.done [#allocation12], 512
    $region61: #{tpu_custom_call.1} parent=1 // pred_fallthru
      _
    // Predicated region
    $region62: #{tpu_custom_call.1} parent=1 // pred_check
      _
    $region63: #{tpu_custom_call.1} parent=1 // pred_check_branch
      %109 = sbr.rel (0) target = $region65
    $region64: #{tpu_custom_call.1} parent=1 // pred_region
      %110 = dma.done [#allocation12], 1024
    $region65: #{tpu_custom_call.1} parent=1 // pred_fallthru
      _
    %v112 = vld [vmem:[%s0] sm:$0xff]
    %v113 = vld [vmem:[%s0 + $0x8] sm:$0xff]
    %v114 = vld [vmem:[%s0 + $0x10] sm:$0xff]
    %v115 = vld [vmem:[%s0 + $0x18] sm:$0xff]
    %v116 = vld [vmem:[%s0 + $0x20] sm:$0xff]
    %v117 = vld [vmem:[%s0 + $0x28] sm:$0xff]
    %v118 = vld [vmem:[%s0 + $0x30] sm:$0xff]
    %v119 = vld [vmem:[%s0 + $0x38] sm:$0xff]
    %v120 = vpack.c.bf16 %v113, %v112
    %v121 = vpack.c.bf16 %v115, %v114
    %v122 = vpack.c.bf16 %v117, %v116
    %v123 = vpack.c.bf16 %v119, %v118
    %v124 = vld [vmem:[%s1] sm:$0xf]
    %v125 = vld [vmem:[%s1 + $0x4] sm:$0x7]
    %v128 = vunpack.c.l.b16 %v124
    %v129 = vunpack.c.l.b16 %v125
    %v130 = vpack.c.b16 %v129, %v128
    %vm131 = vcmask 105472
    %v133 = vsel %vm131, %v120, 0
    %v136 = vsel %vm131, %v121, 0
    %v139 = vsel %vm131, %v122, 0
    %v142 = vsel %vm131, %v123, 0
    %vm144 = vcmask 1045504
    %vm145 = vcmask 1046528
    %v146 = vsel %vm144, 4294967295, 65535
    %v147 = vsel %vm145, %v146, 0
    %v149 = vand.u32 %v130, %v147
    %151 = vmatprep.subr.bf16.mxu0 0
    %152 = vmatpush1.bf16.msra.mxu0 %v149
    %153 = vmatprep.subr.bf16.mxu0 0
    %154 = vmatpush1.bf16.msra.mxu0 0
    %155 = vmatprep.subr.bf16.mxu0 0
    %156 = vmatpush1.bf16.msra.mxu0 0
    %157 = vmatprep.subr.bf16.mxu0 0
    %158 = vmatpush1.bf16.msra.mxu0 0
    %159 = vmatprep.subr.bf16.mxu0 0
    %160 = vmatpush1.bf16.msra.mxu0 0
    %161 = vmatprep.subr.bf16.mxu0 0
    %162 = vmatpush1.bf16.msra.mxu0 0
    %163 = vmatprep.subr.bf16.mxu0 0
    %164 = vmatpush1.bf16.msra.mxu0 0
    %165 = vmatprep.subr.bf16.mxu0 0
    %166 = vmatpush1.bf16.msra.mxu0 0
    %167 = vmatprep.subr.bf16.mxu0 0
    %168 = vmatpush1.bf16.msra.mxu0 0
    %169 = vmatprep.subr.bf16.mxu0 0
    %170 = vmatpush1.bf16.msra.mxu0 0
    %171 = vmatprep.subr.bf16.mxu0 0
    %172 = vmatpush1.bf16.msra.mxu0 0
    %173 = vmatprep.subr.bf16.mxu0 0
    %174 = vmatpush1.bf16.msra.mxu0 0
    %175 = vmatprep.subr.bf16.mxu0 0
    %176 = vmatpush1.bf16.msra.mxu0 0
    %177 = vmatprep.subr.bf16.mxu0 0
    %178 = vmatpush1.bf16.msra.mxu0 0
    %179 = vmatprep.subr.bf16.mxu0 0
    %180 = vmatpush1.bf16.msra.mxu0 0
    %181 = vmatprep.subr.bf16.mxu0 0
    %182 = vmatpush1.bf16.msra.mxu0 0
    %183 = vmatprep.mubr.bf16.mxu0 0
    %184 = vmatmul.mubr.bf16.gmra.mrb[0].mxu0 %v133
    %v185 = vpop.f32.mrb[0].mxu0
    %v186 = vadd.f32 0.0, %v185
    %v187 = vpop.f32.mrb[0].mxu0
    %v188 = vpop.f32.mrb[0].mxu0
    %v189 = vadd.f32 0.0, %v188
    %v190 = vpop.f32.mrb[0].mxu0
    %191 = vmatprep.mubr.bf16.mxu0 0
    %192 = vmatmul.mubr.bf16.gmra.mrb[0].mxu0 %v136
    %v193 = vpop.f32.mrb[0].mxu0
    %v194 = vadd.f32 0.0, %v193
    %v195 = vpop.f32.mrb[0].mxu0
    %v196 = vpop.f32.mrb[0].mxu0
    %v197 = vadd.f32 0.0, %v196
    %v198 = vpop.f32.mrb[0].mxu0
    %199 = vmatprep.mubr.bf16.mxu0 0
    %200 = vmatmul.mubr.bf16.gmra.mrb[0].mxu0 %v139
    %v201 = vpop.f32.mrb[0].mxu0
    %v202 = vadd.f32 0.0, %v201
    %v203 = vpop.f32.mrb[0].mxu0
    %v204 = vpop.f32.mrb[0].mxu0
    %v205 = vadd.f32 0.0, %v204
    %v206 = vpop.f32.mrb[0].mxu0
    %207 = vmatprep.mubr.bf16.mxu0 0
    %208 = vmatmul.mubr.bf16.gmra.mrb[0].mxu0 %v142
    %v209 = vpop.f32.mrb[0].mxu0
    %v210 = vadd.f32 0.0, %v209
    %v211 = vpop.f32.mrb[0].mxu0
    %v212 = vpop.f32.mrb[0].mxu0
    %v213 = vadd.f32 0.0, %v212
    %v214 = vpop.f32.mrb[0].mxu0
    %215 = vdwg.mxu0
    %216 = vst [vmem:[#allocation2] sm:$0xff] %v186
    %217 = vst [vmem:[#allocation2 + $0x8] sm:$0xff] %v189
    %218 = vst [vmem:[#allocation2 + $0x10] sm:$0xff] %v194
    %219 = vst [vmem:[#allocation2 + $0x18] sm:$0xff] %v197
    %220 = vst [vmem:[#allocation2 + $0x20] sm:$0xff] %v202
    %221 = vst [vmem:[#allocation2 + $0x28] sm:$0xff] %v205
    %222 = vst [vmem:[#allocation2 + $0x30] sm:$0xff] %v210
    %223 = vst [vmem:[#allocation2 + $0x38] sm:$0xff] %v213
    %v224 = vld [vmem:[#allocation5] sm:$0xf]
    %v225 = vld [vmem:[#allocation5 + $0x4] sm:$0x7]
    %v228 = vunpack.c.l.b16 %v224
    %v229 = vunpack.c.l.b16 %v225
    %v230 = vpack.c.b16 %v229, %v228
    %v232 = vand.u32 %v230, %v147
    %234 = vmatprep.subr.bf16.mxu0 0
    %235 = vmatpush1.bf16.msra.mxu0 %v232
    %236 = vmatprep.subr.bf16.mxu0 0
    %237 = vmatpush1.bf16.msra.mxu0 0
    %238 = vmatprep.subr.bf16.mxu0 0
    %239 = vmatpush1.bf16.msra.mxu0 0
    %240 = vmatprep.subr.bf16.mxu0 0
    %241 = vmatpush1.bf16.msra.mxu0 0
    %242 = vmatprep.subr.bf16.mxu0 0
    %243 = vmatpush1.bf16.msra.mxu0 0
    %244 = vmatprep.subr.bf16.mxu0 0
    %245 = vmatpush1.bf16.msra.mxu0 0
    %246 = vmatprep.subr.bf16.mxu0 0
    %247 = vmatpush1.bf16.msra.mxu0 0
    %248 = vmatprep.subr.bf16.mxu0 0
    %249 = vmatpush1.bf16.msra.mxu0 0
    %250 = vmatprep.subr.bf16.mxu0 0
    %251 = vmatpush1.bf16.msra.mxu0 0
    %252 = vmatprep.subr.bf16.mxu0 0
    %253 = vmatpush1.bf16.msra.mxu0 0
    %254 = vmatprep.subr.bf16.mxu0 0
    %255 = vmatpush1.bf16.msra.mxu0 0
    %256 = vmatprep.subr.bf16.mxu0 0
    %257 = vmatpush1.bf16.msra.mxu0 0
    %258 = vmatprep.subr.bf16.mxu0 0
    %259 = vmatpush1.bf16.msra.mxu0 0
    %260 = vmatprep.subr.bf16.mxu0 0
    %261 = vmatpush1.bf16.msra.mxu0 0
    %262 = vmatprep.subr.bf16.mxu0 0
    %263 = vmatpush1.bf16.msra.mxu0 0
    %264 = vmatprep.subr.bf16.mxu0 0
    %265 = vmatpush1.bf16.msra.mxu0 0
    %266 = vmatprep.mubr.bf16.mxu0 0
    %267 = vmatmul.mubr.bf16.gmra.mrb[0].mxu0 %v133
    %v268 = vpop.f32.mrb[0].mxu0
    %v269 = vadd.f32 0.0, %v268
    %v270 = vpop.f32.mrb[0].mxu0
    %v271 = vpop.f32.mrb[0].mxu0
    %v272 = vadd.f32 0.0, %v271
    %v273 = vpop.f32.mrb[0].mxu0
    %274 = vmatprep.mubr.bf16.mxu0 0
    %275 = vmatmul.mubr.bf16.gmra.mrb[0].mxu0 %v136
    %v276 = vpop.f32.mrb[0].mxu0
    %v277 = vadd.f32 0.0, %v276
    %v278 = vpop.f32.mrb[0].mxu0
    %v279 = vpop.f32.mrb[0].mxu0
    %v280 = vadd.f32 0.0, %v279
    %v281 = vpop.f32.mrb[0].mxu0
    %282 = vmatprep.mubr.bf16.mxu0 0
    %283 = vmatmul.mubr.bf16.gmra.mrb[0].mxu0 %v139
    %v284 = vpop.f32.mrb[0].mxu0
    %v285 = vadd.f32 0.0, %v284
    %v286 = vpop.f32.mrb[0].mxu0
    %v287 = vpop.f32.mrb[0].mxu0
    %v288 = vadd.f32 0.0, %v287
    %v289 = vpop.f32.mrb[0].mxu0
    %290 = vmatprep.mubr.bf16.mxu0 0
    %291 = vmatmul.mubr.bf16.gmra.mrb[0].mxu0 %v142
    %v292 = vpop.f32.mrb[0].mxu0
    %v293 = vadd.f32 0.0, %v292
    %v294 = vpop.f32.mrb[0].mxu0
    %v295 = vpop.f32.mrb[0].mxu0
    %v296 = vadd.f32 0.0, %v295
    %v297 = vpop.f32.mrb[0].mxu0
    %298 = vdwg.mxu0
    %299 = vst [vmem:[#allocation3] sm:$0xff] %v269
    %300 = vst [vmem:[#allocation3 + $0x8] sm:$0xff] %v272
    %301 = vst [vmem:[#allocation3 + $0x10] sm:$0xff] %v277
    %302 = vst [vmem:[#allocation3 + $0x18] sm:$0xff] %v280
    %303 = vst [vmem:[#allocation3 + $0x20] sm:$0xff] %v285
    %304 = vst [vmem:[#allocation3 + $0x28] sm:$0xff] %v288
    %305 = vst [vmem:[#allocation3 + $0x30] sm:$0xff] %v293
    %306 = vst [vmem:[#allocation3 + $0x38] sm:$0xff] %v296
    %v307 = vld [vmem:[#allocation8] sm:$0xff]
    %v308 = vld [vmem:[#allocation8 + $0x8] sm:$0xff]
    %v309 = vld [vmem:[#allocation8 + $0x10] sm:$0xff]
    %v310 = vld [vmem:[#allocation8 + $0x18] sm:$0xff]
    %v311 = vld [vmem:[#allocation8 + $0x20] sm:$0xff]
    %v312 = vld [vmem:[#allocation8 + $0x28] sm:$0xff]
    %v313 = vld [vmem:[#allocation8 + $0x30] sm:$0xff]
    %v314 = vld [vmem:[#allocation8 + $0x38] sm:$0xff]
    %v315 = vld [vmem:[#allocation2] sm:$0xff]
    %s316 = scalar_lea.vmem [#allocation3], 56
    %v317 = vld [vmem:[%s316] sm:$0xff]
    %v318 = vpack.c.bf16 0.0, 0.0
    %v327 = vunpack.c.l.b16 %v307
    %v328 = vunpack.c.h.b16 %v307
    %v329 = vunpack.c.l.b16 %v308
    %v330 = vunpack.c.h.b16 %v308
    %v331 = vunpack.c.l.b16 %v309
    %v332 = vunpack.c.h.b16 %v309
    %v333 = vunpack.c.l.b16 %v310
    %v334 = vunpack.c.h.b16 %v310
    %v335 = vunpack.c.l.b16 %v311
    %v336 = vunpack.c.h.b16 %v311
    %v337 = vunpack.c.l.b16 %v312
    %v338 = vunpack.c.h.b16 %v312
    %v339 = vunpack.c.l.b16 %v313
    %v340 = vunpack.c.h.b16 %v313
    %v341 = vunpack.c.l.b16 %v314
    %v342 = vunpack.c.h.b16 %v314
    %v343 = vpack.c.b16 %v329, %v327
    %v344 = vpack.c.b16 %v330, %v328
    %v345 = vpack.c.b16 %v333, %v331
    %v346 = vpack.c.b16 %v334, %v332
    %v347 = vpack.c.b16 %v337, %v335
    %v348 = vpack.c.b16 %v338, %v336
    %v349 = vpack.c.b16 %v341, %v339
    %v350 = vpack.c.b16 %v342, %v340
    %vm359 = vcmask 523264
    %v361 = vsel %vm359, %v318, 0
    %363 = vmatprep.subr.bf16.mxu0 %v344
    %364 = vmatpush1.bf16.msra.mxu0 %v343
    %365 = vmatprep.subr.bf16.mxu0 %v346
    %366 = vmatpush1.bf16.msra.mxu0 %v345
    %367 = vmatprep.subr.bf16.mxu0 %v348
    %368 = vmatpush1.bf16.msra.mxu0 %v347
    %369 = vmatprep.subr.bf16.mxu0 %v350
    %370 = vmatpush1.bf16.msra.mxu0 %v349
    %371 = vmatprep.subr.bf16.mxu0 0
    %372 = vmatpush1.bf16.msra.mxu0 0
    %373 = vmatprep.subr.bf16.mxu0 0
    %374 = vmatpush1.bf16.msra.mxu0 0
    %375 = vmatprep.subr.bf16.mxu0 0
    %376 = vmatpush1.bf16.msra.mxu0 0
    %377 = vmatprep.subr.bf16.mxu0 0
    %378 = vmatpush1.bf16.msra.mxu0 0
    %379 = vmatprep.subr.bf16.mxu0 0
    %380 = vmatpush1.bf16.msra.mxu0 0
    %381 = vmatprep.subr.bf16.mxu0 0
    %382 = vmatpush1.bf16.msra.mxu0 0
    %383 = vmatprep.subr.bf16.mxu0 0
    %384 = vmatpush1.bf16.msra.mxu0 0
    %385 = vmatprep.subr.bf16.mxu0 0
    %386 = vmatpush1.bf16.msra.mxu0 0
    %387 = vmatprep.subr.bf16.mxu0 0
    %388 = vmatpush1.bf16.msra.mxu0 0
    %389 = vmatprep.subr.bf16.mxu0 0
    %390 = vmatpush1.bf16.msra.mxu0 0
    %391 = vmatprep.subr.bf16.mxu0 0
    %392 = vmatpush1.bf16.msra.mxu0 0
    %393 = vmatprep.subr.bf16.mxu0 0
    %394 = vmatpush1.bf16.msra.mxu0 0
    %395 = vmatprep.mubr.bf16.mxu0 0
    %396 = vmatmul.mubr.bf16.gmra.mrb[0].mxu0 %v361
    %v397 = vpop.f32.mrb[0].mxu0
    %v398 = vadd.f32 0.0, %v397
    %v399 = vpop.f32.mrb[0].mxu0
    %v400 = vadd.f32 0.0, %v399
    %v401 = vpop.f32.mrb[0].mxu0
    %v402 = vpop.f32.mrb[0].mxu0
    %403 = vdwg.mxu0
    %v404 = vadd.f32 %v315, %v398
    %v405 = vadd.f32 %v317, %v400
    %v406 = vxor.u32 %v404, 2147483648
    %v407 = vxor.u32 %v405, 2147483648
    %v408 = vmul.f32 %v406, 1.442695
    %v409 = vpow.pop %v408
    %v410 = vmul.f32 %v407, 1.442695
    %v411 = vpow.pop %v410
    %v412 = vadd.f32 %v409, 1.0
    %v413 = vadd.f32 %v411, 1.0
    %v414 = vrcp.pop %v412
    %v415 = vmul.f32 1.0, %v414
    %v416 = vrcp.pop %v413
    %v417 = vmul.f32 1.0, %v416
    %v418 = vtanh.pop %v404
    %v419 = vtanh.pop %v405
    %v420 = vmul.f32 %v415, 0.0
    %422 = vrot.lane.b32.xlu0 %v418, 64
    %v423 = vpop.permute.xlu0 %422
    %v425 = vmul.f32 %v415, %v423
    %427 = vrot.lane.b32.xlu0 %v425, 32
    %v428 = vpop.permute.xlu0 %427
    %v430 = vadd.f32 %v420, %v428
    %v431 = vmul.f32 %v417, 0.0
    %433 = vrot.lane.b32.xlu0 %v419, 64
    %v434 = vpop.permute.xlu0 %433
    %v436 = vmul.f32 %v417, %v434
    %438 = vrot.lane.b32.xlu0 %v436, 32
    %v439 = vpop.permute.xlu0 %438
    %v441 = vadd.f32 %v431, %v439
    %v442 = vtanh.pop %v430
    %444 = vrot.lane.b32.xlu0 %v442, 64
    %v445 = vpop.permute.xlu0 %444
    %v447 = vmul.f32 %v415, %v445
    %v448 = vtanh.pop %v441
    %450 = vrot.lane.b32.xlu0 %v448, 64
    %v451 = vpop.permute.xlu0 %450
    %v453 = vmul.f32 %v417, %v451
    %455 = vrot.lane.b32.xlu0 %v447, 32
    %v456 = vpop.permute.xlu0 %455
    %vm458 = vcmask 261120
    %459 = vst.msk [vmem:[#allocation4] sm:$0xff] %vm458, %v456
    %461 = vrot.lane.b32.xlu0 %v453, 64
    %v462 = vpop.permute.xlu0 %461
    %s464 = scalar_lea.vmem [#allocation4], 56
    %vm465 = vcmask 523520
    %466 = vst.msk [vmem:[%s464] sm:$0xff] %vm465, %v462
    %s467 = scalar_lea.vmem [#allocation2], 8
    %v468 = vld [vmem:[%s467] sm:$0xff]
    %s469 = scalar_lea.vmem [#allocation3], 48
    %v470 = vld [vmem:[%s469] sm:$0xff]
    %v471 = vsel %vm458, %v456, %v462
    %v472 = vpack.c.bf16 %v471, %v471
    %v474 = vsel %vm359, %v472, 0
    %476 = vmatprep.subr.bf16.mxu0 %v344
    %477 = vmatpush1.bf16.msra.mxu0 %v343
    %478 = vmatprep.subr.bf16.mxu0 %v346
    %479 = vmatpush1.bf16.msra.mxu0 %v345
    %480 = vmatprep.subr.bf16.mxu0 %v348
    %481 = vmatpush1.bf16.msra.mxu0 %v347
    %482 = vmatprep.subr.bf16.mxu0 %v350
    %483 = vmatpush1.bf16.msra.mxu0 %v349
    %484 = vmatprep.subr.bf16.mxu0 0
    %485 = vmatpush1.bf16.msra.mxu0 0
    %486 = vmatprep.subr.bf16.mxu0 0
    %487 = vmatpush1.bf16.msra.mxu0 0
    %488 = vmatprep.subr.bf16.mxu0 0
    %489 = vmatpush1.bf16.msra.mxu0 0
    %490 = vmatprep.subr.bf16.mxu0 0
    %491 = vmatpush1.bf16.msra.mxu0 0
    %492 = vmatprep.subr.bf16.mxu0 0
    %493 = vmatpush1.bf16.msra.mxu0 0
    %494 = vmatprep.subr.bf16.mxu0 0
    %495 = vmatpush1.bf16.msra.mxu0 0
    %496 = vmatprep.subr.bf16.mxu0 0
    %497 = vmatpush1.bf16.msra.mxu0 0
    %498 = vmatprep.subr.bf16.mxu0 0
    %499 = vmatpush1.bf16.msra.mxu0 0
    %500 = vmatprep.subr.bf16.mxu0 0
    %501 = vmatpush1.bf16.msra.mxu0 0
    %502 = vmatprep.subr.bf16.mxu0 0
    %503 = vmatpush1.bf16.msra.mxu0 0
    %504 = vmatprep.subr.bf16.mxu0 0
    %505 = vmatpush1.bf16.msra.mxu0 0
    %506 = vmatprep.subr.bf16.mxu0 0
    %507 = vmatpush1.bf16.msra.mxu0 0
    %508 = vmatprep.mubr.bf16.mxu0 0
    %509 = vmatmul.mubr.bf16.gmra.mrb[0].mxu0 %v474
    %v510 = vpop.f32.mrb[0].mxu0
    %v511 = vadd.f32 0.0, %v510
    %v512 = vpop.f32.mrb[0].mxu0
    %v513 = vadd.f32 0.0, %v512
    %v514 = vpop.f32.mrb[0].mxu0
    %v515 = vpop.f32.mrb[0].mxu0
    %516 = vdwg.mxu0
    %v517 = vadd.f32 %v468, %v511
    %v518 = vadd.f32 %v470, %v513
    %v519 = vxor.u32 %v517, 2147483648
    %v520 = vxor.u32 %v518, 2147483648
    %v521 = vmul.f32 %v519, 1.442695
    %v522 = vpow.pop %v521
    %v523 = vmul.f32 %v520, 1.442695
    %v524 = vpow.pop %v523
    %v525 = vadd.f32 %v522, 1.0
    %v526 = vadd.f32 %v524, 1.0
    %v527 = vrcp.pop %v525
    %v528 = vmul.f32 1.0, %v527
    %v529 = vrcp.pop %v526
    %v530 = vmul.f32 1.0, %v529
    %v531 = vtanh.pop %v517
    %v532 = vtanh.pop %v518
    %v533 = vmul.f32 %v528, %v430
    %535 = vrot.lane.b32.xlu0 %v531, 64
    %v536 = vpop.permute.xlu0 %535
    %v538 = vmul.f32 %v528, %v536
    %540 = vrot.lane.b32.xlu0 %v538, 32
    %v541 = vpop.permute.xlu0 %540
    %v543 = vadd.f32 %v533, %v541
    %v544 = vmul.f32 %v530, %v441
    %546 = vrot.lane.b32.xlu0 %v532, 64
    %v547 = vpop.permute.xlu0 %546
    %v549 = vmul.f32 %v530, %v547
    %551 = vrot.lane.b32.xlu0 %v549, 32
    %v552 = vpop.permute.xlu0 %551
    %v554 = vadd.f32 %v544, %v552
    %v555 = vtanh.pop %v543
    %557 = vrot.lane.b32.xlu0 %v555, 64
    %v558 = vpop.permute.xlu0 %557
    %v560 = vmul.f32 %v528, %v558
    %v561 = vtanh.pop %v554
    %563 = vrot.lane.b32.xlu0 %v561, 64
    %v564 = vpop.permute.xlu0 %563
    %v566 = vmul.f32 %v530, %v564
    %568 = vrot.lane.b32.xlu0 %v560, 32
    %v569 = vpop.permute.xlu0 %568
    %s571 = scalar_lea.vmem [#allocation4], 8
    %572 = vst.msk [vmem:[%s571] sm:$0xff] %vm458, %v569
    %574 = vrot.lane.b32.xlu0 %v566, 64
    %v575 = vpop.permute.xlu0 %574
    %s577 = scalar_lea.vmem [#allocation4], 48
    %578 = vst.msk [vmem:[%s577] sm:$0xff] %vm465, %v575
    %s579 = scalar_lea.vmem [#allocation2], 16
    %v580 = vld [vmem:[%s579] sm:$0xff]
    %s581 = scalar_lea.vmem [#allocation3], 40
    %v582 = vld [vmem:[%s581] sm:$0xff]
    %v583 = vsel %vm458, %v569, %v575
    %v584 = vpack.c.bf16 %v583, %v583
    %v586 = vsel %vm359, %v584, 0
    %588 = vmatprep.subr.bf16.mxu0 %v344
    %589 = vmatpush1.bf16.msra.mxu0 %v343
    %590 = vmatprep.subr.bf16.mxu0 %v346
    %591 = vmatpush1.bf16.msra.mxu0 %v345
    %592 = vmatprep.subr.bf16.mxu0 %v348
    %593 = vmatpush1.bf16.msra.mxu0 %v347
    %594 = vmatprep.subr.bf16.mxu0 %v350
    %595 = vmatpush1.bf16.msra.mxu0 %v349
    %596 = vmatprep.subr.bf16.mxu0 0
    %597 = vmatpush1.bf16.msra.mxu0 0
    %598 = vmatprep.subr.bf16.mxu0 0
    %599 = vmatpush1.bf16.msra.mxu0 0
    %600 = vmatprep.subr.bf16.mxu0 0
    %601 = vmatpush1.bf16.msra.mxu0 0
    %602 = vmatprep.subr.bf16.mxu0 0
    %603 = vmatpush1.bf16.msra.mxu0 0
    %604 = vmatprep.subr.bf16.mxu0 0
    %605 = vmatpush1.bf16.msra.mxu0 0
    %606 = vmatprep.subr.bf16.mxu0 0
    %607 = vmatpush1.bf16.msra.mxu0 0
    %608 = vmatprep.subr.bf16.mxu0 0
    %609 = vmatpush1.bf16.msra.mxu0 0
    %610 = vmatprep.subr.bf16.mxu0 0
    %611 = vmatpush1.bf16.msra.mxu0 0
    %612 = vmatprep.subr.bf16.mxu0 0
    %613 = vmatpush1.bf16.msra.mxu0 0
    %614 = vmatprep.subr.bf16.mxu0 0
    %615 = vmatpush1.bf16.msra.mxu0 0
    %616 = vmatprep.subr.bf16.mxu0 0
    %617 = vmatpush1.bf16.msra.mxu0 0
    %618 = vmatprep.subr.bf16.mxu0 0
    %619 = vmatpush1.bf16.msra.mxu0 0
    %620 = vmatprep.mubr.bf16.mxu0 0
    %621 = vmatmul.mubr.bf16.gmra.mrb[0].mxu0 %v586
    %v622 = vpop.f32.mrb[0].mxu0
    %v623 = vadd.f32 0.0, %v622
    %v624 = vpop.f32.mrb[0].mxu0
    %v625 = vadd.f32 0.0, %v624
    %v626 = vpop.f32.mrb[0].mxu0
    %v627 = vpop.f32.mrb[0].mxu0
    %628 = vdwg.mxu0
    %v629 = vadd.f32 %v580, %v623
    %v630 = vadd.f32 %v582, %v625
    %v631 = vxor.u32 %v629, 2147483648
    %v632 = vxor.u32 %v630, 2147483648
    %v633 = vmul.f32 %v631, 1.442695
    %v634 = vpow.pop %v633
    %v635 = vmul.f32 %v632, 1.442695
    %v636 = vpow.pop %v635
    %v637 = vadd.f32 %v634, 1.0
    %v638 = vadd.f32 %v636, 1.0
    %v639 = vrcp.pop %v637
    %v640 = vmul.f32 1.0, %v639
    %v641 = vrcp.pop %v638
    %v642 = vmul.f32 1.0, %v641
    %v643 = vtanh.pop %v629
    %v644 = vtanh.pop %v630
    %v645 = vmul.f32 %v640, %v543
    %647 = vrot.lane.b32.xlu0 %v643, 64
    %v648 = vpop.permute.xlu0 %647
    %v650 = vmul.f32 %v640, %v648
    %652 = vrot.lane.b32.xlu0 %v650, 32
    %v653 = vpop.permute.xlu0 %652
    %v655 = vadd.f32 %v645, %v653
    %v656 = vmul.f32 %v642, %v554
    %658 = vrot.lane.b32.xlu0 %v644, 64
    %v659 = vpop.permute.xlu0 %658
    %v661 = vmul.f32 %v642, %v659
    %663 = vrot.lane.b32.xlu0 %v661, 32
    %v664 = vpop.permute.xlu0 %663
    %v666 = vadd.f32 %v656, %v664
    %v667 = vtanh.pop %v655
    %669 = vrot.lane.b32.xlu0 %v667, 64
    %v670 = vpop.permute.xlu0 %669
    %v672 = vmul.f32 %v640, %v670
    %v673 = vtanh.pop %v666
    %675 = vrot.lane.b32.xlu0 %v673, 64
    %v676 = vpop.permute.xlu0 %675
    %v678 = vmul.f32 %v642, %v676
    %680 = vrot.lane.b32.xlu0 %v672, 32
    %v681 = vpop.permute.xlu0 %680
    %s683 = scalar_lea.vmem [#allocation4], 16
    %684 = vst.msk [vmem:[%s683] sm:$0xff] %vm458, %v681
    %686 = vrot.lane.b32.xlu0 %v678, 64
    %v687 = vpop.permute.xlu0 %686
    %s689 = scalar_lea.vmem [#allocation4], 40
    %690 = vst.msk [vmem:[%s689] sm:$0xff] %vm465, %v687
    %s691 = scalar_lea.vmem [#allocation2], 24
    %v692 = vld [vmem:[%s691] sm:$0xff]
    %s693 = scalar_lea.vmem [#allocation3], 32
    %v694 = vld [vmem:[%s693] sm:$0xff]
    %v695 = vsel %vm458, %v681, %v687
    %v696 = vpack.c.bf16 %v695, %v695
    %v698 = vsel %vm359, %v696, 0
    %700 = vmatprep.subr.bf16.mxu0 %v344
    %701 = vmatpush1.bf16.msra.mxu0 %v343
    %702 = vmatprep.subr.bf16.mxu0 %v346
    %703 = vmatpush1.bf16.msra.mxu0 %v345
    %704 = vmatprep.subr.bf16.mxu0 %v348
    %705 = vmatpush1.bf16.msra.mxu0 %v347
    %706 = vmatprep.subr.bf16.mxu0 %v350
    %707 = vmatpush1.bf16.msra.mxu0 %v349
    %708 = vmatprep.subr.bf16.mxu0 0
    %709 = vmatpush1.bf16.msra.mxu0 0
    %710 = vmatprep.subr.bf16.mxu0 0
    %711 = vmatpush1.bf16.msra.mxu0 0
    %712 = vmatprep.subr.bf16.mxu0 0
    %713 = vmatpush1.bf16.msra.mxu0 0
    %714 = vmatprep.subr.bf16.mxu0 0
    %715 = vmatpush1.bf16.msra.mxu0 0
    %716 = vmatprep.subr.bf16.mxu0 0
    %717 = vmatpush1.bf16.msra.mxu0 0
    %718 = vmatprep.subr.bf16.mxu0 0
    %719 = vmatpush1.bf16.msra.mxu0 0
    %720 = vmatprep.subr.bf16.mxu0 0
    %721 = vmatpush1.bf16.msra.mxu0 0
    %722 = vmatprep.subr.bf16.mxu0 0
    %723 = vmatpush1.bf16.msra.mxu0 0
    %724 = vmatprep.subr.bf16.mxu0 0
    %725 = vmatpush1.bf16.msra.mxu0 0
    %726 = vmatprep.subr.bf16.mxu0 0
    %727 = vmatpush1.bf16.msra.mxu0 0
    %728 = vmatprep.subr.bf16.mxu0 0
    %729 = vmatpush1.bf16.msra.mxu0 0
    %730 = vmatprep.subr.bf16.mxu0 0
    %731 = vmatpush1.bf16.msra.mxu0 0
    %732 = vmatprep.mubr.bf16.mxu0 0
    %733 = vmatmul.mubr.bf16.gmra.mrb[0].mxu0 %v698
    %v734 = vpop.f32.mrb[0].mxu0
    %v735 = vadd.f32 0.0, %v734
    %v736 = vpop.f32.mrb[0].mxu0
    %v737 = vadd.f32 0.0, %v736
    %v738 = vpop.f32.mrb[0].mxu0
    %v739 = vpop.f32.mrb[0].mxu0
    %740 = vdwg.mxu0
    %v741 = vadd.f32 %v692, %v735
    %v742 = vadd.f32 %v694, %v737
    %v743 = vxor.u32 %v741, 2147483648
    %v744 = vxor.u32 %v742, 2147483648
    %v745 = vmul.f32 %v743, 1.442695
    %v746 = vpow.pop %v745
    %v747 = vmul.f32 %v744, 1.442695
    %v748 = vpow.pop %v747
    %v749 = vadd.f32 %v746, 1.0
    %v750 = vadd.f32 %v748, 1.0
    %v751 = vrcp.pop %v749
    %v752 = vmul.f32 1.0, %v751
    %v753 = vrcp.pop %v750
    %v754 = vmul.f32 1.0, %v753
    %v755 = vtanh.pop %v741
    %v756 = vtanh.pop %v742
    %v757 = vmul.f32 %v752, %v655
    %759 = vrot.lane.b32.xlu0 %v755, 64
    %v760 = vpop.permute.xlu0 %759
    %v762 = vmul.f32 %v752, %v760
    %764 = vrot.lane.b32.xlu0 %v762, 32
    %v765 = vpop.permute.xlu0 %764
    %v767 = vadd.f32 %v757, %v765
    %v768 = vmul.f32 %v754, %v666
    %770 = vrot.lane.b32.xlu0 %v756, 64
    %v771 = vpop.permute.xlu0 %770
    %v773 = vmul.f32 %v754, %v771
    %775 = vrot.lane.b32.xlu0 %v773, 32
    %v776 = vpop.permute.xlu0 %775
    %v778 = vadd.f32 %v768, %v776
    %v779 = vtanh.pop %v767
    %781 = vrot.lane.b32.xlu0 %v779, 64
    %v782 = vpop.permute.xlu0 %781
    %v784 = vmul.f32 %v752, %v782
    %v785 = vtanh.pop %v778
    %787 = vrot.lane.b32.xlu0 %v785, 64
    %v788 = vpop.permute.xlu0 %787
    %v790 = vmul.f32 %v754, %v788
    %792 = vrot.lane.b32.xlu0 %v784, 32
    %v793 = vpop.permute.xlu0 %792
    %s795 = scalar_lea.vmem [#allocation4], 24
    %796 = vst.msk [vmem:[%s795] sm:$0xff] %vm458, %v793
    %798 = vrot.lane.b32.xlu0 %v790, 64
    %v799 = vpop.permute.xlu0 %798
    %s801 = scalar_lea.vmem [#allocation4], 32
    %802 = vst.msk [vmem:[%s801] sm:$0xff] %vm465, %v799
    %s803 = scalar_lea.vmem [#allocation2], 32
    %v804 = vld [vmem:[%s803] sm:$0xff]
    %s805 = scalar_lea.vmem [#allocation3], 24
    %v806 = vld [vmem:[%s805] sm:$0xff]
    %v807 = vsel %vm458, %v793, %v799
    %v808 = vpack.c.bf16 %v807, %v807
    %v810 = vsel %vm359, %v808, 0
    %812 = vmatprep.subr.bf16.mxu0 %v344
    %813 = vmatpush1.bf16.msra.mxu0 %v343
    %814 = vmatprep.subr.bf16.mxu0 %v346
    %815 = vmatpush1.bf16.msra.mxu0 %v345
    %816 = vmatprep.subr.bf16.mxu0 %v348
    %817 = vmatpush1.bf16.msra.mxu0 %v347
    %818 = vmatprep.subr.bf16.mxu0 %v350
    %819 = vmatpush1.bf16.msra.mxu0 %v349
    %820 = vmatprep.subr.bf16.mxu0 0
    %821 = vmatpush1.bf16.msra.mxu0 0
    %822 = vmatprep.subr.bf16.mxu0 0
    %823 = vmatpush1.bf16.msra.mxu0 0
    %824 = vmatprep.subr.bf16.mxu0 0
    %825 = vmatpush1.bf16.msra.mxu0 0
    %826 = vmatprep.subr.bf16.mxu0 0
    %827 = vmatpush1.bf16.msra.mxu0 0
    %828 = vmatprep.subr.bf16.mxu0 0
    %829 = vmatpush1.bf16.msra.mxu0 0
    %830 = vmatprep.subr.bf16.mxu0 0
    %831 = vmatpush1.bf16.msra.mxu0 0
    %832 = vmatprep.subr.bf16.mxu0 0
    %833 = vmatpush1.bf16.msra.mxu0 0
    %834 = vmatprep.subr.bf16.mxu0 0
    %835 = vmatpush1.bf16.msra.mxu0 0
    %836 = vmatprep.subr.bf16.mxu0 0
    %837 = vmatpush1.bf16.msra.mxu0 0
    %838 = vmatprep.subr.bf16.mxu0 0
    %839 = vmatpush1.bf16.msra.mxu0 0
    %840 = vmatprep.subr.bf16.mxu0 0
    %841 = vmatpush1.bf16.msra.mxu0 0
    %842 = vmatprep.subr.bf16.mxu0 0
    %843 = vmatpush1.bf16.msra.mxu0 0
    %844 = vmatprep.mubr.bf16.mxu0 0
    %845 = vmatmul.mubr.bf16.gmra.mrb[0].mxu0 %v810
    %v846 = vpop.f32.mrb[0].mxu0
    %v847 = vadd.f32 0.0, %v846
    %v848 = vpop.f32.mrb[0].mxu0
    %v849 = vadd.f32 0.0, %v848
    %v850 = vpop.f32.mrb[0].mxu0
    %v851 = vpop.f32.mrb[0].mxu0
    %852 = vdwg.mxu0
    %v853 = vadd.f32 %v804, %v847
    %v854 = vadd.f32 %v806, %v849
    %v855 = vxor.u32 %v853, 2147483648
    %v856 = vxor.u32 %v854, 2147483648
    %v857 = vmul.f32 %v855, 1.442695
    %v858 = vpow.pop %v857
    %v859 = vmul.f32 %v856, 1.442695
    %v860 = vpow.pop %v859
    %v861 = vadd.f32 %v858, 1.0
    %v862 = vadd.f32 %v860, 1.0
    %v863 = vrcp.pop %v861
    %v864 = vmul.f32 1.0, %v863
    %v865 = vrcp.pop %v862
    %v866 = vmul.f32 1.0, %v865
    %v867 = vtanh.pop %v853
    %v868 = vtanh.pop %v854
    %v869 = vmul.f32 %v864, %v767
    %871 = vrot.lane.b32.xlu0 %v867, 64
    %v872 = vpop.permute.xlu0 %871
    %v874 = vmul.f32 %v864, %v872
    %876 = vrot.lane.b32.xlu0 %v874, 32
    %v877 = vpop.permute.xlu0 %876
    %v879 = vadd.f32 %v869, %v877
    %v880 = vmul.f32 %v866, %v778
    %882 = vrot.lane.b32.xlu0 %v868, 64
    %v883 = vpop.permute.xlu0 %882
    %v885 = vmul.f32 %v866, %v883
    %887 = vrot.lane.b32.xlu0 %v885, 32
    %v888 = vpop.permute.xlu0 %887
    %v890 = vadd.f32 %v880, %v888
    %v891 = vtanh.pop %v879
    %893 = vrot.lane.b32.xlu0 %v891, 64
    %v894 = vpop.permute.xlu0 %893
    %v896 = vmul.f32 %v864, %v894
    %v897 = vtanh.pop %v890
    %899 = vrot.lane.b32.xlu0 %v897, 64
    %v900 = vpop.permute.xlu0 %899
    %v902 = vmul.f32 %v866, %v900
    %904 = vrot.lane.b32.xlu0 %v896, 32
    %v905 = vpop.permute.xlu0 %904
    %907 = vst.msk [vmem:[%s801] sm:$0xff] %vm458, %v905
    %909 = vrot.lane.b32.xlu0 %v902, 64
    %v910 = vpop.permute.xlu0 %909
    %912 = vst.msk [vmem:[%s795] sm:$0xff] %vm465, %v910
    %s913 = scalar_lea.vmem [#allocation2], 40
    %v914 = vld [vmem:[%s913] sm:$0xff]
    %s915 = scalar_lea.vmem [#allocation3], 16
    %v916 = vld [vmem:[%s915] sm:$0xff]
    %v917 = vsel %vm458, %v905, %v910
    %v918 = vpack.c.bf16 %v917, %v917
    %v920 = vsel %vm359, %v918, 0
    %922 = vmatprep.subr.bf16.mxu0 %v344
    %923 = vmatpush1.bf16.msra.mxu0 %v343
    %924 = vmatprep.subr.bf16.mxu0 %v346
    %925 = vmatpush1.bf16.msra.mxu0 %v345
    %926 = vmatprep.subr.bf16.mxu0 %v348
    %927 = vmatpush1.bf16.msra.mxu0 %v347
    %928 = vmatprep.subr.bf16.mxu0 %v350
    %929 = vmatpush1.bf16.msra.mxu0 %v349
    %930 = vmatprep.subr.bf16.mxu0 0
    %931 = vmatpush1.bf16.msra.mxu0 0
    %932 = vmatprep.subr.bf16.mxu0 0
    %933 = vmatpush1.bf16.msra.mxu0 0
    %934 = vmatprep.subr.bf16.mxu0 0
    %935 = vmatpush1.bf16.msra.mxu0 0
    %936 = vmatprep.subr.bf16.mxu0 0
    %937 = vmatpush1.bf16.msra.mxu0 0
    %938 = vmatprep.subr.bf16.mxu0 0
    %939 = vmatpush1.bf16.msra.mxu0 0
    %940 = vmatprep.subr.bf16.mxu0 0
    %941 = vmatpush1.bf16.msra.mxu0 0
    %942 = vmatprep.subr.bf16.mxu0 0
    %943 = vmatpush1.bf16.msra.mxu0 0
    %944 = vmatprep.subr.bf16.mxu0 0
    %945 = vmatpush1.bf16.msra.mxu0 0
    %946 = vmatprep.subr.bf16.mxu0 0
    %947 = vmatpush1.bf16.msra.mxu0 0
    %948 = vmatprep.subr.bf16.mxu0 0
    %949 = vmatpush1.bf16.msra.mxu0 0
    %950 = vmatprep.subr.bf16.mxu0 0
    %951 = vmatpush1.bf16.msra.mxu0 0
    %952 = vmatprep.subr.bf16.mxu0 0
    %953 = vmatpush1.bf16.msra.mxu0 0
    %954 = vmatprep.mubr.bf16.mxu0 0
    %955 = vmatmul.mubr.bf16.gmra.mrb[0].mxu0 %v920
    %v956 = vpop.f32.mrb[0].mxu0
    %v957 = vadd.f32 0.0, %v956
    %v958 = vpop.f32.mrb[0].mxu0
    %v959 = vadd.f32 0.0, %v958
    %v960 = vpop.f32.mrb[0].mxu0
    %v961 = vpop.f32.mrb[0].mxu0
    %962 = vdwg.mxu0
    %v963 = vadd.f32 %v914, %v957
    %v964 = vadd.f32 %v916, %v959
    %v965 = vxor.u32 %v963, 2147483648
    %v966 = vxor.u32 %v964, 2147483648
    %v967 = vmul.f32 %v965, 1.442695
    %v968 = vpow.pop %v967
    %v969 = vmul.f32 %v966, 1.442695
    %v970 = vpow.pop %v969
    %v971 = vadd.f32 %v968, 1.0
    %v972 = vadd.f32 %v970, 1.0
    %v973 = vrcp.pop %v971
    %v974 = vmul.f32 1.0, %v973
    %v975 = vrcp.pop %v972
    %v976 = vmul.f32 1.0, %v975
    %v977 = vtanh.pop %v963
    %v978 = vtanh.pop %v964
    %v979 = vmul.f32 %v974, %v879
    %981 = vrot.lane.b32.xlu0 %v977, 64
    %v982 = vpop.permute.xlu0 %981
    %v984 = vmul.f32 %v974, %v982
    %986 = vrot.lane.b32.xlu0 %v984, 32
    %v987 = vpop.permute.xlu0 %986
    %v989 = vadd.f32 %v979, %v987
    %v990 = vmul.f32 %v976, %v890
    %992 = vrot.lane.b32.xlu0 %v978, 64
    %v993 = vpop.permute.xlu0 %992
    %v995 = vmul.f32 %v976, %v993
    %997 = vrot.lane.b32.xlu0 %v995, 32
    %v998 = vpop.permute.xlu0 %997
    %v1000 = vadd.f32 %v990, %v998
    %v1001 = vtanh.pop %v989
    %1003 = vrot.lane.b32.xlu0 %v1001, 64
    %v1004 = vpop.permute.xlu0 %1003
    %v1006 = vmul.f32 %v974, %v1004
    %v1007 = vtanh.pop %v1000
    %1009 = vrot.lane.b32.xlu0 %v1007, 64
    %v1010 = vpop.permute.xlu0 %1009
    %v1012 = vmul.f32 %v976, %v1010
    %1014 = vrot.lane.b32.xlu0 %v1006, 32
    %v1015 = vpop.permute.xlu0 %1014
    %1017 = vst.msk [vmem:[%s689] sm:$0xff] %vm458, %v1015
    %1019 = vrot.lane.b32.xlu0 %v1012, 64
    %v1020 = vpop.permute.xlu0 %1019
    %1022 = vst.msk [vmem:[%s683] sm:$0xff] %vm465, %v1020
    %s1023 = scalar_lea.vmem [#allocation2], 48
    %v1024 = vld [vmem:[%s1023] sm:$0xff]
    %s1025 = scalar_lea.vmem [#allocation3], 8
    %v1026 = vld [vmem:[%s1025] sm:$0xff]
    %v1027 = vsel %vm458, %v1015, %v1020
    %v1028 = vpack.c.bf16 %v1027, %v1027
    %v1030 = vsel %vm359, %v1028, 0
    %1032 = vmatprep.subr.bf16.mxu0 %v344
    %1033 = vmatpush1.bf16.msra.mxu0 %v343
    %1034 = vmatprep.subr.bf16.mxu0 %v346
    %1035 = vmatpush1.bf16.msra.mxu0 %v345
    %1036 = vmatprep.subr.bf16.mxu0 %v348
    %1037 = vmatpush1.bf16.msra.mxu0 %v347
    %1038 = vmatprep.subr.bf16.mxu0 %v350
    %1039 = vmatpush1.bf16.msra.mxu0 %v349
    %1040 = vmatprep.subr.bf16.mxu0 0
    %1041 = vmatpush1.bf16.msra.mxu0 0
    %1042 = vmatprep.subr.bf16.mxu0 0
    %1043 = vmatpush1.bf16.msra.mxu0 0
    %1044 = vmatprep.subr.bf16.mxu0 0
    %1045 = vmatpush1.bf16.msra.mxu0 0
    %1046 = vmatprep.subr.bf16.mxu0 0
    %1047 = vmatpush1.bf16.msra.mxu0 0
    %1048 = vmatprep.subr.bf16.mxu0 0
    %1049 = vmatpush1.bf16.msra.mxu0 0
    %1050 = vmatprep.subr.bf16.mxu0 0
    %1051 = vmatpush1.bf16.msra.mxu0 0
    %1052 = vmatprep.subr.bf16.mxu0 0
    %1053 = vmatpush1.bf16.msra.mxu0 0
    %1054 = vmatprep.subr.bf16.mxu0 0
    %1055 = vmatpush1.bf16.msra.mxu0 0
    %1056 = vmatprep.subr.bf16.mxu0 0
    %1057 = vmatpush1.bf16.msra.mxu0 0
    %1058 = vmatprep.subr.bf16.mxu0 0
    %1059 = vmatpush1.bf16.msra.mxu0 0
    %1060 = vmatprep.subr.bf16.mxu0 0
    %1061 = vmatpush1.bf16.msra.mxu0 0
    %1062 = vmatprep.subr.bf16.mxu0 0
    %1063 = vmatpush1.bf16.msra.mxu0 0
    %1064 = vmatprep.mubr.bf16.mxu0 0
    %1065 = vmatmul.mubr.bf16.gmra.mrb[0].mxu0 %v1030
    %v1066 = vpop.f32.mrb[0].mxu0
    %v1067 = vadd.f32 0.0, %v1066
    %v1068 = vpop.f32.mrb[0].mxu0
    %v1069 = vadd.f32 0.0, %v1068
    %v1070 = vpop.f32.mrb[0].mxu0
    %v1071 = vpop.f32.mrb[0].mxu0
    %1072 = vdwg.mxu0
    %v1073 = vadd.f32 %v1024, %v1067
    %v1074 = vadd.f32 %v1026, %v1069
    %v1075 = vxor.u32 %v1073, 2147483648
    %v1076 = vxor.u32 %v1074, 2147483648
    %v1077 = vmul.f32 %v1075, 1.442695
    %v1078 = vpow.pop %v1077
    %v1079 = vmul.f32 %v1076, 1.442695
    %v1080 = vpow.pop %v1079
    %v1081 = vadd.f32 %v1078, 1.0
    %v1082 = vadd.f32 %v1080, 1.0
    %v1083 = vrcp.pop %v1081
    %v1084 = vmul.f32 1.0, %v1083
    %v1085 = vrcp.pop %v1082
    %v1086 = vmul.f32 1.0, %v1085
    %v1087 = vtanh.pop %v1073
    %v1088 = vtanh.pop %v1074
    %v1089 = vmul.f32 %v1084, %v989
    %1091 = vrot.lane.b32.xlu0 %v1087, 64
    %v1092 = vpop.permute.xlu0 %1091
    %v1094 = vmul.f32 %v1084, %v1092
    %1096 = vrot.lane.b32.xlu0 %v1094, 32
    %v1097 = vpop.permute.xlu0 %1096
    %v1099 = vadd.f32 %v1089, %v1097
    %v1100 = vmul.f32 %v1086, %v1000
    %1102 = vrot.lane.b32.xlu0 %v1088, 64
    %v1103 = vpop.permute.xlu0 %1102
    %v1105 = vmul.f32 %v1086, %v1103
    %1107 = vrot.lane.b32.xlu0 %v1105, 32
    %v1108 = vpop.permute.xlu0 %1107
    %v1110 = vadd.f32 %v1100, %v1108
    %v1111 = vtanh.pop %v1099
    %1113 = vrot.lane.b32.xlu0 %v1111, 64
    %v1114 = vpop.permute.xlu0 %1113
    %v1116 = vmul.f32 %v1084, %v1114
    %v1117 = vtanh.pop %v1110
    %1119 = vrot.lane.b32.xlu0 %v1117, 64
    %v1120 = vpop.permute.xlu0 %1119
    %v1122 = vmul.f32 %v1086, %v1120
    %1124 = vrot.lane.b32.xlu0 %v1116, 32
    %v1125 = vpop.permute.xlu0 %1124
    %1127 = vst.msk [vmem:[%s577] sm:$0xff] %vm458, %v1125
    %1129 = vrot.lane.b32.xlu0 %v1122, 64
    %v1130 = vpop.permute.xlu0 %1129
    %1132 = vst.msk [vmem:[%s571] sm:$0xff] %vm465, %v1130
    %s1133 = scalar_lea.vmem [#allocation2], 56
    %v1134 = vld [vmem:[%s1133] sm:$0xff]
    %v1135 = vld [vmem:[#allocation3] sm:$0xff]
    %v1136 = vsel %vm458, %v1125, %v1130
    %v1137 = vpack.c.bf16 %v1136, %v1136
    %v1139 = vsel %vm359, %v1137, 0
    %1141 = vmatprep.subr.bf16.mxu0 %v344
    %1142 = vmatpush1.bf16.msra.mxu0 %v343
    %1143 = vmatprep.subr.bf16.mxu0 %v346
    %1144 = vmatpush1.bf16.msra.mxu0 %v345
    %1145 = vmatprep.subr.bf16.mxu0 %v348
    %1146 = vmatpush1.bf16.msra.mxu0 %v347
    %1147 = vmatprep.subr.bf16.mxu0 %v350
    %1148 = vmatpush1.bf16.msra.mxu0 %v349
    %1149 = vmatprep.subr.bf16.mxu0 0
    %1150 = vmatpush1.bf16.msra.mxu0 0
    %1151 = vmatprep.subr.bf16.mxu0 0
    %1152 = vmatpush1.bf16.msra.mxu0 0
    %1153 = vmatprep.subr.bf16.mxu0 0
    %1154 = vmatpush1.bf16.msra.mxu0 0
    %1155 = vmatprep.subr.bf16.mxu0 0
    %1156 = vmatpush1.bf16.msra.mxu0 0
    %1157 = vmatprep.subr.bf16.mxu0 0
    %1158 = vmatpush1.bf16.msra.mxu0 0
    %1159 = vmatprep.subr.bf16.mxu0 0
    %1160 = vmatpush1.bf16.msra.mxu0 0
    %1161 = vmatprep.subr.bf16.mxu0 0
    %1162 = vmatpush1.bf16.msra.mxu0 0
    %1163 = vmatprep.subr.bf16.mxu0 0
    %1164 = vmatpush1.bf16.msra.mxu0 0
    %1165 = vmatprep.subr.bf16.mxu0 0
    %1166 = vmatpush1.bf16.msra.mxu0 0
    %1167 = vmatprep.subr.bf16.mxu0 0
    %1168 = vmatpush1.bf16.msra.mxu0 0
    %1169 = vmatprep.subr.bf16.mxu0 0
    %1170 = vmatpush1.bf16.msra.mxu0 0
    %1171 = vmatprep.subr.bf16.mxu0 0
    %1172 = vmatpush1.bf16.msra.mxu0 0
    %1173 = vmatprep.mubr.bf16.mxu0 0
    %1174 = vmatmul.mubr.bf16.gmra.mrb[0].mxu0 %v1139
    %v1175 = vpop.f32.mrb[0].mxu0
    %v1176 = vadd.f32 0.0, %v1175
    %v1177 = vpop.f32.mrb[0].mxu0
    %v1178 = vadd.f32 0.0, %v1177
    %v1179 = vpop.f32.mrb[0].mxu0
    %v1180 = vpop.f32.mrb[0].mxu0
    %1181 = vdwg.mxu0
    %v1182 = vadd.f32 %v1134, %v1176
    %v1183 = vadd.f32 %v1135, %v1178
    %v1184 = vxor.u32 %v1182, 2147483648
    %v1185 = vxor.u32 %v1183, 2147483648
    %v1186 = vmul.f32 %v1184, 1.442695
    %v1187 = vpow.pop %v1186
    %v1188 = vmul.f32 %v1185, 1.442695
    %v1189 = vpow.pop %v1188
    %v1190 = vadd.f32 %v1187, 1.0
    %v1191 = vadd.f32 %v1189, 1.0
    %v1192 = vrcp.pop %v1190
    %v1193 = vmul.f32 1.0, %v1192
    %v1194 = vrcp.pop %v1191
    %v1195 = vmul.f32 1.0, %v1194
    %v1196 = vtanh.pop %v1182
    %v1197 = vtanh.pop %v1183
    %v1198 = vmul.f32 %v1193, %v1099
    %1200 = vrot.lane.b32.xlu0 %v1196, 64
    %v1201 = vpop.permute.xlu0 %1200
    %v1203 = vmul.f32 %v1193, %v1201
    %1205 = vrot.lane.b32.xlu0 %v1203, 32
    %v1206 = vpop.permute.xlu0 %1205
    %v1208 = vadd.f32 %v1198, %v1206
    %v1209 = vmul.f32 %v1195, %v1110
    %1211 = vrot.lane.b32.xlu0 %v1197, 64
    %v1212 = vpop.permute.xlu0 %1211
    %v1214 = vmul.f32 %v1195, %v1212
    %1216 = vrot.lane.b32.xlu0 %v1214, 32
    %v1217 = vpop.permute.xlu0 %1216
    %v1219 = vadd.f32 %v1209, %v1217
    %v1220 = vtanh.pop %v1208
    %1222 = vrot.lane.b32.xlu0 %v1220, 64
    %v1223 = vpop.permute.xlu0 %1222
    %v1225 = vmul.f32 %v1193, %v1223
    %v1226 = vtanh.pop %v1219
    %1228 = vrot.lane.b32.xlu0 %v1226, 64
    %v1229 = vpop.permute.xlu0 %1228
    %v1231 = vmul.f32 %v1195, %v1229
    %1233 = vrot.lane.b32.xlu0 %v1225, 32
    %v1234 = vpop.permute.xlu0 %1233
    %1236 = vst.msk [vmem:[%s464] sm:$0xff] %vm458, %v1234
    %1238 = vrot.lane.b32.xlu0 %v1231, 64
    %v1239 = vpop.permute.xlu0 %1238
    %1241 = vst.msk [vmem:[#allocation4] sm:$0xff] %vm465, %v1239
    %v1242 = vld [vmem:[#allocation4] sm:$0xff]
    %v1243 = vld [vmem:[#allocation4 + $0x8] sm:$0xff]
    %v1244 = vld [vmem:[#allocation4 + $0x10] sm:$0xff]
    %v1245 = vld [vmem:[#allocation4 + $0x18] sm:$0xff]
    %v1246 = vld [vmem:[#allocation4 + $0x20] sm:$0xff]
    %v1247 = vld [vmem:[#allocation4 + $0x28] sm:$0xff]
    %v1248 = vld [vmem:[#allocation4 + $0x30] sm:$0xff]
    %v1249 = vld [vmem:[#allocation4 + $0x38] sm:$0xff]
    %v1250 = vpack.c.bf16 %v1243, %v1242
    %v1251 = vpack.c.bf16 %v1245, %v1244
    %v1252 = vpack.c.bf16 %v1247, %v1246
    %v1253 = vpack.c.bf16 %v1249, %v1248
    %v1254 = vld [vmem:[#allocation10] sm:$0xf]
    %v1255 = vld [vmem:[#allocation10 + $0x4] sm:$0xf]
    %v1256 = vld [vmem:[#allocation10 + $0x8] sm:$0xf]
    %v1257 = vld [vmem:[#allocation10 + $0xc] sm:$0xf]
    %v1258 = vld [vmem:[#allocation10 + $0x10] sm:$0xf]
    %v1259 = vld [vmem:[#allocation10 + $0x14] sm:$0xf]
    %v1260 = vld [vmem:[#allocation10 + $0x18] sm:$0xf]
    %v1261 = vld [vmem:[#allocation10 + $0x1c] sm:$0xf]
    %v1262 = vld [vmem:[%s7] sm:$0x1]
    %v1264 = vlaneseq
    %v1265 = vshrl.u32 %v1264, 7
    %v1266 = vsub.s32 0, %v1265
    %v1267 = vrot.slane %v1262, %v1266
    %v1277 = vunpack.c.l.b16 %v1254
    %v1278 = vunpack.c.l.b16 %v1255
    %v1279 = vunpack.c.l.b16 %v1256
    %v1280 = vunpack.c.l.b16 %v1257
    %v1281 = vunpack.c.l.b16 %v1258
    %v1282 = vunpack.c.l.b16 %v1259
    %v1283 = vunpack.c.l.b16 %v1260
    %v1284 = vunpack.c.l.b16 %v1261
    %v1285 = vpack.c.b16 %v1278, %v1277
    %v1286 = vpack.c.b16 %v1280, %v1279
    %v1287 = vpack.c.b16 %v1282, %v1281
    %v1288 = vpack.c.b16 %v1284, %v1283
    %v1294 = vsel %vm359, %v1250, 0
    %v1297 = vsel %vm359, %v1251, 0
    %v1300 = vsel %vm359, %v1252, 0
    %v1303 = vsel %vm359, %v1253, 0
    %1305 = vmatprep.subr.bf16.mxu0 0
    %1306 = vmatpush1.bf16.msra.mxu0 %v1285
    %1307 = vmatprep.subr.bf16.mxu0 0
    %1308 = vmatpush1.bf16.msra.mxu0 %v1286
    %1309 = vmatprep.subr.bf16.mxu0 0
    %1310 = vmatpush1.bf16.msra.mxu0 %v1287
    %1311 = vmatprep.subr.bf16.mxu0 0
    %1312 = vmatpush1.bf16.msra.mxu0 %v1288
    %1313 = vmatprep.subr.bf16.mxu0 0
    %1314 = vmatpush1.bf16.msra.mxu0 0
    %1315 = vmatprep.subr.bf16.mxu0 0
    %1316 = vmatpush1.bf16.msra.mxu0 0
    %1317 = vmatprep.subr.bf16.mxu0 0
    %1318 = vmatpush1.bf16.msra.mxu0 0
    %1319 = vmatprep.subr.bf16.mxu0 0
    %1320 = vmatpush1.bf16.msra.mxu0 0
    %1321 = vmatprep.subr.bf16.mxu0 0
    %1322 = vmatpush1.bf16.msra.mxu0 0
    %1323 = vmatprep.subr.bf16.mxu0 0
    %1324 = vmatpush1.bf16.msra.mxu0 0
    %1325 = vmatprep.subr.bf16.mxu0 0
    %1326 = vmatpush1.bf16.msra.mxu0 0
    %1327 = vmatprep.subr.bf16.mxu0 0
    %1328 = vmatpush1.bf16.msra.mxu0 0
    %1329 = vmatprep.subr.bf16.mxu0 0
    %1330 = vmatpush1.bf16.msra.mxu0 0
    %1331 = vmatprep.subr.bf16.mxu0 0
    %1332 = vmatpush1.bf16.msra.mxu0 0
    %1333 = vmatprep.subr.bf16.mxu0 0
    %1334 = vmatpush1.bf16.msra.mxu0 0
    %1335 = vmatprep.subr.bf16.mxu0 0
    %1336 = vmatpush1.bf16.msra.mxu0 0
    %1337 = vmatprep.mubr.bf16.mxu0 0
    %1338 = vmatmul.mubr.bf16.gmra.mrb[0].mxu0 %v1294
    %v1339 = vpop.f32.mrb[0].mxu0
    %v1340 = vadd.f32 %v1267, %v1339
    %v1341 = vpop.f32.mrb[0].mxu0
    %v1342 = vpop.f32.mrb[0].mxu0
    %v1343 = vadd.f32 %v1267, %v1342
    %v1344 = vpop.f32.mrb[0].mxu0
    %1345 = vmatprep.mubr.bf16.mxu0 0
    %1346 = vmatmul.mubr.bf16.gmra.mrb[0].mxu0 %v1297
    %v1347 = vpop.f32.mrb[0].mxu0
    %v1348 = vadd.f32 %v1267, %v1347
    %v1349 = vpop.f32.mrb[0].mxu0
    %v1350 = vpop.f32.mrb[0].mxu0
    %v1351 = vadd.f32 %v1267, %v1350
    %v1352 = vpop.f32.mrb[0].mxu0
    %1353 = vmatprep.mubr.bf16.mxu0 0
    %1354 = vmatmul.mubr.bf16.gmra.mrb[0].mxu0 %v1300
    %v1355 = vpop.f32.mrb[0].mxu0
    %v1356 = vadd.f32 %v1267, %v1355
    %v1357 = vpop.f32.mrb[0].mxu0
    %v1358 = vpop.f32.mrb[0].mxu0
    %v1359 = vadd.f32 %v1267, %v1358
    %v1360 = vpop.f32.mrb[0].mxu0
    %1361 = vmatprep.mubr.bf16.mxu0 0
    %1362 = vmatmul.mubr.bf16.gmra.mrb[0].mxu0 %v1303
    %v1363 = vpop.f32.mrb[0].mxu0
    %v1364 = vadd.f32 %v1267, %v1363
    %v1365 = vpop.f32.mrb[0].mxu0
    %v1366 = vpop.f32.mrb[0].mxu0
    %v1367 = vadd.f32 %v1267, %v1366
    %v1368 = vpop.f32.mrb[0].mxu0
    %1369 = vdwg.mxu0
    %1370 = vst [vmem:[#allocation2] sm:$0xff] %v1340
    %1371 = vst [vmem:[#allocation2 + $0x8] sm:$0xff] %v1343
    %1372 = vst [vmem:[#allocation2 + $0x10] sm:$0xff] %v1348
    %1373 = vst [vmem:[#allocation2 + $0x18] sm:$0xff] %v1351
    %1374 = vst [vmem:[#allocation2 + $0x20] sm:$0xff] %v1356
    %1375 = vst [vmem:[#allocation2 + $0x28] sm:$0xff] %v1359
    %1376 = vst [vmem:[#allocation2 + $0x30] sm:$0xff] %v1364
    %1377 = vst [vmem:[#allocation2 + $0x38] sm:$0xff] %v1367
    %v1378 = vld [vmem:[#allocation11] sm:$0xf]
    %v1379 = vld [vmem:[#allocation11 + $0x4] sm:$0xf]
    %v1380 = vld [vmem:[#allocation11 + $0x8] sm:$0xf]
    %v1381 = vld [vmem:[#allocation11 + $0xc] sm:$0xf]
    %v1382 = vld [vmem:[#allocation11 + $0x10] sm:$0xf]
    %v1383 = vld [vmem:[#allocation11 + $0x14] sm:$0xf]
    %v1384 = vld [vmem:[#allocation11 + $0x18] sm:$0xf]
    %v1385 = vld [vmem:[#allocation11 + $0x1c] sm:$0xf]
    %v1386 = vld [vmem:[%s7 + $0x1] sm:$0x1]
    %v1388 = vlaneseq
    %v1389 = vshrl.u32 %v1388, 7
    %v1390 = vsub.s32 0, %v1389
    %v1391 = vrot.slane %v1386, %v1390
    %v1401 = vunpack.c.l.b16 %v1378
    %v1402 = vunpack.c.l.b16 %v1379
    %v1403 = vunpack.c.l.b16 %v1380
    %v1404 = vunpack.c.l.b16 %v1381
    %v1405 = vunpack.c.l.b16 %v1382
    %v1406 = vunpack.c.l.b16 %v1383
    %v1407 = vunpack.c.l.b16 %v1384
    %v1408 = vunpack.c.l.b16 %v1385
    %v1409 = vpack.c.b16 %v1402, %v1401
    %v1410 = vpack.c.b16 %v1404, %v1403
    %v1411 = vpack.c.b16 %v1406, %v1405
    %v1412 = vpack.c.b16 %v1408, %v1407
    %1417 = vmatprep.subr.bf16.mxu0 0
    %1418 = vmatpush1.bf16.msra.mxu0 %v1409
    %1419 = vmatprep.subr.bf16.mxu0 0
    %1420 = vmatpush1.bf16.msra.mxu0 %v1410
    %1421 = vmatprep.subr.bf16.mxu0 0
    %1422 = vmatpush1.bf16.msra.mxu0 %v1411
    %1423 = vmatprep.subr.bf16.mxu0 0
    %1424 = vmatpush1.bf16.msra.mxu0 %v1412
    %1425 = vmatprep.subr.bf16.mxu0 0
    %1426 = vmatpush1.bf16.msra.mxu0 0
    %1427 = vmatprep.subr.bf16.mxu0 0
    %1428 = vmatpush1.bf16.msra.mxu0 0
    %1429 = vmatprep.subr.bf16.mxu0 0
    %1430 = vmatpush1.bf16.msra.mxu0 0
    %1431 = vmatprep.subr.bf16.mxu0 0
    %1432 = vmatpush1.bf16.msra.mxu0 0
    %1433 = vmatprep.subr.bf16.mxu0 0
    %1434 = vmatpush1.bf16.msra.mxu0 0
    %1435 = vmatprep.subr.bf16.mxu0 0
    %1436 = vmatpush1.bf16.msra.mxu0 0
    %1437 = vmatprep.subr.bf16.mxu0 0
    %1438 = vmatpush1.bf16.msra.mxu0 0
    %1439 = vmatprep.subr.bf16.mxu0 0
    %1440 = vmatpush1.bf16.msra.mxu0 0
    %1441 = vmatprep.subr.bf16.mxu0 0
    %1442 = vmatpush1.bf16.msra.mxu0 0
    %1443 = vmatprep.subr.bf16.mxu0 0
    %1444 = vmatpush1.bf16.msra.mxu0 0
    %1445 = vmatprep.subr.bf16.mxu0 0
    %1446 = vmatpush1.bf16.msra.mxu0 0
    %1447 = vmatprep.subr.bf16.mxu0 0
    %1448 = vmatpush1.bf16.msra.mxu0 0
    %1449 = vmatprep.mubr.bf16.mxu0 0
    %1450 = vmatmul.mubr.bf16.gmra.mrb[0].mxu0 %v1294
    %v1451 = vpop.f32.mrb[0].mxu0
    %v1452 = vadd.f32 %v1391, %v1451
    %v1453 = vpop.f32.mrb[0].mxu0
    %v1454 = vpop.f32.mrb[0].mxu0
    %v1455 = vadd.f32 %v1391, %v1454
    %v1456 = vpop.f32.mrb[0].mxu0
    %1457 = vmatprep.mubr.bf16.mxu0 0
    %1458 = vmatmul.mubr.bf16.gmra.mrb[0].mxu0 %v1297
    %v1459 = vpop.f32.mrb[0].mxu0
    %v1460 = vadd.f32 %v1391, %v1459
    %v1461 = vpop.f32.mrb[0].mxu0
    %v1462 = vpop.f32.mrb[0].mxu0
    %v1463 = vadd.f32 %v1391, %v1462
    %v1464 = vpop.f32.mrb[0].mxu0
    %1465 = vmatprep.mubr.bf16.mxu0 0
    %1466 = vmatmul.mubr.bf16.gmra.mrb[0].mxu0 %v1300
    %v1467 = vpop.f32.mrb[0].mxu0
    %v1468 = vadd.f32 %v1391, %v1467
    %v1469 = vpop.f32.mrb[0].mxu0
    %v1470 = vpop.f32.mrb[0].mxu0
    %v1471 = vadd.f32 %v1391, %v1470
    %v1472 = vpop.f32.mrb[0].mxu0
    %1473 = vmatprep.mubr.bf16.mxu0 0
    %1474 = vmatmul.mubr.bf16.gmra.mrb[0].mxu0 %v1303
    %v1475 = vpop.f32.mrb[0].mxu0
    %v1476 = vadd.f32 %v1391, %v1475
    %v1477 = vpop.f32.mrb[0].mxu0
    %v1478 = vpop.f32.mrb[0].mxu0
    %v1479 = vadd.f32 %v1391, %v1478
    %v1480 = vpop.f32.mrb[0].mxu0
    %1481 = vdwg.mxu0
    %1482 = vst [vmem:[#allocation3] sm:$0xff] %v1452
    %1483 = vst [vmem:[#allocation3 + $0x8] sm:$0xff] %v1455
    %1484 = vst [vmem:[#allocation3 + $0x10] sm:$0xff] %v1460
    %1485 = vst [vmem:[#allocation3 + $0x18] sm:$0xff] %v1463
    %1486 = vst [vmem:[#allocation3 + $0x20] sm:$0xff] %v1468
    %1487 = vst [vmem:[#allocation3 + $0x28] sm:$0xff] %v1471
    %1488 = vst [vmem:[#allocation3 + $0x30] sm:$0xff] %v1476
    %1489 = vst [vmem:[#allocation3 + $0x38] sm:$0xff] %v1479
    %v1490 = vld [vmem:[#allocation13] sm:$0xff]
    %v1491 = vld [vmem:[#allocation13 + $0x8] sm:$0xff]
    %v1492 = vld [vmem:[#allocation13 + $0x10] sm:$0xff]
    %v1493 = vld [vmem:[#allocation13 + $0x18] sm:$0xff]
    %v1494 = vld [vmem:[#allocation13 + $0x20] sm:$0xff]
    %v1495 = vld [vmem:[#allocation13 + $0x28] sm:$0xff]
    %v1496 = vld [vmem:[#allocation13 + $0x30] sm:$0xff]
    %v1497 = vld [vmem:[#allocation13 + $0x38] sm:$0xff]
    %v1498 = vld [vmem:[#allocation2] sm:$0xff]
    %v1499 = vld [vmem:[%s316] sm:$0xff]
    %v1508 = vunpack.c.l.b16 %v1490
    %v1509 = vunpack.c.h.b16 %v1490
    %v1510 = vunpack.c.l.b16 %v1491
    %v1511 = vunpack.c.h.b16 %v1491
    %v1512 = vunpack.c.l.b16 %v1492
    %v1513 = vunpack.c.h.b16 %v1492
    %v1514 = vunpack.c.l.b16 %v1493
    %v1515 = vunpack.c.h.b16 %v1493
    %v1516 = vunpack.c.l.b16 %v1494
    %v1517 = vunpack.c.h.b16 %v1494
    %v1518 = vunpack.c.l.b16 %v1495
    %v1519 = vunpack.c.h.b16 %v1495
    %v1520 = vunpack.c.l.b16 %v1496
    %v1521 = vunpack.c.h.b16 %v1496
    %v1522 = vunpack.c.l.b16 %v1497
    %v1523 = vunpack.c.h.b16 %v1497
    %v1524 = vpack.c.b16 %v1510, %v1508
    %v1525 = vpack.c.b16 %v1511, %v1509
    %v1526 = vpack.c.b16 %v1514, %v1512
    %v1527 = vpack.c.b16 %v1515, %v1513
    %v1528 = vpack.c.b16 %v1518, %v1516
    %v1529 = vpack.c.b16 %v1519, %v1517
    %v1530 = vpack.c.b16 %v1522, %v1520
    %v1531 = vpack.c.b16 %v1523, %v1521
    %1540 = vmatprep.subr.bf16.mxu0 %v1525
    %1541 = vmatpush1.bf16.msra.mxu0 %v1524
    %1542 = vmatprep.subr.bf16.mxu0 %v1527
    %1543 = vmatpush1.bf16.msra.mxu0 %v1526
    %1544 = vmatprep.subr.bf16.mxu0 %v1529
    %1545 = vmatpush1.bf16.msra.mxu0 %v1528
    %1546 = vmatprep.subr.bf16.mxu0 %v1531
    %1547 = vmatpush1.bf16.msra.mxu0 %v1530
    %1548 = vmatprep.subr.bf16.mxu0 0
    %1549 = vmatpush1.bf16.msra.mxu0 0
    %1550 = vmatprep.subr.bf16.mxu0 0
    %1551 = vmatpush1.bf16.msra.mxu0 0
    %1552 = vmatprep.subr.bf16.mxu0 0
    %1553 = vmatpush1.bf16.msra.mxu0 0
    %1554 = vmatprep.subr.bf16.mxu0 0
    %1555 = vmatpush1.bf16.msra.mxu0 0
    %1556 = vmatprep.subr.bf16.mxu0 0
    %1557 = vmatpush1.bf16.msra.mxu0 0
    %1558 = vmatprep.subr.bf16.mxu0 0
    %1559 = vmatpush1.bf16.msra.mxu0 0
    %1560 = vmatprep.subr.bf16.mxu0 0
    %1561 = vmatpush1.bf16.msra.mxu0 0
    %1562 = vmatprep.subr.bf16.mxu0 0
    %1563 = vmatpush1.bf16.msra.mxu0 0
    %1564 = vmatprep.subr.bf16.mxu0 0
    %1565 = vmatpush1.bf16.msra.mxu0 0
    %1566 = vmatprep.subr.bf16.mxu0 0
    %1567 = vmatpush1.bf16.msra.mxu0 0
    %1568 = vmatprep.subr.bf16.mxu0 0
    %1569 = vmatpush1.bf16.msra.mxu0 0
    %1570 = vmatprep.subr.bf16.mxu0 0
    %1571 = vmatpush1.bf16.msra.mxu0 0
    %1572 = vmatprep.mubr.bf16.mxu0 0
    %1573 = vmatmul.mubr.bf16.gmra.mrb[0].mxu0 %v361
    %v1574 = vpop.f32.mrb[0].mxu0
    %v1575 = vadd.f32 0.0, %v1574
    %v1576 = vpop.f32.mrb[0].mxu0
    %v1577 = vadd.f32 0.0, %v1576
    %v1578 = vpop.f32.mrb[0].mxu0
    %v1579 = vpop.f32.mrb[0].mxu0
    %1580 = vdwg.mxu0
    %v1581 = vadd.f32 %v1498, %v1575
    %v1582 = vadd.f32 %v1499, %v1577
    %v1583 = vxor.u32 %v1581, 2147483648
    %v1584 = vxor.u32 %v1582, 2147483648
    %v1585 = vmul.f32 %v1583, 1.442695
    %v1586 = vpow.pop %v1585
    %v1587 = vmul.f32 %v1584, 1.442695
    %v1588 = vpow.pop %v1587
    %v1589 = vadd.f32 %v1586, 1.0
    %v1590 = vadd.f32 %v1588, 1.0
    %v1591 = vrcp.pop %v1589
    %v1592 = vmul.f32 1.0, %v1591
    %v1593 = vrcp.pop %v1590
    %v1594 = vmul.f32 1.0, %v1593
    %v1595 = vtanh.pop %v1581
    %v1596 = vtanh.pop %v1582
    %v1597 = vmul.f32 %v1592, 0.0
    %1599 = vrot.lane.b32.xlu0 %v1595, 64
    %v1600 = vpop.permute.xlu0 %1599
    %v1602 = vmul.f32 %v1592, %v1600
    %1604 = vrot.lane.b32.xlu0 %v1602, 32
    %v1605 = vpop.permute.xlu0 %1604
    %v1607 = vadd.f32 %v1597, %v1605
    %v1608 = vmul.f32 %v1594, 0.0
    %1610 = vrot.lane.b32.xlu0 %v1596, 64
    %v1611 = vpop.permute.xlu0 %1610
    %v1613 = vmul.f32 %v1594, %v1611
    %1615 = vrot.lane.b32.xlu0 %v1613, 32
    %v1616 = vpop.permute.xlu0 %1615
    %v1618 = vadd.f32 %v1608, %v1616
    %v1619 = vtanh.pop %v1607
    %1621 = vrot.lane.b32.xlu0 %v1619, 64
    %v1622 = vpop.permute.xlu0 %1621
    %v1624 = vmul.f32 %v1592, %v1622
    %v1625 = vtanh.pop %v1618
    %1627 = vrot.lane.b32.xlu0 %v1625, 64
    %v1628 = vpop.permute.xlu0 %1627
    %v1630 = vmul.f32 %v1594, %v1628
    %v1631 = vld [vmem:[%s467] sm:$0xff]
    %v1632 = vld [vmem:[%s469] sm:$0xff]
    %1634 = vrot.lane.b32.xlu0 %v1624, 32
    %v1635 = vpop.permute.xlu0 %1634
    %1638 = vrot.lane.b32.xlu0 %v1630, 64
    %v1639 = vpop.permute.xlu0 %1638
    %v1641 = vsel %vm458, %v1635, %v1639
    %v1642 = vpack.c.bf16 %v1641, %v1641
    %v1644 = vsel %vm359, %v1642, 0
    %1646 = vmatprep.subr.bf16.mxu0 %v1525
    %1647 = vmatpush1.bf16.msra.mxu0 %v1524
    %1648 = vmatprep.subr.bf16.mxu0 %v1527
    %1649 = vmatpush1.bf16.msra.mxu0 %v1526
    %1650 = vmatprep.subr.bf16.mxu0 %v1529
    %1651 = vmatpush1.bf16.msra.mxu0 %v1528
    %1652 = vmatprep.subr.bf16.mxu0 %v1531
    %1653 = vmatpush1.bf16.msra.mxu0 %v1530
    %1654 = vmatprep.subr.bf16.mxu0 0
    %1655 = vmatpush1.bf16.msra.mxu0 0
    %1656 = vmatprep.subr.bf16.mxu0 0
    %1657 = vmatpush1.bf16.msra.mxu0 0
    %1658 = vmatprep.subr.bf16.mxu0 0
    %1659 = vmatpush1.bf16.msra.mxu0 0
    %1660 = vmatprep.subr.bf16.mxu0 0
    %1661 = vmatpush1.bf16.msra.mxu0 0
    %1662 = vmatprep.subr.bf16.mxu0 0
    %1663 = vmatpush1.bf16.msra.mxu0 0
    %1664 = vmatprep.subr.bf16.mxu0 0
    %1665 = vmatpush1.bf16.msra.mxu0 0
    %1666 = vmatprep.subr.bf16.mxu0 0
    %1667 = vmatpush1.bf16.msra.mxu0 0
    %1668 = vmatprep.subr.bf16.mxu0 0
    %1669 = vmatpush1.bf16.msra.mxu0 0
    %1670 = vmatprep.subr.bf16.mxu0 0
    %1671 = vmatpush1.bf16.msra.mxu0 0
    %1672 = vmatprep.subr.bf16.mxu0 0
    %1673 = vmatpush1.bf16.msra.mxu0 0
    %1674 = vmatprep.subr.bf16.mxu0 0
    %1675 = vmatpush1.bf16.msra.mxu0 0
    %1676 = vmatprep.subr.bf16.mxu0 0
    %1677 = vmatpush1.bf16.msra.mxu0 0
    %1678 = vmatprep.mubr.bf16.mxu0 0
    %1679 = vmatmul.mubr.bf16.gmra.mrb[0].mxu0 %v1644
    %v1680 = vpop.f32.mrb[0].mxu0
    %v1681 = vadd.f32 0.0, %v1680
    %v1682 = vpop.f32.mrb[0].mxu0
    %v1683 = vadd.f32 0.0, %v1682
    %v1684 = vpop.f32.mrb[0].mxu0
    %v1685 = vpop.f32.mrb[0].mxu0
    %1686 = vdwg.mxu0
    %v1687 = vadd.f32 %v1631, %v1681
    %v1688 = vadd.f32 %v1632, %v1683
    %v1689 = vxor.u32 %v1687, 2147483648
    %v1690 = vxor.u32 %v1688, 2147483648
    %v1691 = vmul.f32 %v1689, 1.442695
    %v1692 = vpow.pop %v1691
    %v1693 = vmul.f32 %v1690, 1.442695
    %v1694 = vpow.pop %v1693
    %v1695 = vadd.f32 %v1692, 1.0
    %v1696 = vadd.f32 %v1694, 1.0
    %v1697 = vrcp.pop %v1695
    %v1698 = vmul.f32 1.0, %v1697
    %v1699 = vrcp.pop %v1696
    %v1700 = vmul.f32 1.0, %v1699
    %v1701 = vtanh.pop %v1687
    %v1702 = vtanh.pop %v1688
    %v1703 = vmul.f32 %v1698, %v1607
    %1705 = vrot.lane.b32.xlu0 %v1701, 64
    %v1706 = vpop.permute.xlu0 %1705
    %v1708 = vmul.f32 %v1698, %v1706
    %1710 = vrot.lane.b32.xlu0 %v1708, 32
    %v1711 = vpop.permute.xlu0 %1710
    %v1713 = vadd.f32 %v1703, %v1711
    %v1714 = vmul.f32 %v1700, %v1618
    %1716 = vrot.lane.b32.xlu0 %v1702, 64
    %v1717 = vpop.permute.xlu0 %1716
    %v1719 = vmul.f32 %v1700, %v1717
    %1721 = vrot.lane.b32.xlu0 %v1719, 32
    %v1722 = vpop.permute.xlu0 %1721
    %v1724 = vadd.f32 %v1714, %v1722
    %v1725 = vtanh.pop %v1713
    %1727 = vrot.lane.b32.xlu0 %v1725, 64
    %v1728 = vpop.permute.xlu0 %1727
    %v1730 = vmul.f32 %v1698, %v1728
    %v1731 = vtanh.pop %v1724
    %1733 = vrot.lane.b32.xlu0 %v1731, 64
    %v1734 = vpop.permute.xlu0 %1733
    %v1736 = vmul.f32 %v1700, %v1734
    %v1737 = vld [vmem:[%s579] sm:$0xff]
    %v1738 = vld [vmem:[%s581] sm:$0xff]
    %1740 = vrot.lane.b32.xlu0 %v1730, 32
    %v1741 = vpop.permute.xlu0 %1740
    %1744 = vrot.lane.b32.xlu0 %v1736, 64
    %v1745 = vpop.permute.xlu0 %1744
    %v1747 = vsel %vm458, %v1741, %v1745
    %v1748 = vpack.c.bf16 %v1747, %v1747
    %v1750 = vsel %vm359, %v1748, 0
    %1752 = vmatprep.subr.bf16.mxu0 %v1525
    %1753 = vmatpush1.bf16.msra.mxu0 %v1524
    %1754 = vmatprep.subr.bf16.mxu0 %v1527
    %1755 = vmatpush1.bf16.msra.mxu0 %v1526
    %1756 = vmatprep.subr.bf16.mxu0 %v1529
    %1757 = vmatpush1.bf16.msra.mxu0 %v1528
    %1758 = vmatprep.subr.bf16.mxu0 %v1531
    %1759 = vmatpush1.bf16.msra.mxu0 %v1530
    %1760 = vmatprep.subr.bf16.mxu0 0
    %1761 = vmatpush1.bf16.msra.mxu0 0
    %1762 = vmatprep.subr.bf16.mxu0 0
    %1763 = vmatpush1.bf16.msra.mxu0 0
    %1764 = vmatprep.subr.bf16.mxu0 0
    %1765 = vmatpush1.bf16.msra.mxu0 0
    %1766 = vmatprep.subr.bf16.mxu0 0
    %1767 = vmatpush1.bf16.msra.mxu0 0
    %1768 = vmatprep.subr.bf16.mxu0 0
    %1769 = vmatpush1.bf16.msra.mxu0 0
    %1770 = vmatprep.subr.bf16.mxu0 0
    %1771 = vmatpush1.bf16.msra.mxu0 0
    %1772 = vmatprep.subr.bf16.mxu0 0
    %1773 = vmatpush1.bf16.msra.mxu0 0
    %1774 = vmatprep.subr.bf16.mxu0 0
    %1775 = vmatpush1.bf16.msra.mxu0 0
    %1776 = vmatprep.subr.bf16.mxu0 0
    %1777 = vmatpush1.bf16.msra.mxu0 0
    %1778 = vmatprep.subr.bf16.mxu0 0
    %1779 = vmatpush1.bf16.msra.mxu0 0
    %1780 = vmatprep.subr.bf16.mxu0 0
    %1781 = vmatpush1.bf16.msra.mxu0 0
    %1782 = vmatprep.subr.bf16.mxu0 0
    %1783 = vmatpush1.bf16.msra.mxu0 0
    %1784 = vmatprep.mubr.bf16.mxu0 0
    %1785 = vmatmul.mubr.bf16.gmra.mrb[0].mxu0 %v1750
    %v1786 = vpop.f32.mrb[0].mxu0
    %v1787 = vadd.f32 0.0, %v1786
    %v1788 = vpop.f32.mrb[0].mxu0
    %v1789 = vadd.f32 0.0, %v1788
    %v1790 = vpop.f32.mrb[0].mxu0
    %v1791 = vpop.f32.mrb[0].mxu0
    %1792 = vdwg.mxu0
    %v1793 = vadd.f32 %v1737, %v1787
    %v1794 = vadd.f32 %v1738, %v1789
    %v1795 = vxor.u32 %v1793, 2147483648
    %v1796 = vxor.u32 %v1794, 2147483648
    %v1797 = vmul.f32 %v1795, 1.442695
    %v1798 = vpow.pop %v1797
    %v1799 = vmul.f32 %v1796, 1.442695
    %v1800 = vpow.pop %v1799
    %v1801 = vadd.f32 %v1798, 1.0
    %v1802 = vadd.f32 %v1800, 1.0
    %v1803 = vrcp.pop %v1801
    %v1804 = vmul.f32 1.0, %v1803
    %v1805 = vrcp.pop %v1802
    %v1806 = vmul.f32 1.0, %v1805
    %v1807 = vtanh.pop %v1793
    %v1808 = vtanh.pop %v1794
    %v1809 = vmul.f32 %v1804, %v1713
    %1811 = vrot.lane.b32.xlu0 %v1807, 64
    %v1812 = vpop.permute.xlu0 %1811
    %v1814 = vmul.f32 %v1804, %v1812
    %1816 = vrot.lane.b32.xlu0 %v1814, 32
    %v1817 = vpop.permute.xlu0 %1816
    %v1819 = vadd.f32 %v1809, %v1817
    %v1820 = vmul.f32 %v1806, %v1724
    %1822 = vrot.lane.b32.xlu0 %v1808, 64
    %v1823 = vpop.permute.xlu0 %1822
    %v1825 = vmul.f32 %v1806, %v1823
    %1827 = vrot.lane.b32.xlu0 %v1825, 32
    %v1828 = vpop.permute.xlu0 %1827
    %v1830 = vadd.f32 %v1820, %v1828
    %v1831 = vtanh.pop %v1819
    %1833 = vrot.lane.b32.xlu0 %v1831, 64
    %v1834 = vpop.permute.xlu0 %1833
    %v1836 = vmul.f32 %v1804, %v1834
    %v1837 = vtanh.pop %v1830
    %1839 = vrot.lane.b32.xlu0 %v1837, 64
    %v1840 = vpop.permute.xlu0 %1839
    %v1842 = vmul.f32 %v1806, %v1840
    %v1843 = vld [vmem:[%s691] sm:$0xff]
    %v1844 = vld [vmem:[%s693] sm:$0xff]
    %1846 = vrot.lane.b32.xlu0 %v1836, 32
    %v1847 = vpop.permute.xlu0 %1846
    %1850 = vrot.lane.b32.xlu0 %v1842, 64
    %v1851 = vpop.permute.xlu0 %1850
    %v1853 = vsel %vm458, %v1847, %v1851
    %v1854 = vpack.c.bf16 %v1853, %v1853
    %v1856 = vsel %vm359, %v1854, 0
    %1858 = vmatprep.subr.bf16.mxu0 %v1525
    %1859 = vmatpush1.bf16.msra.mxu0 %v1524
    %1860 = vmatprep.subr.bf16.mxu0 %v1527
    %1861 = vmatpush1.bf16.msra.mxu0 %v1526
    %1862 = vmatprep.subr.bf16.mxu0 %v1529
    %1863 = vmatpush1.bf16.msra.mxu0 %v1528
    %1864 = vmatprep.subr.bf16.mxu0 %v1531
    %1865 = vmatpush1.bf16.msra.mxu0 %v1530
    %1866 = vmatprep.subr.bf16.mxu0 0
    %1867 = vmatpush1.bf16.msra.mxu0 0
    %1868 = vmatprep.subr.bf16.mxu0 0
    %1869 = vmatpush1.bf16.msra.mxu0 0
    %1870 = vmatprep.subr.bf16.mxu0 0
    %1871 = vmatpush1.bf16.msra.mxu0 0
    %1872 = vmatprep.subr.bf16.mxu0 0
    %1873 = vmatpush1.bf16.msra.mxu0 0
    %1874 = vmatprep.subr.bf16.mxu0 0
    %1875 = vmatpush1.bf16.msra.mxu0 0
    %1876 = vmatprep.subr.bf16.mxu0 0
    %1877 = vmatpush1.bf16.msra.mxu0 0
    %1878 = vmatprep.subr.bf16.mxu0 0
    %1879 = vmatpush1.bf16.msra.mxu0 0
    %1880 = vmatprep.subr.bf16.mxu0 0
    %1881 = vmatpush1.bf16.msra.mxu0 0
    %1882 = vmatprep.subr.bf16.mxu0 0
    %1883 = vmatpush1.bf16.msra.mxu0 0
    %1884 = vmatprep.subr.bf16.mxu0 0
    %1885 = vmatpush1.bf16.msra.mxu0 0
    %1886 = vmatprep.subr.bf16.mxu0 0
    %1887 = vmatpush1.bf16.msra.mxu0 0
    %1888 = vmatprep.subr.bf16.mxu0 0
    %1889 = vmatpush1.bf16.msra.mxu0 0
    %1890 = vmatprep.mubr.bf16.mxu0 0
    %1891 = vmatmul.mubr.bf16.gmra.mrb[0].mxu0 %v1856
    %v1892 = vpop.f32.mrb[0].mxu0
    %v1893 = vadd.f32 0.0, %v1892
    %v1894 = vpop.f32.mrb[0].mxu0
    %v1895 = vadd.f32 0.0, %v1894
    %v1896 = vpop.f32.mrb[0].mxu0
    %v1897 = vpop.f32.mrb[0].mxu0
    %1898 = vdwg.mxu0
    %v1899 = vadd.f32 %v1843, %v1893
    %v1900 = vadd.f32 %v1844, %v1895
    %v1901 = vxor.u32 %v1899, 2147483648
    %v1902 = vxor.u32 %v1900, 2147483648
    %v1903 = vmul.f32 %v1901, 1.442695
    %v1904 = vpow.pop %v1903
    %v1905 = vmul.f32 %v1902, 1.442695
    %v1906 = vpow.pop %v1905
    %v1907 = vadd.f32 %v1904, 1.0
    %v1908 = vadd.f32 %v1906, 1.0
    %v1909 = vrcp.pop %v1907
    %v1910 = vmul.f32 1.0, %v1909
    %v1911 = vrcp.pop %v1908
    %v1912 = vmul.f32 1.0, %v1911
    %v1913 = vtanh.pop %v1899
    %v1914 = vtanh.pop %v1900
    %v1915 = vmul.f32 %v1910, %v1819
    %1917 = vrot.lane.b32.xlu0 %v1913, 64
    %v1918 = vpop.permute.xlu0 %1917
    %v1920 = vmul.f32 %v1910, %v1918
    %1922 = vrot.lane.b32.xlu0 %v1920, 32
    %v1923 = vpop.permute.xlu0 %1922
    %v1925 = vadd.f32 %v1915, %v1923
    %v1926 = vmul.f32 %v1912, %v1830
    %1928 = vrot.lane.b32.xlu0 %v1914, 64
    %v1929 = vpop.permute.xlu0 %1928
    %v1931 = vmul.f32 %v1912, %v1929
    %1933 = vrot.lane.b32.xlu0 %v1931, 32
    %v1934 = vpop.permute.xlu0 %1933
    %v1936 = vadd.f32 %v1926, %v1934
    %v1937 = vtanh.pop %v1925
    %1939 = vrot.lane.b32.xlu0 %v1937, 64
    %v1940 = vpop.permute.xlu0 %1939
    %v1942 = vmul.f32 %v1910, %v1940
    %v1943 = vtanh.pop %v1936
    %1945 = vrot.lane.b32.xlu0 %v1943, 64
    %v1946 = vpop.permute.xlu0 %1945
    %v1948 = vmul.f32 %v1912, %v1946
    %v1949 = vld [vmem:[%s803] sm:$0xff]
    %v1950 = vld [vmem:[%s805] sm:$0xff]
    %1952 = vrot.lane.b32.xlu0 %v1942, 32
    %v1953 = vpop.permute.xlu0 %1952
    %1956 = vrot.lane.b32.xlu0 %v1948, 64
    %v1957 = vpop.permute.xlu0 %1956
    %v1959 = vsel %vm458, %v1953, %v1957
    %v1960 = vpack.c.bf16 %v1959, %v1959
    %v1962 = vsel %vm359, %v1960, 0
    %1964 = vmatprep.subr.bf16.mxu0 %v1525
    %1965 = vmatpush1.bf16.msra.mxu0 %v1524
    %1966 = vmatprep.subr.bf16.mxu0 %v1527
    %1967 = vmatpush1.bf16.msra.mxu0 %v1526
    %1968 = vmatprep.subr.bf16.mxu0 %v1529
    %1969 = vmatpush1.bf16.msra.mxu0 %v1528
    %1970 = vmatprep.subr.bf16.mxu0 %v1531
    %1971 = vmatpush1.bf16.msra.mxu0 %v1530
    %1972 = vmatprep.subr.bf16.mxu0 0
    %1973 = vmatpush1.bf16.msra.mxu0 0
    %1974 = vmatprep.subr.bf16.mxu0 0
    %1975 = vmatpush1.bf16.msra.mxu0 0
    %1976 = vmatprep.subr.bf16.mxu0 0
    %1977 = vmatpush1.bf16.msra.mxu0 0
    %1978 = vmatprep.subr.bf16.mxu0 0
    %1979 = vmatpush1.bf16.msra.mxu0 0
    %1980 = vmatprep.subr.bf16.mxu0 0
    %1981 = vmatpush1.bf16.msra.mxu0 0
    %1982 = vmatprep.subr.bf16.mxu0 0
    %1983 = vmatpush1.bf16.msra.mxu0 0
    %1984 = vmatprep.subr.bf16.mxu0 0
    %1985 = vmatpush1.bf16.msra.mxu0 0
    %1986 = vmatprep.subr.bf16.mxu0 0
    %1987 = vmatpush1.bf16.msra.mxu0 0
    %1988 = vmatprep.subr.bf16.mxu0 0
    %1989 = vmatpush1.bf16.msra.mxu0 0
    %1990 = vmatprep.subr.bf16.mxu0 0
    %1991 = vmatpush1.bf16.msra.mxu0 0
    %1992 = vmatprep.subr.bf16.mxu0 0
    %1993 = vmatpush1.bf16.msra.mxu0 0
    %1994 = vmatprep.subr.bf16.mxu0 0
    %1995 = vmatpush1.bf16.msra.mxu0 0
    %1996 = vmatprep.mubr.bf16.mxu0 0
    %1997 = vmatmul.mubr.bf16.gmra.mrb[0].mxu0 %v1962
    %v1998 = vpop.f32.mrb[0].mxu0
    %v1999 = vadd.f32 0.0, %v1998
    %v2000 = vpop.f32.mrb[0].mxu0
    %v2001 = vadd.f32 0.0, %v2000
    %v2002 = vpop.f32.mrb[0].mxu0
    %v2003 = vpop.f32.mrb[0].mxu0
    %2004 = vdwg.mxu0
    %v2005 = vadd.f32 %v1949, %v1999
    %v2006 = vadd.f32 %v1950, %v2001
    %v2007 = vxor.u32 %v2005, 2147483648
    %v2008 = vxor.u32 %v2006, 2147483648
    %v2009 = vmul.f32 %v2007, 1.442695
    %v2010 = vpow.pop %v2009
    %v2011 = vmul.f32 %v2008, 1.442695
    %v2012 = vpow.pop %v2011
    %v2013 = vadd.f32 %v2010, 1.0
    %v2014 = vadd.f32 %v2012, 1.0
    %v2015 = vrcp.pop %v2013
    %v2016 = vmul.f32 1.0, %v2015
    %v2017 = vrcp.pop %v2014
    %v2018 = vmul.f32 1.0, %v2017
    %v2019 = vtanh.pop %v2005
    %v2020 = vtanh.pop %v2006
    %v2021 = vmul.f32 %v2016, %v1925
    %2023 = vrot.lane.b32.xlu0 %v2019, 64
    %v2024 = vpop.permute.xlu0 %2023
    %v2026 = vmul.f32 %v2016, %v2024
    %2028 = vrot.lane.b32.xlu0 %v2026, 32
    %v2029 = vpop.permute.xlu0 %2028
    %v2031 = vadd.f32 %v2021, %v2029
    %v2032 = vmul.f32 %v2018, %v1936
    %2034 = vrot.lane.b32.xlu0 %v2020, 64
    %v2035 = vpop.permute.xlu0 %2034
    %v2037 = vmul.f32 %v2018, %v2035
    %2039 = vrot.lane.b32.xlu0 %v2037, 32
    %v2040 = vpop.permute.xlu0 %2039
    %v2042 = vadd.f32 %v2032, %v2040
    %v2043 = vtanh.pop %v2031
    %2045 = vrot.lane.b32.xlu0 %v2043, 64
    %v2046 = vpop.permute.xlu0 %2045
    %v2048 = vmul.f32 %v2016, %v2046
    %v2049 = vtanh.pop %v2042
    %2051 = vrot.lane.b32.xlu0 %v2049, 64
    %v2052 = vpop.permute.xlu0 %2051
    %v2054 = vmul.f32 %v2018, %v2052
    %v2055 = vld [vmem:[%s913] sm:$0xff]
    %v2056 = vld [vmem:[%s915] sm:$0xff]
    %2058 = vrot.lane.b32.xlu0 %v2048, 32
    %v2059 = vpop.permute.xlu0 %2058
    %2062 = vrot.lane.b32.xlu0 %v2054, 64
    %v2063 = vpop.permute.xlu0 %2062
    %v2065 = vsel %vm458, %v2059, %v2063
    %v2066 = vpack.c.bf16 %v2065, %v2065
    %v2068 = vsel %vm359, %v2066, 0
    %2070 = vmatprep.subr.bf16.mxu0 %v1525
    %2071 = vmatpush1.bf16.msra.mxu0 %v1524
    %2072 = vmatprep.subr.bf16.mxu0 %v1527
    %2073 = vmatpush1.bf16.msra.mxu0 %v1526
    %2074 = vmatprep.subr.bf16.mxu0 %v1529
    %2075 = vmatpush1.bf16.msra.mxu0 %v1528
    %2076 = vmatprep.subr.bf16.mxu0 %v1531
    %2077 = vmatpush1.bf16.msra.mxu0 %v1530
    %2078 = vmatprep.subr.bf16.mxu0 0
    %2079 = vmatpush1.bf16.msra.mxu0 0
    %2080 = vmatprep.subr.bf16.mxu0 0
    %2081 = vmatpush1.bf16.msra.mxu0 0
    %2082 = vmatprep.subr.bf16.mxu0 0
    %2083 = vmatpush1.bf16.msra.mxu0 0
    %2084 = vmatprep.subr.bf16.mxu0 0
    %2085 = vmatpush1.bf16.msra.mxu0 0
    %2086 = vmatprep.subr.bf16.mxu0 0
    %2087 = vmatpush1.bf16.msra.mxu0 0
    %2088 = vmatprep.subr.bf16.mxu0 0
    %2089 = vmatpush1.bf16.msra.mxu0 0
    %2090 = vmatprep.subr.bf16.mxu0 0
    %2091 = vmatpush1.bf16.msra.mxu0 0
    %2092 = vmatprep.subr.bf16.mxu0 0
    %2093 = vmatpush1.bf16.msra.mxu0 0
    %2094 = vmatprep.subr.bf16.mxu0 0
    %2095 = vmatpush1.bf16.msra.mxu0 0
    %2096 = vmatprep.subr.bf16.mxu0 0
    %2097 = vmatpush1.bf16.msra.mxu0 0
    %2098 = vmatprep.subr.bf16.mxu0 0
    %2099 = vmatpush1.bf16.msra.mxu0 0
    %2100 = vmatprep.subr.bf16.mxu0 0
    %2101 = vmatpush1.bf16.msra.mxu0 0
    %2102 = vmatprep.mubr.bf16.mxu0 0
    %2103 = vmatmul.mubr.bf16.gmra.mrb[0].mxu0 %v2068
    %v2104 = vpop.f32.mrb[0].mxu0
    %v2105 = vadd.f32 0.0, %v2104
    %v2106 = vpop.f32.mrb[0].mxu0
    %v2107 = vadd.f32 0.0, %v2106
    %v2108 = vpop.f32.mrb[0].mxu0
    %v2109 = vpop.f32.mrb[0].mxu0
    %2110 = vdwg.mxu0
    %v2111 = vadd.f32 %v2055, %v2105
    %v2112 = vadd.f32 %v2056, %v2107
    %v2113 = vxor.u32 %v2111, 2147483648
    %v2114 = vxor.u32 %v2112, 2147483648
    %v2115 = vmul.f32 %v2113, 1.442695
    %v2116 = vpow.pop %v2115
    %v2117 = vmul.f32 %v2114, 1.442695
    %v2118 = vpow.pop %v2117
    %v2119 = vadd.f32 %v2116, 1.0
    %v2120 = vadd.f32 %v2118, 1.0
    %v2121 = vrcp.pop %v2119
    %v2122 = vmul.f32 1.0, %v2121
    %v2123 = vrcp.pop %v2120
    %v2124 = vmul.f32 1.0, %v2123
    %v2125 = vtanh.pop %v2111
    %v2126 = vtanh.pop %v2112
    %v2127 = vmul.f32 %v2122, %v2031
    %2129 = vrot.lane.b32.xlu0 %v2125, 64
    %v2130 = vpop.permute.xlu0 %2129
    %v2132 = vmul.f32 %v2122, %v2130
    %2134 = vrot.lane.b32.xlu0 %v2132, 32
    %v2135 = vpop.permute.xlu0 %2134
    %v2137 = vadd.f32 %v2127, %v2135
    %v2138 = vmul.f32 %v2124, %v2042
    %2140 = vrot.lane.b32.xlu0 %v2126, 64
    %v2141 = vpop.permute.xlu0 %2140
    %v2143 = vmul.f32 %v2124, %v2141
    %2145 = vrot.lane.b32.xlu0 %v2143, 32
    %v2146 = vpop.permute.xlu0 %2145
    %v2148 = vadd.f32 %v2138, %v2146
    %v2149 = vtanh.pop %v2137
    %2151 = vrot.lane.b32.xlu0 %v2149, 64
    %v2152 = vpop.permute.xlu0 %2151
    %v2154 = vmul.f32 %v2122, %v2152
    %v2155 = vtanh.pop %v2148
    %2157 = vrot.lane.b32.xlu0 %v2155, 64
    %v2158 = vpop.permute.xlu0 %2157
    %v2160 = vmul.f32 %v2124, %v2158
    %v2161 = vld [vmem:[%s1023] sm:$0xff]
    %v2162 = vld [vmem:[%s1025] sm:$0xff]
    %2164 = vrot.lane.b32.xlu0 %v2154, 32
    %v2165 = vpop.permute.xlu0 %2164
    %2168 = vrot.lane.b32.xlu0 %v2160, 64
    %v2169 = vpop.permute.xlu0 %2168
    %v2171 = vsel %vm458, %v2165, %v2169
    %v2172 = vpack.c.bf16 %v2171, %v2171
    %v2174 = vsel %vm359, %v2172, 0
    %2176 = vmatprep.subr.bf16.mxu0 %v1525
    %2177 = vmatpush1.bf16.msra.mxu0 %v1524
    %2178 = vmatprep.subr.bf16.mxu0 %v1527
    %2179 = vmatpush1.bf16.msra.mxu0 %v1526
    %2180 = vmatprep.subr.bf16.mxu0 %v1529
    %2181 = vmatpush1.bf16.msra.mxu0 %v1528
    %2182 = vmatprep.subr.bf16.mxu0 %v1531
    %2183 = vmatpush1.bf16.msra.mxu0 %v1530
    %2184 = vmatprep.subr.bf16.mxu0 0
    %2185 = vmatpush1.bf16.msra.mxu0 0
    %2186 = vmatprep.subr.bf16.mxu0 0
    %2187 = vmatpush1.bf16.msra.mxu0 0
    %2188 = vmatprep.subr.bf16.mxu0 0
    %2189 = vmatpush1.bf16.msra.mxu0 0
    %2190 = vmatprep.subr.bf16.mxu0 0
    %2191 = vmatpush1.bf16.msra.mxu0 0
    %2192 = vmatprep.subr.bf16.mxu0 0
    %2193 = vmatpush1.bf16.msra.mxu0 0
    %2194 = vmatprep.subr.bf16.mxu0 0
    %2195 = vmatpush1.bf16.msra.mxu0 0
    %2196 = vmatprep.subr.bf16.mxu0 0
    %2197 = vmatpush1.bf16.msra.mxu0 0
    %2198 = vmatprep.subr.bf16.mxu0 0
    %2199 = vmatpush1.bf16.msra.mxu0 0
    %2200 = vmatprep.subr.bf16.mxu0 0
    %2201 = vmatpush1.bf16.msra.mxu0 0
    %2202 = vmatprep.subr.bf16.mxu0 0
    %2203 = vmatpush1.bf16.msra.mxu0 0
    %2204 = vmatprep.subr.bf16.mxu0 0
    %2205 = vmatpush1.bf16.msra.mxu0 0
    %2206 = vmatprep.subr.bf16.mxu0 0
    %2207 = vmatpush1.bf16.msra.mxu0 0
    %2208 = vmatprep.mubr.bf16.mxu0 0
    %2209 = vmatmul.mubr.bf16.gmra.mrb[0].mxu0 %v2174
    %v2210 = vpop.f32.mrb[0].mxu0
    %v2211 = vadd.f32 0.0, %v2210
    %v2212 = vpop.f32.mrb[0].mxu0
    %v2213 = vadd.f32 0.0, %v2212
    %v2214 = vpop.f32.mrb[0].mxu0
    %v2215 = vpop.f32.mrb[0].mxu0
    %2216 = vdwg.mxu0
    %v2217 = vadd.f32 %v2161, %v2211
    %v2218 = vadd.f32 %v2162, %v2213
    %v2219 = vxor.u32 %v2217, 2147483648
    %v2220 = vxor.u32 %v2218, 2147483648
    %v2221 = vmul.f32 %v2219, 1.442695
    %v2222 = vpow.pop %v2221
    %v2223 = vmul.f32 %v2220, 1.442695
    %v2224 = vpow.pop %v2223
    %v2225 = vadd.f32 %v2222, 1.0
    %v2226 = vadd.f32 %v2224, 1.0
    %v2227 = vrcp.pop %v2225
    %v2228 = vmul.f32 1.0, %v2227
    %v2229 = vrcp.pop %v2226
    %v2230 = vmul.f32 1.0, %v2229
    %v2231 = vtanh.pop %v2217
    %v2232 = vtanh.pop %v2218
    %v2233 = vmul.f32 %v2228, %v2137
    %2235 = vrot.lane.b32.xlu0 %v2231, 64
    %v2236 = vpop.permute.xlu0 %2235
    %v2238 = vmul.f32 %v2228, %v2236
    %2240 = vrot.lane.b32.xlu0 %v2238, 32
    %v2241 = vpop.permute.xlu0 %2240
    %v2243 = vadd.f32 %v2233, %v2241
    %v2244 = vmul.f32 %v2230, %v2148
    %2246 = vrot.lane.b32.xlu0 %v2232, 64
    %v2247 = vpop.permute.xlu0 %2246
    %v2249 = vmul.f32 %v2230, %v2247
    %2251 = vrot.lane.b32.xlu0 %v2249, 32
    %v2252 = vpop.permute.xlu0 %2251
    %v2254 = vadd.f32 %v2244, %v2252
    %v2255 = vtanh.pop %v2243
    %2257 = vrot.lane.b32.xlu0 %v2255, 64
    %v2258 = vpop.permute.xlu0 %2257
    %v2260 = vmul.f32 %v2228, %v2258
    %v2261 = vtanh.pop %v2254
    %2263 = vrot.lane.b32.xlu0 %v2261, 64
    %v2264 = vpop.permute.xlu0 %2263
    %v2266 = vmul.f32 %v2230, %v2264
    %v2267 = vld [vmem:[%s1133] sm:$0xff]
    %v2268 = vld [vmem:[#allocation3] sm:$0xff]
    %2270 = vrot.lane.b32.xlu0 %v2260, 32
    %v2271 = vpop.permute.xlu0 %2270
    %2274 = vrot.lane.b32.xlu0 %v2266, 64
    %v2275 = vpop.permute.xlu0 %2274
    %v2277 = vsel %vm458, %v2271, %v2275
    %v2278 = vpack.c.bf16 %v2277, %v2277
    %v2280 = vsel %vm359, %v2278, 0
    %2282 = vmatprep.subr.bf16.mxu0 %v1525
    %2283 = vmatpush1.bf16.msra.mxu0 %v1524
    %2284 = vmatprep.subr.bf16.mxu0 %v1527
    %2285 = vmatpush1.bf16.msra.mxu0 %v1526
    %2286 = vmatprep.subr.bf16.mxu0 %v1529
    %2287 = vmatpush1.bf16.msra.mxu0 %v1528
    %2288 = vmatprep.subr.bf16.mxu0 %v1531
    %2289 = vmatpush1.bf16.msra.mxu0 %v1530
    %2290 = vmatprep.subr.bf16.mxu0 0
    %2291 = vmatpush1.bf16.msra.mxu0 0
    %2292 = vmatprep.subr.bf16.mxu0 0
    %2293 = vmatpush1.bf16.msra.mxu0 0
    %2294 = vmatprep.subr.bf16.mxu0 0
    %2295 = vmatpush1.bf16.msra.mxu0 0
    %2296 = vmatprep.subr.bf16.mxu0 0
    %2297 = vmatpush1.bf16.msra.mxu0 0
    %2298 = vmatprep.subr.bf16.mxu0 0
    %2299 = vmatpush1.bf16.msra.mxu0 0
    %2300 = vmatprep.subr.bf16.mxu0 0
    %2301 = vmatpush1.bf16.msra.mxu0 0
    %2302 = vmatprep.subr.bf16.mxu0 0
    %2303 = vmatpush1.bf16.msra.mxu0 0
    %2304 = vmatprep.subr.bf16.mxu0 0
    %2305 = vmatpush1.bf16.msra.mxu0 0
    %2306 = vmatprep.subr.bf16.mxu0 0
    %2307 = vmatpush1.bf16.msra.mxu0 0
    %2308 = vmatprep.subr.bf16.mxu0 0
    %2309 = vmatpush1.bf16.msra.mxu0 0
    %2310 = vmatprep.subr.bf16.mxu0 0
    %2311 = vmatpush1.bf16.msra.mxu0 0
    %2312 = vmatprep.subr.bf16.mxu0 0
    %2313 = vmatpush1.bf16.msra.mxu0 0
    %2314 = vmatprep.mubr.bf16.mxu0 0
    %2315 = vmatmul.mubr.bf16.gmra.mrb[0].mxu0 %v2280
    %v2316 = vpop.f32.mrb[0].mxu0
    %v2317 = vadd.f32 0.0, %v2316
    %v2318 = vpop.f32.mrb[0].mxu0
    %v2319 = vadd.f32 0.0, %v2318
    %v2320 = vpop.f32.mrb[0].mxu0
    %v2321 = vpop.f32.mrb[0].mxu0
    %2322 = vdwg.mxu0
    %v2323 = vadd.f32 %v2267, %v2317
    %v2324 = vadd.f32 %v2268, %v2319
    %v2325 = vxor.u32 %v2323, 2147483648
    %v2326 = vxor.u32 %v2324, 2147483648
    %v2327 = vmul.f32 %v2325, 1.442695
    %v2328 = vpow.pop %v2327
    %v2329 = vmul.f32 %v2326, 1.442695
    %v2330 = vpow.pop %v2329
    %v2331 = vadd.f32 %v2328, 1.0
    %v2332 = vadd.f32 %v2330, 1.0
    %v2333 = vrcp.pop %v2331
    %v2334 = vmul.f32 1.0, %v2333
    %v2335 = vrcp.pop %v2332
    %v2336 = vmul.f32 1.0, %v2335
    %v2337 = vtanh.pop %v2323
    %v2338 = vtanh.pop %v2324
    %v2339 = vmul.f32 %v2334, %v2243
    %2341 = vrot.lane.b32.xlu0 %v2337, 64
    %v2342 = vpop.permute.xlu0 %2341
    %v2344 = vmul.f32 %v2334, %v2342
    %2346 = vrot.lane.b32.xlu0 %v2344, 32
    %v2347 = vpop.permute.xlu0 %2346
    %v2349 = vadd.f32 %v2339, %v2347
    %v2350 = vmul.f32 %v2336, %v2254
    %2352 = vrot.lane.b32.xlu0 %v2338, 64
    %v2353 = vpop.permute.xlu0 %2352
    %v2355 = vmul.f32 %v2336, %v2353
    %2357 = vrot.lane.b32.xlu0 %v2355, 32
    %v2358 = vpop.permute.xlu0 %2357
    %v2360 = vadd.f32 %v2350, %v2358
    %2362 = vrot.lane.b32.xlu0 %v1208, 96
    %v2363 = vpop.permute.xlu0 %2362
    %2366 = vrot.lane.b32.xlu0 %v2349, 32
    %v2367 = vpop.permute.xlu0 %2366
    %2370 = vrot.lane.b32.xlu0 %v2360, 64
    %v2371 = vpop.permute.xlu0 %2370
    %v2373 = vsel %vm458, %v2363, %v1219
    %v2374 = vsel %vm359, %v2373, %v2367
    %vm2375 = vcmask 785408
    %v2376 = vsel %vm2375, %v2374, %v2371
    %v2377 = vpack.c.bf16 %v2376, %v2376
    %v2378 = vld [vmem:[%s8] sm:$0xf]
    %v2379 = vld [vmem:[%s8 + $0x4] sm:$0xf]
    %v2380 = vld [vmem:[%s8 + $0x8] sm:$0xf]
    %v2381 = vld [vmem:[%s8 + $0xc] sm:$0xf]
    %v2382 = vld [vmem:[%s8 + $0x10] sm:$0xf]
    %v2383 = vld [vmem:[%s8 + $0x14] sm:$0xf]
    %v2384 = vld [vmem:[%s8 + $0x18] sm:$0xf]
    %v2385 = vld [vmem:[%s8 + $0x1c] sm:$0xf]
    %v2386 = vld [vmem:[%s8 + $0x20] sm:$0xf]
    %v2387 = vld [vmem:[%s8 + $0x24] sm:$0xf]
    %v2388 = vld [vmem:[%s8 + $0x28] sm:$0xf]
    %v2389 = vld [vmem:[%s8 + $0x2c] sm:$0xf]
    %v2390 = vld [vmem:[%s8 + $0x30] sm:$0xf]
    %v2391 = vld [vmem:[%s8 + $0x34] sm:$0xf]
    %v2392 = vld [vmem:[%s8 + $0x38] sm:$0xf]
    %v2393 = vld [vmem:[%s8 + $0x3c] sm:$0xf]
    %v2394 = vld [vmem:[%s9] sm:$0x1]
    %v2396 = vlaneseq
    %v2397 = vshrl.u32 %v2396, 7
    %v2398 = vsub.s32 0, %v2397
    %v2399 = vrot.slane %v2394, %v2398
    %v2417 = vunpack.c.l.b16 %v2378
    %v2418 = vunpack.c.l.b16 %v2379
    %v2419 = vunpack.c.l.b16 %v2380
    %v2420 = vunpack.c.l.b16 %v2381
    %v2421 = vunpack.c.l.b16 %v2382
    %v2422 = vunpack.c.l.b16 %v2383
    %v2423 = vunpack.c.l.b16 %v2384
    %v2424 = vunpack.c.l.b16 %v2385
    %v2425 = vunpack.c.l.b16 %v2386
    %v2426 = vunpack.c.l.b16 %v2387
    %v2427 = vunpack.c.l.b16 %v2388
    %v2428 = vunpack.c.l.b16 %v2389
    %v2429 = vunpack.c.l.b16 %v2390
    %v2430 = vunpack.c.l.b16 %v2391
    %v2431 = vunpack.c.l.b16 %v2392
    %v2432 = vunpack.c.l.b16 %v2393
    %v2433 = vpack.c.b16 %v2418, %v2417
    %v2434 = vpack.c.b16 %v2420, %v2419
    %v2435 = vpack.c.b16 %v2422, %v2421
    %v2436 = vpack.c.b16 %v2424, %v2423
    %v2437 = vpack.c.b16 %v2426, %v2425
    %v2438 = vpack.c.b16 %v2428, %v2427
    %v2439 = vpack.c.b16 %v2430, %v2429
    %v2440 = vpack.c.b16 %v2432, %v2431
    %2449 = vmatprep.subr.bf16.mxu0 0
    %2450 = vmatpush1.bf16.msra.mxu0 %v2433
    %2451 = vmatprep.subr.bf16.mxu0 0
    %2452 = vmatpush1.bf16.msra.mxu0 %v2434
    %2453 = vmatprep.subr.bf16.mxu0 0
    %2454 = vmatpush1.bf16.msra.mxu0 %v2435
    %2455 = vmatprep.subr.bf16.mxu0 0
    %2456 = vmatpush1.bf16.msra.mxu0 %v2436
    %2457 = vmatprep.subr.bf16.mxu0 0
    %2458 = vmatpush1.bf16.msra.mxu0 %v2437
    %2459 = vmatprep.subr.bf16.mxu0 0
    %2460 = vmatpush1.bf16.msra.mxu0 %v2438
    %2461 = vmatprep.subr.bf16.mxu0 0
    %2462 = vmatpush1.bf16.msra.mxu0 %v2439
    %2463 = vmatprep.subr.bf16.mxu0 0
    %2464 = vmatpush1.bf16.msra.mxu0 %v2440
    %2465 = vmatprep.subr.bf16.mxu0 0
    %2466 = vmatpush1.bf16.msra.mxu0 0
    %2467 = vmatprep.subr.bf16.mxu0 0
    %2468 = vmatpush1.bf16.msra.mxu0 0
    %2469 = vmatprep.subr.bf16.mxu0 0
    %2470 = vmatpush1.bf16.msra.mxu0 0
    %2471 = vmatprep.subr.bf16.mxu0 0
    %2472 = vmatpush1.bf16.msra.mxu0 0
    %2473 = vmatprep.subr.bf16.mxu0 0
    %2474 = vmatpush1.bf16.msra.mxu0 0
    %2475 = vmatprep.subr.bf16.mxu0 0
    %2476 = vmatpush1.bf16.msra.mxu0 0
    %2477 = vmatprep.subr.bf16.mxu0 0
    %2478 = vmatpush1.bf16.msra.mxu0 0
    %2479 = vmatprep.subr.bf16.mxu0 0
    %2480 = vmatpush1.bf16.msra.mxu0 0
    %2481 = vmatprep.mubr.bf16.mxu0 0
    %2482 = vmatmul.mubr.bf16.gmra.mrb[0].mxu0 %v2377
    %v2483 = vpop.f32.mrb[0].mxu0
    %v2484 = vadd.f32 %v2399, %v2483
    %v2485 = vpop.f32.mrb[0].mxu0
    %v2486 = vpop.f32.mrb[0].mxu0
    %v2487 = vpop.f32.mrb[0].mxu0
    %2488 = vdwg.mxu0
    %v2489 = vmul.f32 %v2484, 0.5
    %v2490 = vmul.f32 %v2489, 1.442695
    %v2491 = vpow.pop %v2490
    %vm2492 = vcmask 64512
    %2493 = vst.msk [vmem:[#allocation15] sm:$0xff] %vm2492, %v2484
    %2495 = vrot.lane.b32.xlu0 %v2491, 120
    %v2496 = vpop.permute.xlu0 %2495
    %2498 = vst.msk [vmem:[#allocation17] sm:$0xff] %vm2492, %v2496
    %v2499 = vld [vmem:[%s10] sm:$0xff]
    %v2500 = vmul.f32 %v2499, %v2496
    %v2501 = vadd.f32 %v2500, %v2484
    %2502 = vst.msk [vmem:[#allocation14] sm:$0xff] %vm2492, %v2501
    // Predicated region
    $region66: #{tpu_custom_call.1} parent=1 // pred_check
      _
    $region67: #{tpu_custom_call.1} parent=1 // pred_check_branch
      %2504 = sbr.rel (0) target = $region69
    $region68: #{tpu_custom_call.1} parent=1 // pred_region
      %s2506 = ssub.s32 128, 128
      %2507 = vsyncadd [#allocation7], %s2506
      %s2509 = sshll.u32 [#allocation14], 4
      %s2510 = int_to_ptr.vmem [resolvable:$true] %s2509
      %2512 = dma.vmem_to_hbm [thread:$0]  %s2510, 128, %s11, [#allocation7]
    $region69: #{tpu_custom_call.1} parent=1 // pred_fallthru
      _
    // Predicated region
    $region70: #{tpu_custom_call.1} parent=1 // pred_check
      _
    $region71: #{tpu_custom_call.1} parent=1 // pred_check_branch
      %2514 = sbr.rel (0) target = $region73
    $region72: #{tpu_custom_call.1} parent=1 // pred_region
      %s2516 = ssub.s32 128, 128
      %2517 = vsyncadd [#allocation16], %s2516
      %s2519 = sshll.u32 [#allocation15], 4
      %s2520 = int_to_ptr.vmem [resolvable:$true] %s2519
      %2522 = dma.vmem_to_hbm [thread:$0]  %s2520, 128, %s12, [#allocation16]
    $region73: #{tpu_custom_call.1} parent=1 // pred_fallthru
      _
    // Predicated region
    $region74: #{tpu_custom_call.1} parent=1 // pred_check
      _
    $region75: #{tpu_custom_call.1} parent=1 // pred_check_branch
      %2524 = sbr.rel (0) target = $region77
    $region76: #{tpu_custom_call.1} parent=1 // pred_region
      %s2526 = ssub.s32 128, 128
      %2527 = vsyncadd [#allocation16], %s2526
      %s2529 = sshll.u32 [#allocation17], 4
      %s2530 = int_to_ptr.vmem [resolvable:$true] %s2529
      %2532 = dma.vmem_to_hbm [thread:$0]  %s2530, 128, %s13, [#allocation16]
    $region77: #{tpu_custom_call.1} parent=1 // pred_fallthru
      _
    // Predicated region
    $region78: #{tpu_custom_call.1} parent=1 // pred_check
      _
    $region79: #{tpu_custom_call.1} parent=1 // pred_check_branch
      %2534 = sbr.rel (0) target = $region81
    $region80: #{tpu_custom_call.1} parent=1 // pred_region
      %2535 = dma.done [#allocation7], 128
    $region81: #{tpu_custom_call.1} parent=1 // pred_fallthru
      _
    // Predicated region
    $region82: #{tpu_custom_call.1} parent=1 // pred_check
      _
    $region83: #{tpu_custom_call.1} parent=1 // pred_check_branch
      %2537 = sbr.rel (0) target = $region85
    $region84: #{tpu_custom_call.1} parent=1 // pred_region
      %2538 = dma.done [#allocation16], 128
    $region85: #{tpu_custom_call.1} parent=1 // pred_fallthru
      _
    // Predicated region
    $region86: #{tpu_custom_call.1} parent=1 // pred_check
      _
    $region87: #{tpu_custom_call.1} parent=1 // pred_check_branch
      %2540 = sbr.rel (0) target = $region89
    $region88: #{tpu_custom_call.1} parent=1 // pred_region
      %2541 = dma.done [#allocation16], 128
    $region89: #{tpu_custom_call.1} parent=1 // pred_fallthru
      _
    %2542 = vsyncpa [#allocation6], 1
    %2543 = vsyncpa [#allocation9], 1
    %2544 = vsyncpa [#allocation12], 1
    %2545 = vsyncpa [#allocation7], 1
    %2546 = vsyncpa [#allocation16], 1

</llo_original>
